<compile_context>
chip_gen: v5e
topology: v5e:2x2
jax: 0.10.0
libtpu: 0.0.40
codegen_flags: <defaults>
</compile_context>

<pallas_src>
import numpy as np
import jax
import jax.numpy as jnp
from jax.experimental import pallas as pl
from jax.experimental.pallas import tpu as pltpu

# ---------------- synthetic BERT config (small) ----------------
VOCAB = 100
TYPE_VOCAB = 2
MAX_POS = 16
HIDDEN = 128
NUM_HEADS = 2
HEAD_DIM = HIDDEN // NUM_HEADS
INTER = 256
NUM_LAYERS = 2
LN_EPS = 1e-12
ATTN_SCALE = 1.0 / float(np.sqrt(HEAD_DIM))


# ---------------- in-kernel helpers ----------------
def _layernorm(x, g, b, eps=LN_EPS):
    mu = jnp.mean(x, axis=-1, keepdims=True)
    var = jnp.mean(jnp.square(x - mu), axis=-1, keepdims=True)
    return (x - mu) * jax.lax.rsqrt(var + eps) * g + b


def _gelu(x):
    # tanh-approx GELU ('gelu_new'); HF BERT default exact-erf GELU differs by <1e-3.
    return 0.5 * x * (1.0 + jnp.tanh(0.7978845608028654 * (x + 0.044715 * x * x * x)))


# ---------------- fused teacher kernel ----------------
def _teacher_kernel(emb_ref, mask_ref, eg_ref, ebt_ref,
                    wqkv_ref, bqkv_ref, wo_ref, bo_ref, ln1g_ref, ln1b_ref,
                    wi_ref, bi_ref, wo2_ref, bo2_ref, ln2g_ref, ln2b_ref,
                    hw_ref, hb_ref,
                    hid_ref, att_ref, log_ref,
                    ctx_ref):
    """One grid step = one batch element; full encoder + head, VMEM-resident."""
    mask = mask_ref[0]                                   # (1, S) additive mask

    # --- embedding LayerNorm -> hidden_states[0] ---
    h = _layernorm(emb_ref[0], eg_ref[...], ebt_ref[...])
    hid_ref[0, 0] = h

    for l in range(NUM_LAYERS):
        # fused QKV projection: one (S,H) @ (H,3H) matmul (lane-dense N=384)
        qkv = jnp.dot(h, wqkv_ref[l], preferred_element_type=jnp.float32) + bqkv_ref[l]

        # per-head scaled dot-product attention (statically unrolled, tiny tiles)
        for hd in range(NUM_HEADS):
            q = qkv[:, hd * HEAD_DIM:(hd + 1) * HEAD_DIM]
            k = qkv[:, HIDDEN + hd * HEAD_DIM:HIDDEN + (hd + 1) * HEAD_DIM]
            v = qkv[:, 2 * HIDDEN + hd * HEAD_DIM:2 * HIDDEN + (hd + 1) * HEAD_DIM]
            # QK^T without an explicit transpose: contract last dims.
            s = jax.lax.dot_general(q, k, (((1,), (1,)), ((), ())),
                                    preferred_element_type=jnp.float32)
            s = s * ATTN_SCALE + mask
            s = s - jnp.max(s, axis=-1, keepdims=True)
            e = jnp.exp(s)
            p = e * pl.reciprocal(jnp.sum(e, axis=-1, keepdims=True), approx=True)
            att_ref[l, hd] = p
            ctx_ref[:, hd * HEAD_DIM:(hd + 1) * HEAD_DIM] = jnp.dot(
                p, v, preferred_element_type=jnp.float32)

        # attention output projection + residual + LN
        attn_out = jnp.dot(ctx_ref[...], wo_ref[l],
                           preferred_element_type=jnp.float32) + bo_ref[l]
        h = _layernorm(attn_out + h, ln1g_ref[l], ln1b_ref[l])

        # FFN (GELU) + residual + LN
        ff = _gelu(jnp.dot(h, wi_ref[l], preferred_element_type=jnp.float32) + bi_ref[l])
        ff = jnp.dot(ff, wo2_ref[l], preferred_element_type=jnp.float32) + bo2_ref[l]
        h = _layernorm(ff + h, ln2g_ref[l], ln2b_ref[l])
        hid_ref[l + 1, 0] = h

    # ExtractiveSummaryHead linear applied to every token (CLS selection outside).
    log_ref[0] = jnp.dot(h, hw_ref[...], preferred_element_type=jnp.float32) + hb_ref[...]


def fused_bert_forward(emb, add_mask, emb_ln_g, emb_ln_b, stacked, head_w, head_b):
    B, S, _ = emb.shape
    L = NUM_LAYERS
    out_shape = (
        jax.ShapeDtypeStruct((L + 1, B, S, HIDDEN), jnp.float32),       # hidden states
        jax.ShapeDtypeStruct((L, B * NUM_HEADS, S, S), jnp.float32),    # attn probs
        jax.ShapeDtypeStruct((B, S, 1), jnp.float32),                   # token logits
    )
    return pl.pallas_call(
        _teacher_kernel,
        out_shape=out_shape,
        grid=(B,),
        in_specs=[
            pl.BlockSpec((1, S, HIDDEN), lambda b: (b, 0, 0)),            # emb
            pl.BlockSpec((1, 1, S), lambda b: (b, 0, 0)),                 # additive mask
            pl.BlockSpec((1, HIDDEN), lambda b: (0, 0)),                  # emb LN gamma
            pl.BlockSpec((1, HIDDEN), lambda b: (0, 0)),                  # emb LN beta
            pl.BlockSpec((L, HIDDEN, 3 * HIDDEN), lambda b: (0, 0, 0)),   # wqkv
            pl.BlockSpec((L, 1, 3 * HIDDEN), lambda b: (0, 0, 0)),        # bqkv
            pl.BlockSpec((L, HIDDEN, HIDDEN), lambda b: (0, 0, 0)),       # wo
            pl.BlockSpec((L, 1, HIDDEN), lambda b: (0, 0, 0)),            # bo
            pl.BlockSpec((L, 1, HIDDEN), lambda b: (0, 0, 0)),            # ln1 gamma
            pl.BlockSpec((L, 1, HIDDEN), lambda b: (0, 0, 0)),            # ln1 beta
            pl.BlockSpec((L, HIDDEN, INTER), lambda b: (0, 0, 0)),        # wi
            pl.BlockSpec((L, 1, INTER), lambda b: (0, 0, 0)),             # bi
            pl.BlockSpec((L, INTER, HIDDEN), lambda b: (0, 0, 0)),        # wo2
            pl.BlockSpec((L, 1, HIDDEN), lambda b: (0, 0, 0)),            # bo2
            pl.BlockSpec((L, 1, HIDDEN), lambda b: (0, 0, 0)),            # ln2 gamma
            pl.BlockSpec((L, 1, HIDDEN), lambda b: (0, 0, 0)),            # ln2 beta
            pl.BlockSpec((HIDDEN, 1), lambda b: (0, 0)),                  # head_w
            pl.BlockSpec((1, 1), lambda b: (0, 0)),                       # head_b
        ],
        out_specs=(
            pl.BlockSpec((L + 1, 1, S, HIDDEN), lambda b: (0, b, 0, 0)),
            pl.BlockSpec((L, NUM_HEADS, S, S), lambda b: (0, b, 0, 0)),
            pl.BlockSpec((1, S, 1), lambda b: (b, 0, 0)),
        ),
        scratch_shapes=[pltpu.VMEM((S, HIDDEN), jnp.float32)],            # attn context
        compiler_params=pltpu.CompilerParams(
            dimension_semantics=("parallel",)),                           # v7x: 2 TCs
    )(emb, add_mask, emb_ln_g, emb_ln_b,
      stacked["wqkv"], stacked["bqkv"], stacked["wo"], stacked["bo"],
      stacked["ln1_g"], stacked["ln1_b"],
      stacked["wi"], stacked["bi"], stacked["wo2"], stacked["bo2"],
      stacked["ln2_g"], stacked["ln2_b"],
      head_w, head_b)


# ---------------- deterministic parameter init ----------------
def init_params(key):
    def nrm(k, shape, scale=0.02):
        return scale * jax.random.normal(k, shape, dtype=jnp.float32)

    keys = iter(jax.random.split(key, 256))
    params = {
        "word_emb": nrm(next(keys), (VOCAB, HIDDEN)),
        "pos_emb": nrm(next(keys), (MAX_POS, HIDDEN)),
        "type_emb": nrm(next(keys), (TYPE_VOCAB, HIDDEN)),
        "emb_ln_g": jnp.ones((HIDDEN,), jnp.float32),
        "emb_ln_b": jnp.zeros((HIDDEN,), jnp.float32),
        # ExtractiveSummaryHead: nn.Linear(hidden_size, 1)
        "head_w": nrm(next(keys), (HIDDEN, 1)),
        "head_b": jnp.zeros((1,), jnp.float32),
        "layers": [],
    }
    for _ in range(NUM_LAYERS):
        params["layers"].append({
            "wq": nrm(next(keys), (HIDDEN, HIDDEN)), "bq": jnp.zeros((HIDDEN,), jnp.float32),
            "wk": nrm(next(keys), (HIDDEN, HIDDEN)), "bk": jnp.zeros((HIDDEN,), jnp.float32),
            "wv": nrm(next(keys), (HIDDEN, HIDDEN)), "bv": jnp.zeros((HIDDEN,), jnp.float32),
            "wo": nrm(next(keys), (HIDDEN, HIDDEN)), "bo": jnp.zeros((HIDDEN,), jnp.float32),
            "ln1_g": jnp.ones((HIDDEN,), jnp.float32), "ln1_b": jnp.zeros((HIDDEN,), jnp.float32),
            "wi": nrm(next(keys), (HIDDEN, INTER)), "bi": jnp.zeros((INTER,), jnp.float32),
            "wo2": nrm(next(keys), (INTER, HIDDEN)), "bo2": jnp.zeros((HIDDEN,), jnp.float32),
            "ln2_g": jnp.ones((HIDDEN,), jnp.float32), "ln2_b": jnp.zeros((HIDDEN,), jnp.float32),
        })
    return params


def _stack_layers(layers):
    """Stack per-layer weights along a leading L axis; fuse wq|wk|wv into (H, 3H)."""
    st = {
        "wqkv": jnp.stack([jnp.concatenate([l["wq"], l["wk"], l["wv"]], axis=1)
                           for l in layers]),
        "bqkv": jnp.stack([jnp.concatenate([l["bq"], l["bk"], l["bv"]])[None, :]
                           for l in layers]),
        "wo": jnp.stack([l["wo"] for l in layers]),
        "bo": jnp.stack([l["bo"][None, :] for l in layers]),
        "ln1_g": jnp.stack([l["ln1_g"][None, :] for l in layers]),
        "ln1_b": jnp.stack([l["ln1_b"][None, :] for l in layers]),
        "wi": jnp.stack([l["wi"] for l in layers]),
        "bi": jnp.stack([l["bi"][None, :] for l in layers]),
        "wo2": jnp.stack([l["wo2"] for l in layers]),
        "bo2": jnp.stack([l["bo2"][None, :] for l in layers]),
        "ln2_g": jnp.stack([l["ln2_g"][None, :] for l in layers]),
        "ln2_b": jnp.stack([l["ln2_b"][None, :] for l in layers]),
    }
    return st


# ---------------- BERT teacher forward (distill_step=True semantics) ----------------
def bert_teacher_forward(params, input_ids, attn_mask, seg):
    B, S = input_ids.shape
    # embedding gathers stay in plain JAX; everything else runs in the fused kernel
    we = params["word_emb"][input_ids]                       # (B, S, H)
    pe = params["pos_emb"][:S][None, :, :]                   # (1, S, H)
    te = params["type_emb"][seg]                             # (B, S, H)
    emb = we + pe + te                                       # pre-LN embedding sum
    add_mask = ((1.0 - attn_mask.astype(jnp.float32)) * -10000.0).reshape(B, 1, S)

    stacked = _stack_layers(params["layers"])
    hidden_all, attn_flat, logits3d = fused_bert_forward(
        emb, add_mask,
        params["emb_ln_g"].reshape(1, HIDDEN), params["emb_ln_b"].reshape(1, HIDDEN),
        stacked, params["head_w"], params["head_b"].reshape(1, 1))

    hidden_states = tuple(hidden_all[i] for i in range(NUM_LAYERS + 1))
    attn_all = attn_flat.reshape(NUM_LAYERS, B, NUM_HEADS, S, S)
    attentions = tuple(attn_all[i] for i in range(NUM_LAYERS))
    token_logits = logits3d[:, :, 0]                         # (B, S)
    return token_logits, hidden_states, attentions


_bert_teacher_forward_jit = jax.jit(bert_teacher_forward)


def dynamic_teacher_forward(params, input_ids, attn_mask, seg, cls_mask):
    """Mirrors DynamicTeacher.forward(batch, distill_step=True) with extractive head."""
    token_logits, hidden_states, attentions = _bert_teacher_forward_jit(
        params, input_ids, attn_mask, seg)
    # cls_mask is a host-known input: derive a static index set and gather on device
    # (row-major order matches torch.masked_select); no sync on the kernel outputs.
    flat_idx = np.flatnonzero(np.asarray(cls_mask))
    logits = jnp.take(token_logits.reshape(-1), jnp.asarray(flat_idx, dtype=jnp.int32))
    encoder_layers = hidden_states
    encoder_atts = attentions
    embeds = hidden_states[0]
    return logits, encoder_layers, encoder_atts, embeds


if __name__ == "__main__":
    B, S = 2, 8
    key = jax.random.PRNGKey(0)
    kp, ki, km = jax.random.split(key, 3)

    params = init_params(kp)
    input_ids = jax.random.randint(ki, (B, S), 0, VOCAB, dtype=jnp.int32)
    attn_mask = jnp.ones((B, S), jnp.int32).at[:, -1].set(0)       # last token padded
    seg = jnp.concatenate([jnp.zeros((B, S // 2), jnp.int32),
                           jnp.ones((B, S // 2), jnp.int32)], axis=1)
    cls_mask = jnp.zeros((B, S), bool).at[:, 0].set(True).at[:, 4].set(True)

    logits, encoder_layers, encoder_atts, embeds = dynamic_teacher_forward(
        params, input_ids, attn_mask, seg, cls_mask)

    jax.block_until_ready((logits, encoder_layers, encoder_atts, embeds))
    assert logits.shape == (int(np.asarray(cls_mask).sum()),)
    assert len(encoder_layers) == NUM_LAYERS + 1
    assert len(encoder_atts) == NUM_LAYERS
    assert encoder_atts[0].shape == (B, NUM_HEADS, S, S)
    assert embeds.shape == (B, S, HIDDEN)
    print("KERNEL_OK")
</pallas_src>

<mosaic_0001>
module attributes {stable_mosaic.version = 11 : i64} {
  func.func @_teacher_kernel(%arg0: i32, %arg1: memref<1x8x128xf32, #tpu.memory_space<vmem>>, %arg2: memref<1x1x8xf32, #tpu.memory_space<vmem>>, %arg3: memref<1x128xf32, #tpu.memory_space<vmem>>, %arg4: memref<1x128xf32, #tpu.memory_space<vmem>>, %arg5: memref<2x128x384xf32, #tpu.memory_space<vmem>>, %arg6: memref<2x1x384xf32, #tpu.memory_space<vmem>>, %arg7: memref<2x128x128xf32, #tpu.memory_space<vmem>>, %arg8: memref<2x1x128xf32, #tpu.memory_space<vmem>>, %arg9: memref<2x1x128xf32, #tpu.memory_space<vmem>>, %arg10: memref<2x1x128xf32, #tpu.memory_space<vmem>>, %arg11: memref<2x128x256xf32, #tpu.memory_space<vmem>>, %arg12: memref<2x1x256xf32, #tpu.memory_space<vmem>>, %arg13: memref<2x256x128xf32, #tpu.memory_space<vmem>>, %arg14: memref<2x1x128xf32, #tpu.memory_space<vmem>>, %arg15: memref<2x1x128xf32, #tpu.memory_space<vmem>>, %arg16: memref<2x1x128xf32, #tpu.memory_space<vmem>>, %arg17: memref<128x1xf32, #tpu.memory_space<vmem>>, %arg18: memref<1x1xf32, #tpu.memory_space<vmem>>, %arg19: memref<3x1x8x128xf32, #tpu.memory_space<vmem>>, %arg20: memref<2x2x8x8xf32, #tpu.memory_space<vmem>>, %arg21: memref<1x8x1xf32, #tpu.memory_space<vmem>>, %arg22: memref<8x128xf32, #tpu.memory_space<vmem>>) attributes {dimension_semantics = [#tpu.dimension_semantics<parallel>], iteration_bounds = array<i64: 2>, scalar_prefetch = 0 : i64, scratch_operands = 1 : i64, tpu.core_type = #tpu.core_type<tc>, window_params = [{transform_indices = @transform_0, window_bounds = array<i64: 1, 8, 128>}, {transform_indices = @transform_1, window_bounds = array<i64: 1, 1, 8>}, {pipeline_mode = #tpu.pipeline_mode<synchronous>, transform_indices = @transform_2, window_bounds = array<i64: 1, 128>}, {pipeline_mode = #tpu.pipeline_mode<synchronous>, transform_indices = @transform_3, window_bounds = array<i64: 1, 128>}, {pipeline_mode = #tpu.pipeline_mode<synchronous>, transform_indices = @transform_4, window_bounds = array<i64: 2, 128, 384>}, {pipeline_mode = #tpu.pipeline_mode<synchronous>, transform_indices = @transform_5, window_bounds = array<i64: 2, 1, 384>}, {pipeline_mode = #tpu.pipeline_mode<synchronous>, transform_indices = @transform_6, window_bounds = array<i64: 2, 128, 128>}, {pipeline_mode = #tpu.pipeline_mode<synchronous>, transform_indices = @transform_7, window_bounds = array<i64: 2, 1, 128>}, {pipeline_mode = #tpu.pipeline_mode<synchronous>, transform_indices = @transform_8, window_bounds = array<i64: 2, 1, 128>}, {pipeline_mode = #tpu.pipeline_mode<synchronous>, transform_indices = @transform_9, window_bounds = array<i64: 2, 1, 128>}, {pipeline_mode = #tpu.pipeline_mode<synchronous>, transform_indices = @transform_10, window_bounds = array<i64: 2, 128, 256>}, {pipeline_mode = #tpu.pipeline_mode<synchronous>, transform_indices = @transform_11, window_bounds = array<i64: 2, 1, 256>}, {pipeline_mode = #tpu.pipeline_mode<synchronous>, transform_indices = @transform_12, window_bounds = array<i64: 2, 256, 128>}, {pipeline_mode = #tpu.pipeline_mode<synchronous>, transform_indices = @transform_13, window_bounds = array<i64: 2, 1, 128>}, {pipeline_mode = #tpu.pipeline_mode<synchronous>, transform_indices = @transform_14, window_bounds = array<i64: 2, 1, 128>}, {pipeline_mode = #tpu.pipeline_mode<synchronous>, transform_indices = @transform_15, window_bounds = array<i64: 2, 1, 128>}, {pipeline_mode = #tpu.pipeline_mode<synchronous>, transform_indices = @transform_16, window_bounds = array<i64: 128, 1>}, {pipeline_mode = #tpu.pipeline_mode<synchronous>, transform_indices = @transform_17, window_bounds = array<i64: 1, 1>}, {transform_indices = @transform_18, window_bounds = array<i64: 3, 1, 8, 128>}, {transform_indices = @transform_19, window_bounds = array<i64: 2, 2, 8, 8>}, {transform_indices = @transform_20, window_bounds = array<i64: 1, 8, 1>}]} {
    %c0 = arith.constant 0 : index
    %c0_0 = arith.constant 0 : index
    %c0_1 = arith.constant 0 : index
    %0 = vector.load %arg2[%c0, %c0_0, %c0_1] : memref<1x1x8xf32, #tpu.memory_space<vmem>>, vector<1x1x8xf32>
    %1 = vector.shape_cast %0 : vector<1x1x8xf32> to vector<1x8xf32>
    %c0_2 = arith.constant 0 : index
    %c0_3 = arith.constant 0 : index
    %c0_4 = arith.constant 0 : index
    %2 = vector.load %arg1[%c0_2, %c0_3, %c0_4] : memref<1x8x128xf32, #tpu.memory_space<vmem>>, vector<1x8x128xf32>
    %3 = vector.shape_cast %2 : vector<1x8x128xf32> to vector<8x128xf32>
    %c0_5 = arith.constant 0 : index
    %c0_6 = arith.constant 0 : index
    %4 = vector.load %arg3[%c0_5, %c0_6] : memref<1x128xf32, #tpu.memory_space<vmem>>, vector<1x128xf32>
    %c0_7 = arith.constant 0 : index
    %c0_8 = arith.constant 0 : index
    %5 = vector.load %arg4[%c0_7, %c0_8] : memref<1x128xf32, #tpu.memory_space<vmem>>, vector<1x128xf32>
    %cst = arith.constant dense<0.000000e+00> : vector<8xf32>
    %6 = vector.multi_reduction <add>, %3, %cst [1] : vector<8x128xf32> to vector<8xf32>
    %7 = vector.shape_cast %6 : vector<8xf32> to vector<8x1xf32>
    %cst_9 = arith.constant 1.280000e+02 : f32
    %8 = vector.broadcast %cst_9 : f32 to vector<8x1xf32>
    %9 = arith.divf %7, %8 : vector<8x1xf32>
    %10 = vector.broadcast %9 : vector<8x1xf32> to vector<8x128xf32>
    %11 = arith.subf %3, %10 : vector<8x128xf32>
    %12 = arith.mulf %11, %11 : vector<8x128xf32>
    %cst_10 = arith.constant dense<0.000000e+00> : vector<8xf32>
    %13 = vector.multi_reduction <add>, %12, %cst_10 [1] : vector<8x128xf32> to vector<8xf32>
    %14 = vector.shape_cast %13 : vector<8xf32> to vector<8x1xf32>
    %cst_11 = arith.constant 1.280000e+02 : f32
    %15 = vector.broadcast %cst_11 : f32 to vector<8x1xf32>
    %16 = arith.divf %14, %15 : vector<8x1xf32>
    %17 = vector.broadcast %9 : vector<8x1xf32> to vector<8x128xf32>
    %18 = arith.subf %3, %17 : vector<8x128xf32>
    %cst_12 = arith.constant 9.99999996E-13 : f32
    %19 = vector.broadcast %cst_12 : f32 to vector<8x1xf32>
    %20 = arith.addf %16, %19 : vector<8x1xf32>
    %21 = math.rsqrt %20 : vector<8x1xf32>
    %22 = vector.broadcast %21 : vector<8x1xf32> to vector<8x128xf32>
    %23 = arith.mulf %18, %22 : vector<8x128xf32>
    %24 = vector.broadcast %4 : vector<1x128xf32> to vector<8x128xf32>
    %25 = arith.mulf %23, %24 : vector<8x128xf32>
    %26 = vector.broadcast %5 : vector<1x128xf32> to vector<8x128xf32>
    %27 = arith.addf %25, %26 : vector<8x128xf32>
    %c0_13 = arith.constant 0 : index
    %c0_14 = arith.constant 0 : index
    %c0_15 = arith.constant 0 : index
    %c0_16 = arith.constant 0 : index
    %28 = vector.load %arg19[%c0_13, %c0_14, %c0_15, %c0_16] : memref<3x1x8x128xf32, #tpu.memory_space<vmem>>, vector<1x1x8x128xf32>
    %29 = vector.shape_cast %28 : vector<1x1x8x128xf32> to vector<8x128xf32>
    %30 = vector.shape_cast %27 : vector<8x128xf32> to vector<1x1x8x128xf32>
    tpu.vector_store %arg19[%c0_13, %c0_14, %c0_15, %c0_16], %30 {strides = array<i32>} : memref<3x1x8x128xf32, #tpu.memory_space<vmem>>, vector<1x1x8x128xf32>,
    %c0_17 = arith.constant 0 : index
    %c0_18 = arith.constant 0 : index
    %c0_19 = arith.constant 0 : index
    %31 = vector.load %arg5[%c0_17, %c0_18, %c0_19] : memref<2x128x384xf32, #tpu.memory_space<vmem>>, vector<1x128x384xf32>
    %32 = vector.shape_cast %31 : vector<1x128x384xf32> to vector<128x384xf32>
    %cst_20 = arith.constant dense<0.000000e+00> : vector<8x384xf32>
    %33 = tpu.matmul %27, %32, %cst_20 {dimension_numbers = #tpu.dot_dimension_numbers<[1], [0], [0], [1], [0, 0, 1, 1], [], []>} : vector<8x128xf32>, vector<128x384xf32>, vector<8x384xf32> -> vector<8x384xf32>
    %c0_21 = arith.constant 0 : index
    %c0_22 = arith.constant 0 : index
    %c0_23 = arith.constant 0 : index
    %34 = vector.load %arg6[%c0_21, %c0_22, %c0_23] : memref<2x1x384xf32, #tpu.memory_space<vmem>>, vector<1x1x384xf32>
    %35 = vector.shape_cast %34 : vector<1x1x384xf32> to vector<1x384xf32>
    %36 = vector.broadcast %35 : vector<1x384xf32> to vector<8x384xf32>
    %37 = arith.addf %33, %36 : vector<8x384xf32>
    %38 = vector.extract_strided_slice %37 {offsets = [0, 0], sizes = [8, 64], strides = [1, 1]} : vector<8x384xf32> to vector<8x64xf32>
    %39 = vector.extract_strided_slice %37 {offsets = [0, 128], sizes = [8, 64], strides = [1, 1]} : vector<8x384xf32> to vector<8x64xf32>
    %40 = vector.extract_strided_slice %37 {offsets = [0, 256], sizes = [8, 64], strides = [1, 1]} : vector<8x384xf32> to vector<8x64xf32>
    %cst_24 = arith.constant dense<0.000000e+00> : vector<8x8xf32>
    %41 = tpu.matmul %38, %39, %cst_24 {dimension_numbers = #tpu.dot_dimension_numbers<[1], [1], [0], [0], [0, 0, 1, 0], [], []>} : vector<8x64xf32>, vector<8x64xf32>, vector<8x8xf32> -> vector<8x8xf32>
    %cst_25 = arith.constant 1.250000e-01 : f32
    %42 = vector.broadcast %cst_25 : f32 to vector<8x8xf32>
    %43 = arith.mulf %41, %42 : vector<8x8xf32>
    %44 = vector.broadcast %1 : vector<1x8xf32> to vector<8x8xf32>
    %45 = arith.addf %43, %44 : vector<8x8xf32>
    %cst_26 = arith.constant dense<0xFF800000> : vector<8xf32>
    %46 = vector.multi_reduction <maximumf>, %45, %cst_26 [1] : vector<8x8xf32> to vector<8xf32>
    %47 = vector.shape_cast %46 : vector<8xf32> to vector<8x1xf32>
    %48 = vector.broadcast %47 : vector<8x1xf32> to vector<8x8xf32>
    %49 = arith.subf %45, %48 : vector<8x8xf32>
    %50 = math.exp %49 : vector<8x8xf32>
    %cst_27 = arith.constant dense<0.000000e+00> : vector<8xf32>
    %51 = vector.multi_reduction <add>, %50, %cst_27 [1] : vector<8x8xf32> to vector<8xf32>
    %52 = vector.shape_cast %51 : vector<8xf32> to vector<8x1xf32>
    %53 = tpu.reciprocal %52 {approx = true} : vector<8x1xf32> -> vector<8x1xf32>
    %54 = vector.broadcast %53 : vector<8x1xf32> to vector<8x8xf32>
    %55 = arith.mulf %50, %54 : vector<8x8xf32>
    %c0_28 = arith.constant 0 : index
    %c0_29 = arith.constant 0 : index
    %c0_30 = arith.constant 0 : index
    %c0_31 = arith.constant 0 : index
    %56 = vector.load %arg20[%c0_28, %c0_29, %c0_30, %c0_31] : memref<2x2x8x8xf32, #tpu.memory_space<vmem>>, vector<1x1x8x8xf32>
    %57 = vector.shape_cast %56 : vector<1x1x8x8xf32> to vector<8x8xf32>
    %58 = vector.shape_cast %55 : vector<8x8xf32> to vector<1x1x8x8xf32>
    tpu.vector_store %arg20[%c0_28, %c0_29, %c0_30, %c0_31], %58 {strides = array<i32>} : memref<2x2x8x8xf32, #tpu.memory_space<vmem>>, vector<1x1x8x8xf32>,
    %cst_32 = arith.constant dense<0.000000e+00> : vector<8x64xf32>
    %59 = tpu.matmul %55, %40, %cst_32 {dimension_numbers = #tpu.dot_dimension_numbers<[1], [0], [0], [1], [0, 0, 1, 1], [], []>} : vector<8x8xf32>, vector<8x64xf32>, vector<8x64xf32> -> vector<8x64xf32>
    %c0_33 = arith.constant 0 : index
    %c0_34 = arith.constant 0 : index
    %60 = vector.load %arg22[%c0_33, %c0_34] : memref<8x128xf32, #tpu.memory_space<vmem>>, vector<8x64xf32>
    tpu.vector_store %arg22[%c0_33, %c0_34], %59 {strides = array<i32>} : memref<8x128xf32, #tpu.memory_space<vmem>>, vector<8x64xf32>,
    %61 = vector.extract_strided_slice %37 {offsets = [0, 64], sizes = [8, 64], strides = [1, 1]} : vector<8x384xf32> to vector<8x64xf32>
    %62 = vector.extract_strided_slice %37 {offsets = [0, 192], sizes = [8, 64], strides = [1, 1]} : vector<8x384xf32> to vector<8x64xf32>
    %63 = vector.extract_strided_slice %37 {offsets = [0, 320], sizes = [8, 64], strides = [1, 1]} : vector<8x384xf32> to vector<8x64xf32>
    %cst_35 = arith.constant dense<0.000000e+00> : vector<8x8xf32>
    %64 = tpu.matmul %61, %62, %cst_35 {dimension_numbers = #tpu.dot_dimension_numbers<[1], [1], [0], [0], [0, 0, 1, 0], [], []>} : vector<8x64xf32>, vector<8x64xf32>, vector<8x8xf32> -> vector<8x8xf32>
    %cst_36 = arith.constant 1.250000e-01 : f32
    %65 = vector.broadcast %cst_36 : f32 to vector<8x8xf32>
    %66 = arith.mulf %64, %65 : vector<8x8xf32>
    %67 = vector.broadcast %1 : vector<1x8xf32> to vector<8x8xf32>
    %68 = arith.addf %66, %67 : vector<8x8xf32>
    %cst_37 = arith.constant dense<0xFF800000> : vector<8xf32>
    %69 = vector.multi_reduction <maximumf>, %68, %cst_37 [1] : vector<8x8xf32> to vector<8xf32>
    %70 = vector.shape_cast %69 : vector<8xf32> to vector<8x1xf32>
    %71 = vector.broadcast %70 : vector<8x1xf32> to vector<8x8xf32>
    %72 = arith.subf %68, %71 : vector<8x8xf32>
    %73 = math.exp %72 : vector<8x8xf32>
    %cst_38 = arith.constant dense<0.000000e+00> : vector<8xf32>
    %74 = vector.multi_reduction <add>, %73, %cst_38 [1] : vector<8x8xf32> to vector<8xf32>
    %75 = vector.shape_cast %74 : vector<8xf32> to vector<8x1xf32>
    %76 = tpu.reciprocal %75 {approx = true} : vector<8x1xf32> -> vector<8x1xf32>
    %77 = vector.broadcast %76 : vector<8x1xf32> to vector<8x8xf32>
    %78 = arith.mulf %73, %77 : vector<8x8xf32>
    %c0_39 = arith.constant 0 : index
    %c1 = arith.constant 1 : index
    %c0_40 = arith.constant 0 : index
    %c0_41 = arith.constant 0 : index
    %79 = vector.load %arg20[%c0_39, %c1, %c0_40, %c0_41] : memref<2x2x8x8xf32, #tpu.memory_space<vmem>>, vector<1x1x8x8xf32>
    %80 = vector.shape_cast %79 : vector<1x1x8x8xf32> to vector<8x8xf32>
    %81 = vector.shape_cast %78 : vector<8x8xf32> to vector<1x1x8x8xf32>
    tpu.vector_store %arg20[%c0_39, %c1, %c0_40, %c0_41], %81 {strides = array<i32>} : memref<2x2x8x8xf32, #tpu.memory_space<vmem>>, vector<1x1x8x8xf32>,
    %cst_42 = arith.constant dense<0.000000e+00> : vector<8x64xf32>
    %82 = tpu.matmul %78, %63, %cst_42 {dimension_numbers = #tpu.dot_dimension_numbers<[1], [0], [0], [1], [0, 0, 1, 1], [], []>} : vector<8x8xf32>, vector<8x64xf32>, vector<8x64xf32> -> vector<8x64xf32>
    %c0_43 = arith.constant 0 : index
    %c64 = arith.constant 64 : index
    %83 = vector.load %arg22[%c0_43, %c64] : memref<8x128xf32, #tpu.memory_space<vmem>>, vector<8x64xf32>
    tpu.vector_store %arg22[%c0_43, %c64], %82 {strides = array<i32>} : memref<8x128xf32, #tpu.memory_space<vmem>>, vector<8x64xf32>,
    %c0_44 = arith.constant 0 : index
    %c0_45 = arith.constant 0 : index
    %84 = vector.load %arg22[%c0_44, %c0_45] : memref<8x128xf32, #tpu.memory_space<vmem>>, vector<8x128xf32>
    %c0_46 = arith.constant 0 : index
    %c0_47 = arith.constant 0 : index
    %c0_48 = arith.constant 0 : index
    %85 = vector.load %arg7[%c0_46, %c0_47, %c0_48] : memref<2x128x128xf32, #tpu.memory_space<vmem>>, vector<1x128x128xf32>
    %86 = vector.shape_cast %85 : vector<1x128x128xf32> to vector<128x128xf32>
    %cst_49 = arith.constant dense<0.000000e+00> : vector<8x128xf32>
    %87 = tpu.matmul %84, %86, %cst_49 {dimension_numbers = #tpu.dot_dimension_numbers<[1], [0], [0], [1], [0, 0, 1, 1], [], []>} : vector<8x128xf32>, vector<128x128xf32>, vector<8x128xf32> -> vector<8x128xf32>
    %c0_50 = arith.constant 0 : index
    %c0_51 = arith.constant 0 : index
    %c0_52 = arith.constant 0 : index
    %88 = vector.load %arg8[%c0_50, %c0_51, %c0_52] : memref<2x1x128xf32, #tpu.memory_space<vmem>>, vector<1x1x128xf32>
    %89 = vector.shape_cast %88 : vector<1x1x128xf32> to vector<1x128xf32>
    %90 = vector.broadcast %89 : vector<1x128xf32> to vector<8x128xf32>
    %91 = arith.addf %87, %90 : vector<8x128xf32>
    %92 = arith.addf %91, %27 : vector<8x128xf32>
    %c0_53 = arith.constant 0 : index
    %c0_54 = arith.constant 0 : index
    %c0_55 = arith.constant 0 : index
    %93 = vector.load %arg9[%c0_53, %c0_54, %c0_55] : memref<2x1x128xf32, #tpu.memory_space<vmem>>, vector<1x1x128xf32>
    %94 = vector.shape_cast %93 : vector<1x1x128xf32> to vector<1x128xf32>
    %c0_56 = arith.constant 0 : index
    %c0_57 = arith.constant 0 : index
    %c0_58 = arith.constant 0 : index
    %95 = vector.load %arg10[%c0_56, %c0_57, %c0_58] : memref<2x1x128xf32, #tpu.memory_space<vmem>>, vector<1x1x128xf32>
    %96 = vector.shape_cast %95 : vector<1x1x128xf32> to vector<1x128xf32>
    %cst_59 = arith.constant dense<0.000000e+00> : vector<8xf32>
    %97 = vector.multi_reduction <add>, %92, %cst_59 [1] : vector<8x128xf32> to vector<8xf32>
    %98 = vector.shape_cast %97 : vector<8xf32> to vector<8x1xf32>
    %cst_60 = arith.constant 1.280000e+02 : f32
    %99 = vector.broadcast %cst_60 : f32 to vector<8x1xf32>
    %100 = arith.divf %98, %99 : vector<8x1xf32>
    %101 = vector.broadcast %100 : vector<8x1xf32> to vector<8x128xf32>
    %102 = arith.subf %92, %101 : vector<8x128xf32>
    %103 = arith.mulf %102, %102 : vector<8x128xf32>
    %cst_61 = arith.constant dense<0.000000e+00> : vector<8xf32>
    %104 = vector.multi_reduction <add>, %103, %cst_61 [1] : vector<8x128xf32> to vector<8xf32>
    %105 = vector.shape_cast %104 : vector<8xf32> to vector<8x1xf32>
    %cst_62 = arith.constant 1.280000e+02 : f32
    %106 = vector.broadcast %cst_62 : f32 to vector<8x1xf32>
    %107 = arith.divf %105, %106 : vector<8x1xf32>
    %108 = vector.broadcast %100 : vector<8x1xf32> to vector<8x128xf32>
    %109 = arith.subf %92, %108 : vector<8x128xf32>
    %cst_63 = arith.constant 9.99999996E-13 : f32
    %110 = vector.broadcast %cst_63 : f32 to vector<8x1xf32>
    %111 = arith.addf %107, %110 : vector<8x1xf32>
    %112 = math.rsqrt %111 : vector<8x1xf32>
    %113 = vector.broadcast %112 : vector<8x1xf32> to vector<8x128xf32>
    %114 = arith.mulf %109, %113 : vector<8x128xf32>
    %115 = vector.broadcast %94 : vector<1x128xf32> to vector<8x128xf32>
    %116 = arith.mulf %114, %115 : vector<8x128xf32>
    %117 = vector.broadcast %96 : vector<1x128xf32> to vector<8x128xf32>
    %118 = arith.addf %116, %117 : vector<8x128xf32>
    %c0_64 = arith.constant 0 : index
    %c0_65 = arith.constant 0 : index
    %c0_66 = arith.constant 0 : index
    %119 = vector.load %arg11[%c0_64, %c0_65, %c0_66] : memref<2x128x256xf32, #tpu.memory_space<vmem>>, vector<1x128x256xf32>
    %120 = vector.shape_cast %119 : vector<1x128x256xf32> to vector<128x256xf32>
    %cst_67 = arith.constant dense<0.000000e+00> : vector<8x256xf32>
    %121 = tpu.matmul %118, %120, %cst_67 {dimension_numbers = #tpu.dot_dimension_numbers<[1], [0], [0], [1], [0, 0, 1, 1], [], []>} : vector<8x128xf32>, vector<128x256xf32>, vector<8x256xf32> -> vector<8x256xf32>
    %c0_68 = arith.constant 0 : index
    %c0_69 = arith.constant 0 : index
    %c0_70 = arith.constant 0 : index
    %122 = vector.load %arg12[%c0_68, %c0_69, %c0_70] : memref<2x1x256xf32, #tpu.memory_space<vmem>>, vector<1x1x256xf32>
    %123 = vector.shape_cast %122 : vector<1x1x256xf32> to vector<1x256xf32>
    %124 = vector.broadcast %123 : vector<1x256xf32> to vector<8x256xf32>
    %125 = arith.addf %121, %124 : vector<8x256xf32>
    %cst_71 = arith.constant 5.000000e-01 : f32
    %126 = vector.broadcast %cst_71 : f32 to vector<8x256xf32>
    %127 = arith.mulf %126, %125 : vector<8x256xf32>
    %cst_72 = arith.constant 4.471500e-02 : f32
    %128 = vector.broadcast %cst_72 : f32 to vector<8x256xf32>
    %129 = arith.mulf %128, %125 : vector<8x256xf32>
    %130 = arith.mulf %129, %125 : vector<8x256xf32>
    %131 = arith.mulf %130, %125 : vector<8x256xf32>
    %132 = arith.addf %125, %131 : vector<8x256xf32>
    %cst_73 = arith.constant 0.797884583 : f32
    %133 = vector.broadcast %cst_73 : f32 to vector<8x256xf32>
    %134 = arith.mulf %133, %132 : vector<8x256xf32>
    %135 = math.tanh %134 : vector<8x256xf32>
    %cst_74 = arith.constant 1.000000e+00 : f32
    %136 = vector.broadcast %cst_74 : f32 to vector<8x256xf32>
    %137 = arith.addf %136, %135 : vector<8x256xf32>
    %138 = arith.mulf %127, %137 : vector<8x256xf32>
    %c0_75 = arith.constant 0 : index
    %c0_76 = arith.constant 0 : index
    %c0_77 = arith.constant 0 : index
    %139 = vector.load %arg13[%c0_75, %c0_76, %c0_77] : memref<2x256x128xf32, #tpu.memory_space<vmem>>, vector<1x256x128xf32>
    %140 = vector.shape_cast %139 : vector<1x256x128xf32> to vector<256x128xf32>
    %cst_78 = arith.constant dense<0.000000e+00> : vector<8x128xf32>
    %141 = tpu.matmul %138, %140, %cst_78 {dimension_numbers = #tpu.dot_dimension_numbers<[1], [0], [0], [1], [0, 0, 1, 1], [], []>} : vector<8x256xf32>, vector<256x128xf32>, vector<8x128xf32> -> vector<8x128xf32>
    %c0_79 = arith.constant 0 : index
    %c0_80 = arith.constant 0 : index
    %c0_81 = arith.constant 0 : index
    %142 = vector.load %arg14[%c0_79, %c0_80, %c0_81] : memref<2x1x128xf32, #tpu.memory_space<vmem>>, vector<1x1x128xf32>
    %143 = vector.shape_cast %142 : vector<1x1x128xf32> to vector<1x128xf32>
    %144 = vector.broadcast %143 : vector<1x128xf32> to vector<8x128xf32>
    %145 = arith.addf %141, %144 : vector<8x128xf32>
    %146 = arith.addf %145, %118 : vector<8x128xf32>
    %c0_82 = arith.constant 0 : index
    %c0_83 = arith.constant 0 : index
    %c0_84 = arith.constant 0 : index
    %147 = vector.load %arg15[%c0_82, %c0_83, %c0_84] : memref<2x1x128xf32, #tpu.memory_space<vmem>>, vector<1x1x128xf32>
    %148 = vector.shape_cast %147 : vector<1x1x128xf32> to vector<1x128xf32>
    %c0_85 = arith.constant 0 : index
    %c0_86 = arith.constant 0 : index
    %c0_87 = arith.constant 0 : index
    %149 = vector.load %arg16[%c0_85, %c0_86, %c0_87] : memref<2x1x128xf32, #tpu.memory_space<vmem>>, vector<1x1x128xf32>
    %150 = vector.shape_cast %149 : vector<1x1x128xf32> to vector<1x128xf32>
    %cst_88 = arith.constant dense<0.000000e+00> : vector<8xf32>
    %151 = vector.multi_reduction <add>, %146, %cst_88 [1] : vector<8x128xf32> to vector<8xf32>
    %152 = vector.shape_cast %151 : vector<8xf32> to vector<8x1xf32>
    %cst_89 = arith.constant 1.280000e+02 : f32
    %153 = vector.broadcast %cst_89 : f32 to vector<8x1xf32>
    %154 = arith.divf %152, %153 : vector<8x1xf32>
    %155 = vector.broadcast %154 : vector<8x1xf32> to vector<8x128xf32>
    %156 = arith.subf %146, %155 : vector<8x128xf32>
    %157 = arith.mulf %156, %156 : vector<8x128xf32>
    %cst_90 = arith.constant dense<0.000000e+00> : vector<8xf32>
    %158 = vector.multi_reduction <add>, %157, %cst_90 [1] : vector<8x128xf32> to vector<8xf32>
    %159 = vector.shape_cast %158 : vector<8xf32> to vector<8x1xf32>
    %cst_91 = arith.constant 1.280000e+02 : f32
    %160 = vector.broadcast %cst_91 : f32 to vector<8x1xf32>
    %161 = arith.divf %159, %160 : vector<8x1xf32>
    %162 = vector.broadcast %154 : vector<8x1xf32> to vector<8x128xf32>
    %163 = arith.subf %146, %162 : vector<8x128xf32>
    %cst_92 = arith.constant 9.99999996E-13 : f32
    %164 = vector.broadcast %cst_92 : f32 to vector<8x1xf32>
    %165 = arith.addf %161, %164 : vector<8x1xf32>
    %166 = math.rsqrt %165 : vector<8x1xf32>
    %167 = vector.broadcast %166 : vector<8x1xf32> to vector<8x128xf32>
    %168 = arith.mulf %163, %167 : vector<8x128xf32>
    %169 = vector.broadcast %148 : vector<1x128xf32> to vector<8x128xf32>
    %170 = arith.mulf %168, %169 : vector<8x128xf32>
    %171 = vector.broadcast %150 : vector<1x128xf32> to vector<8x128xf32>
    %172 = arith.addf %170, %171 : vector<8x128xf32>
    %c1_93 = arith.constant 1 : index
    %c0_94 = arith.constant 0 : index
    %c0_95 = arith.constant 0 : index
    %c0_96 = arith.constant 0 : index
    %173 = vector.load %arg19[%c1_93, %c0_94, %c0_95, %c0_96] : memref<3x1x8x128xf32, #tpu.memory_space<vmem>>, vector<1x1x8x128xf32>
    %174 = vector.shape_cast %173 : vector<1x1x8x128xf32> to vector<8x128xf32>
    %175 = vector.shape_cast %172 : vector<8x128xf32> to vector<1x1x8x128xf32>
    tpu.vector_store %arg19[%c1_93, %c0_94, %c0_95, %c0_96], %175 {strides = array<i32>} : memref<3x1x8x128xf32, #tpu.memory_space<vmem>>, vector<1x1x8x128xf32>,
    %c1_97 = arith.constant 1 : index
    %c0_98 = arith.constant 0 : index
    %c0_99 = arith.constant 0 : index
    %176 = vector.load %arg5[%c1_97, %c0_98, %c0_99] : memref<2x128x384xf32, #tpu.memory_space<vmem>>, vector<1x128x384xf32>
    %177 = vector.shape_cast %176 : vector<1x128x384xf32> to vector<128x384xf32>
    %cst_100 = arith.constant dense<0.000000e+00> : vector<8x384xf32>
    %178 = tpu.matmul %172, %177, %cst_100 {dimension_numbers = #tpu.dot_dimension_numbers<[1], [0], [0], [1], [0, 0, 1, 1], [], []>} : vector<8x128xf32>, vector<128x384xf32>, vector<8x384xf32> -> vector<8x384xf32>
    %c1_101 = arith.constant 1 : index
    %c0_102 = arith.constant 0 : index
    %c0_103 = arith.constant 0 : index
    %179 = vector.load %arg6[%c1_101, %c0_102, %c0_103] : memref<2x1x384xf32, #tpu.memory_space<vmem>>, vector<1x1x384xf32>
    %180 = vector.shape_cast %179 : vector<1x1x384xf32> to vector<1x384xf32>
    %181 = vector.broadcast %180 : vector<1x384xf32> to vector<8x384xf32>
    %182 = arith.addf %178, %181 : vector<8x384xf32>
    %183 = vector.extract_strided_slice %182 {offsets = [0, 0], sizes = [8, 64], strides = [1, 1]} : vector<8x384xf32> to vector<8x64xf32>
    %184 = vector.extract_strided_slice %182 {offsets = [0, 128], sizes = [8, 64], strides = [1, 1]} : vector<8x384xf32> to vector<8x64xf32>
    %185 = vector.extract_strided_slice %182 {offsets = [0, 256], sizes = [8, 64], strides = [1, 1]} : vector<8x384xf32> to vector<8x64xf32>
    %cst_104 = arith.constant dense<0.000000e+00> : vector<8x8xf32>
    %186 = tpu.matmul %183, %184, %cst_104 {dimension_numbers = #tpu.dot_dimension_numbers<[1], [1], [0], [0], [0, 0, 1, 0], [], []>} : vector<8x64xf32>, vector<8x64xf32>, vector<8x8xf32> -> vector<8x8xf32>
    %cst_105 = arith.constant 1.250000e-01 : f32
    %187 = vector.broadcast %cst_105 : f32 to vector<8x8xf32>
    %188 = arith.mulf %186, %187 : vector<8x8xf32>
    %189 = vector.broadcast %1 : vector<1x8xf32> to vector<8x8xf32>
    %190 = arith.addf %188, %189 : vector<8x8xf32>
    %cst_106 = arith.constant dense<0xFF800000> : vector<8xf32>
    %191 = vector.multi_reduction <maximumf>, %190, %cst_106 [1] : vector<8x8xf32> to vector<8xf32>
    %192 = vector.shape_cast %191 : vector<8xf32> to vector<8x1xf32>
    %193 = vector.broadcast %192 : vector<8x1xf32> to vector<8x8xf32>
    %194 = arith.subf %190, %193 : vector<8x8xf32>
    %195 = math.exp %194 : vector<8x8xf32>
    %cst_107 = arith.constant dense<0.000000e+00> : vector<8xf32>
    %196 = vector.multi_reduction <add>, %195, %cst_107 [1] : vector<8x8xf32> to vector<8xf32>
    %197 = vector.shape_cast %196 : vector<8xf32> to vector<8x1xf32>
    %198 = tpu.reciprocal %197 {approx = true} : vector<8x1xf32> -> vector<8x1xf32>
    %199 = vector.broadcast %198 : vector<8x1xf32> to vector<8x8xf32>
    %200 = arith.mulf %195, %199 : vector<8x8xf32>
    %c1_108 = arith.constant 1 : index
    %c0_109 = arith.constant 0 : index
    %c0_110 = arith.constant 0 : index
    %c0_111 = arith.constant 0 : index
    %201 = vector.load %arg20[%c1_108, %c0_109, %c0_110, %c0_111] : memref<2x2x8x8xf32, #tpu.memory_space<vmem>>, vector<1x1x8x8xf32>
    %202 = vector.shape_cast %201 : vector<1x1x8x8xf32> to vector<8x8xf32>
    %203 = vector.shape_cast %200 : vector<8x8xf32> to vector<1x1x8x8xf32>
    tpu.vector_store %arg20[%c1_108, %c0_109, %c0_110, %c0_111], %203 {strides = array<i32>} : memref<2x2x8x8xf32, #tpu.memory_space<vmem>>, vector<1x1x8x8xf32>,
    %cst_112 = arith.constant dense<0.000000e+00> : vector<8x64xf32>
    %204 = tpu.matmul %200, %185, %cst_112 {dimension_numbers = #tpu.dot_dimension_numbers<[1], [0], [0], [1], [0, 0, 1, 1], [], []>} : vector<8x8xf32>, vector<8x64xf32>, vector<8x64xf32> -> vector<8x64xf32>
    %c0_113 = arith.constant 0 : index
    %c0_114 = arith.constant 0 : index
    %205 = vector.load %arg22[%c0_113, %c0_114] : memref<8x128xf32, #tpu.memory_space<vmem>>, vector<8x64xf32>
    tpu.vector_store %arg22[%c0_113, %c0_114], %204 {strides = array<i32>} : memref<8x128xf32, #tpu.memory_space<vmem>>, vector<8x64xf32>,
    %206 = vector.extract_strided_slice %182 {offsets = [0, 64], sizes = [8, 64], strides = [1, 1]} : vector<8x384xf32> to vector<8x64xf32>
    %207 = vector.extract_strided_slice %182 {offsets = [0, 192], sizes = [8, 64], strides = [1, 1]} : vector<8x384xf32> to vector<8x64xf32>
    %208 = vector.extract_strided_slice %182 {offsets = [0, 320], sizes = [8, 64], strides = [1, 1]} : vector<8x384xf32> to vector<8x64xf32>
    %cst_115 = arith.constant dense<0.000000e+00> : vector<8x8xf32>
    %209 = tpu.matmul %206, %207, %cst_115 {dimension_numbers = #tpu.dot_dimension_numbers<[1], [1], [0], [0], [0, 0, 1, 0], [], []>} : vector<8x64xf32>, vector<8x64xf32>, vector<8x8xf32> -> vector<8x8xf32>
    %cst_116 = arith.constant 1.250000e-01 : f32
    %210 = vector.broadcast %cst_116 : f32 to vector<8x8xf32>
    %211 = arith.mulf %209, %210 : vector<8x8xf32>
    %212 = vector.broadcast %1 : vector<1x8xf32> to vector<8x8xf32>
    %213 = arith.addf %211, %212 : vector<8x8xf32>
    %cst_117 = arith.constant dense<0xFF800000> : vector<8xf32>
    %214 = vector.multi_reduction <maximumf>, %213, %cst_117 [1] : vector<8x8xf32> to vector<8xf32>
    %215 = vector.shape_cast %214 : vector<8xf32> to vector<8x1xf32>
    %216 = vector.broadcast %215 : vector<8x1xf32> to vector<8x8xf32>
    %217 = arith.subf %213, %216 : vector<8x8xf32>
    %218 = math.exp %217 : vector<8x8xf32>
    %cst_118 = arith.constant dense<0.000000e+00> : vector<8xf32>
    %219 = vector.multi_reduction <add>, %218, %cst_118 [1] : vector<8x8xf32> to vector<8xf32>
    %220 = vector.shape_cast %219 : vector<8xf32> to vector<8x1xf32>
    %221 = tpu.reciprocal %220 {approx = true} : vector<8x1xf32> -> vector<8x1xf32>
    %222 = vector.broadcast %221 : vector<8x1xf32> to vector<8x8xf32>
    %223 = arith.mulf %218, %222 : vector<8x8xf32>
    %c1_119 = arith.constant 1 : index
    %c1_120 = arith.constant 1 : index
    %c0_121 = arith.constant 0 : index
    %c0_122 = arith.constant 0 : index
    %224 = vector.load %arg20[%c1_119, %c1_120, %c0_121, %c0_122] : memref<2x2x8x8xf32, #tpu.memory_space<vmem>>, vector<1x1x8x8xf32>
    %225 = vector.shape_cast %224 : vector<1x1x8x8xf32> to vector<8x8xf32>
    %226 = vector.shape_cast %223 : vector<8x8xf32> to vector<1x1x8x8xf32>
    tpu.vector_store %arg20[%c1_119, %c1_120, %c0_121, %c0_122], %226 {strides = array<i32>} : memref<2x2x8x8xf32, #tpu.memory_space<vmem>>, vector<1x1x8x8xf32>,
    %cst_123 = arith.constant dense<0.000000e+00> : vector<8x64xf32>
    %227 = tpu.matmul %223, %208, %cst_123 {dimension_numbers = #tpu.dot_dimension_numbers<[1], [0], [0], [1], [0, 0, 1, 1], [], []>} : vector<8x8xf32>, vector<8x64xf32>, vector<8x64xf32> -> vector<8x64xf32>
    %c0_124 = arith.constant 0 : index
    %c64_125 = arith.constant 64 : index
    %228 = vector.load %arg22[%c0_124, %c64_125] : memref<8x128xf32, #tpu.memory_space<vmem>>, vector<8x64xf32>
    tpu.vector_store %arg22[%c0_124, %c64_125], %227 {strides = array<i32>} : memref<8x128xf32, #tpu.memory_space<vmem>>, vector<8x64xf32>,
    %c0_126 = arith.constant 0 : index
    %c0_127 = arith.constant 0 : index
    %229 = vector.load %arg22[%c0_126, %c0_127] : memref<8x128xf32, #tpu.memory_space<vmem>>, vector<8x128xf32>
    %c1_128 = arith.constant 1 : index
    %c0_129 = arith.constant 0 : index
    %c0_130 = arith.constant 0 : index
    %230 = vector.load %arg7[%c1_128, %c0_129, %c0_130] : memref<2x128x128xf32, #tpu.memory_space<vmem>>, vector<1x128x128xf32>
    %231 = vector.shape_cast %230 : vector<1x128x128xf32> to vector<128x128xf32>
    %cst_131 = arith.constant dense<0.000000e+00> : vector<8x128xf32>
    %232 = tpu.matmul %229, %231, %cst_131 {dimension_numbers = #tpu.dot_dimension_numbers<[1], [0], [0], [1], [0, 0, 1, 1], [], []>} : vector<8x128xf32>, vector<128x128xf32>, vector<8x128xf32> -> vector<8x128xf32>
    %c1_132 = arith.constant 1 : index
    %c0_133 = arith.constant 0 : index
    %c0_134 = arith.constant 0 : index
    %233 = vector.load %arg8[%c1_132, %c0_133, %c0_134] : memref<2x1x128xf32, #tpu.memory_space<vmem>>, vector<1x1x128xf32>
    %234 = vector.shape_cast %233 : vector<1x1x128xf32> to vector<1x128xf32>
    %235 = vector.broadcast %234 : vector<1x128xf32> to vector<8x128xf32>
    %236 = arith.addf %232, %235 : vector<8x128xf32>
    %237 = arith.addf %236, %172 : vector<8x128xf32>
    %c1_135 = arith.constant 1 : index
    %c0_136 = arith.constant 0 : index
    %c0_137 = arith.constant 0 : index
    %238 = vector.load %arg9[%c1_135, %c0_136, %c0_137] : memref<2x1x128xf32, #tpu.memory_space<vmem>>, vector<1x1x128xf32>
    %239 = vector.shape_cast %238 : vector<1x1x128xf32> to vector<1x128xf32>
    %c1_138 = arith.constant 1 : index
    %c0_139 = arith.constant 0 : index
    %c0_140 = arith.constant 0 : index
    %240 = vector.load %arg10[%c1_138, %c0_139, %c0_140] : memref<2x1x128xf32, #tpu.memory_space<vmem>>, vector<1x1x128xf32>
    %241 = vector.shape_cast %240 : vector<1x1x128xf32> to vector<1x128xf32>
    %cst_141 = arith.constant dense<0.000000e+00> : vector<8xf32>
    %242 = vector.multi_reduction <add>, %237, %cst_141 [1] : vector<8x128xf32> to vector<8xf32>
    %243 = vector.shape_cast %242 : vector<8xf32> to vector<8x1xf32>
    %cst_142 = arith.constant 1.280000e+02 : f32
    %244 = vector.broadcast %cst_142 : f32 to vector<8x1xf32>
    %245 = arith.divf %243, %244 : vector<8x1xf32>
    %246 = vector.broadcast %245 : vector<8x1xf32> to vector<8x128xf32>
    %247 = arith.subf %237, %246 : vector<8x128xf32>
    %248 = arith.mulf %247, %247 : vector<8x128xf32>
    %cst_143 = arith.constant dense<0.000000e+00> : vector<8xf32>
    %249 = vector.multi_reduction <add>, %248, %cst_143 [1] : vector<8x128xf32> to vector<8xf32>
    %250 = vector.shape_cast %249 : vector<8xf32> to vector<8x1xf32>
    %cst_144 = arith.constant 1.280000e+02 : f32
    %251 = vector.broadcast %cst_144 : f32 to vector<8x1xf32>
    %252 = arith.divf %250, %251 : vector<8x1xf32>
    %253 = vector.broadcast %245 : vector<8x1xf32> to vector<8x128xf32>
    %254 = arith.subf %237, %253 : vector<8x128xf32>
    %cst_145 = arith.constant 9.99999996E-13 : f32
    %255 = vector.broadcast %cst_145 : f32 to vector<8x1xf32>
    %256 = arith.addf %252, %255 : vector<8x1xf32>
    %257 = math.rsqrt %256 : vector<8x1xf32>
    %258 = vector.broadcast %257 : vector<8x1xf32> to vector<8x128xf32>
    %259 = arith.mulf %254, %258 : vector<8x128xf32>
    %260 = vector.broadcast %239 : vector<1x128xf32> to vector<8x128xf32>
    %261 = arith.mulf %259, %260 : vector<8x128xf32>
    %262 = vector.broadcast %241 : vector<1x128xf32> to vector<8x128xf32>
    %263 = arith.addf %261, %262 : vector<8x128xf32>
    %c1_146 = arith.constant 1 : index
    %c0_147 = arith.constant 0 : index
    %c0_148 = arith.constant 0 : index
    %264 = vector.load %arg11[%c1_146, %c0_147, %c0_148] : memref<2x128x256xf32, #tpu.memory_space<vmem>>, vector<1x128x256xf32>
    %265 = vector.shape_cast %264 : vector<1x128x256xf32> to vector<128x256xf32>
    %cst_149 = arith.constant dense<0.000000e+00> : vector<8x256xf32>
    %266 = tpu.matmul %263, %265, %cst_149 {dimension_numbers = #tpu.dot_dimension_numbers<[1], [0], [0], [1], [0, 0, 1, 1], [], []>} : vector<8x128xf32>, vector<128x256xf32>, vector<8x256xf32> -> vector<8x256xf32>
    %c1_150 = arith.constant 1 : index
    %c0_151 = arith.constant 0 : index
    %c0_152 = arith.constant 0 : index
    %267 = vector.load %arg12[%c1_150, %c0_151, %c0_152] : memref<2x1x256xf32, #tpu.memory_space<vmem>>, vector<1x1x256xf32>
    %268 = vector.shape_cast %267 : vector<1x1x256xf32> to vector<1x256xf32>
    %269 = vector.broadcast %268 : vector<1x256xf32> to vector<8x256xf32>
    %270 = arith.addf %266, %269 : vector<8x256xf32>
    %cst_153 = arith.constant 5.000000e-01 : f32
    %271 = vector.broadcast %cst_153 : f32 to vector<8x256xf32>
    %272 = arith.mulf %271, %270 : vector<8x256xf32>
    %cst_154 = arith.constant 4.471500e-02 : f32
    %273 = vector.broadcast %cst_154 : f32 to vector<8x256xf32>
    %274 = arith.mulf %273, %270 : vector<8x256xf32>
    %275 = arith.mulf %274, %270 : vector<8x256xf32>
    %276 = arith.mulf %275, %270 : vector<8x256xf32>
    %277 = arith.addf %270, %276 : vector<8x256xf32>
    %cst_155 = arith.constant 0.797884583 : f32
    %278 = vector.broadcast %cst_155 : f32 to vector<8x256xf32>
    %279 = arith.mulf %278, %277 : vector<8x256xf32>
    %280 = math.tanh %279 : vector<8x256xf32>
    %cst_156 = arith.constant 1.000000e+00 : f32
    %281 = vector.broadcast %cst_156 : f32 to vector<8x256xf32>
    %282 = arith.addf %281, %280 : vector<8x256xf32>
    %283 = arith.mulf %272, %282 : vector<8x256xf32>
    %c1_157 = arith.constant 1 : index
    %c0_158 = arith.constant 0 : index
    %c0_159 = arith.constant 0 : index
    %284 = vector.load %arg13[%c1_157, %c0_158, %c0_159] : memref<2x256x128xf32, #tpu.memory_space<vmem>>, vector<1x256x128xf32>
    %285 = vector.shape_cast %284 : vector<1x256x128xf32> to vector<256x128xf32>
    %cst_160 = arith.constant dense<0.000000e+00> : vector<8x128xf32>
    %286 = tpu.matmul %283, %285, %cst_160 {dimension_numbers = #tpu.dot_dimension_numbers<[1], [0], [0], [1], [0, 0, 1, 1], [], []>} : vector<8x256xf32>, vector<256x128xf32>, vector<8x128xf32> -> vector<8x128xf32>
    %c1_161 = arith.constant 1 : index
    %c0_162 = arith.constant 0 : index
    %c0_163 = arith.constant 0 : index
    %287 = vector.load %arg14[%c1_161, %c0_162, %c0_163] : memref<2x1x128xf32, #tpu.memory_space<vmem>>, vector<1x1x128xf32>
    %288 = vector.shape_cast %287 : vector<1x1x128xf32> to vector<1x128xf32>
    %289 = vector.broadcast %288 : vector<1x128xf32> to vector<8x128xf32>
    %290 = arith.addf %286, %289 : vector<8x128xf32>
    %291 = arith.addf %290, %263 : vector<8x128xf32>
    %c1_164 = arith.constant 1 : index
    %c0_165 = arith.constant 0 : index
    %c0_166 = arith.constant 0 : index
    %292 = vector.load %arg15[%c1_164, %c0_165, %c0_166] : memref<2x1x128xf32, #tpu.memory_space<vmem>>, vector<1x1x128xf32>
    %293 = vector.shape_cast %292 : vector<1x1x128xf32> to vector<1x128xf32>
    %c1_167 = arith.constant 1 : index
    %c0_168 = arith.constant 0 : index
    %c0_169 = arith.constant 0 : index
    %294 = vector.load %arg16[%c1_167, %c0_168, %c0_169] : memref<2x1x128xf32, #tpu.memory_space<vmem>>, vector<1x1x128xf32>
    %295 = vector.shape_cast %294 : vector<1x1x128xf32> to vector<1x128xf32>
    %cst_170 = arith.constant dense<0.000000e+00> : vector<8xf32>
    %296 = vector.multi_reduction <add>, %291, %cst_170 [1] : vector<8x128xf32> to vector<8xf32>
    %297 = vector.shape_cast %296 : vector<8xf32> to vector<8x1xf32>
    %cst_171 = arith.constant 1.280000e+02 : f32
    %298 = vector.broadcast %cst_171 : f32 to vector<8x1xf32>
    %299 = arith.divf %297, %298 : vector<8x1xf32>
    %300 = vector.broadcast %299 : vector<8x1xf32> to vector<8x128xf32>
    %301 = arith.subf %291, %300 : vector<8x128xf32>
    %302 = arith.mulf %301, %301 : vector<8x128xf32>
    %cst_172 = arith.constant dense<0.000000e+00> : vector<8xf32>
    %303 = vector.multi_reduction <add>, %302, %cst_172 [1] : vector<8x128xf32> to vector<8xf32>
    %304 = vector.shape_cast %303 : vector<8xf32> to vector<8x1xf32>
    %cst_173 = arith.constant 1.280000e+02 : f32
    %305 = vector.broadcast %cst_173 : f32 to vector<8x1xf32>
    %306 = arith.divf %304, %305 : vector<8x1xf32>
    %307 = vector.broadcast %299 : vector<8x1xf32> to vector<8x128xf32>
    %308 = arith.subf %291, %307 : vector<8x128xf32>
    %cst_174 = arith.constant 9.99999996E-13 : f32
    %309 = vector.broadcast %cst_174 : f32 to vector<8x1xf32>
    %310 = arith.addf %306, %309 : vector<8x1xf32>
    %311 = math.rsqrt %310 : vector<8x1xf32>
    %312 = vector.broadcast %311 : vector<8x1xf32> to vector<8x128xf32>
    %313 = arith.mulf %308, %312 : vector<8x128xf32>
    %314 = vector.broadcast %293 : vector<1x128xf32> to vector<8x128xf32>
    %315 = arith.mulf %313, %314 : vector<8x128xf32>
    %316 = vector.broadcast %295 : vector<1x128xf32> to vector<8x128xf32>
    %317 = arith.addf %315, %316 : vector<8x128xf32>
    %c2 = arith.constant 2 : index
    %c0_175 = arith.constant 0 : index
    %c0_176 = arith.constant 0 : index
    %c0_177 = arith.constant 0 : index
    %318 = vector.load %arg19[%c2, %c0_175, %c0_176, %c0_177] : memref<3x1x8x128xf32, #tpu.memory_space<vmem>>, vector<1x1x8x128xf32>
    %319 = vector.shape_cast %318 : vector<1x1x8x128xf32> to vector<8x128xf32>
    %320 = vector.shape_cast %317 : vector<8x128xf32> to vector<1x1x8x128xf32>
    tpu.vector_store %arg19[%c2, %c0_175, %c0_176, %c0_177], %320 {strides = array<i32>} : memref<3x1x8x128xf32, #tpu.memory_space<vmem>>, vector<1x1x8x128xf32>,
    %c0_178 = arith.constant 0 : index
    %c0_179 = arith.constant 0 : index
    %321 = vector.load %arg17[%c0_178, %c0_179] : memref<128x1xf32, #tpu.memory_space<vmem>>, vector<128x1xf32>
    %cst_180 = arith.constant dense<0.000000e+00> : vector<8x1xf32>
    %322 = tpu.matmul %317, %321, %cst_180 {dimension_numbers = #tpu.dot_dimension_numbers<[1], [0], [0], [1], [0, 0, 1, 1], [], []>} : vector<8x128xf32>, vector<128x1xf32>, vector<8x1xf32> -> vector<8x1xf32>
    %c0_181 = arith.constant 0 : index
    %c0_182 = arith.constant 0 : index
    %323 = vector.load %arg18[%c0_181, %c0_182] : memref<1x1xf32, #tpu.memory_space<vmem>>, vector<1x1xf32>
    %324 = vector.broadcast %323 : vector<1x1xf32> to vector<8x1xf32>
    %325 = arith.addf %322, %324 : vector<8x1xf32>
    %c0_183 = arith.constant 0 : index
    %c0_184 = arith.constant 0 : index
    %c0_185 = arith.constant 0 : index
    %326 = vector.load %arg21[%c0_183, %c0_184, %c0_185] : memref<1x8x1xf32, #tpu.memory_space<vmem>>, vector<1x8x1xf32>
    %327 = vector.shape_cast %326 : vector<1x8x1xf32> to vector<8x1xf32>
    %328 = vector.shape_cast %325 : vector<8x1xf32> to vector<1x8x1xf32>
    tpu.vector_store %arg21[%c0_183, %c0_184, %c0_185], %328 {strides = array<i32>} : memref<1x8x1xf32, #tpu.memory_space<vmem>>, vector<1x8x1xf32>,
    return
  }
  func.func @transform_0(%arg0: i32) -> (i32, i32, i32) {
    %c0_i32 = arith.constant 0 : i32
    %c0_i32_0 = arith.constant 0 : i32
    %c0_i32_1 = arith.constant 0 : i32
    return %arg0, %c0_i32, %c0_i32_0 : i32, i32, i32
  }
  func.func @transform_1(%arg0: i32) -> (i32, i32, i32) {
    %c0_i32 = arith.constant 0 : i32
    %c0_i32_0 = arith.constant 0 : i32
    %c0_i32_1 = arith.constant 0 : i32
    return %arg0, %c0_i32, %c0_i32_0 : i32, i32, i32
  }
  func.func @transform_2(%arg0: i32) -> (i32, i32) {
    %c0_i32 = arith.constant 0 : i32
    %c0_i32_0 = arith.constant 0 : i32
    %c0_i32_1 = arith.constant 0 : i32
    return %c0_i32, %c0_i32_0 : i32, i32
  }
  func.func @transform_3(%arg0: i32) -> (i32, i32) {
    %c0_i32 = arith.constant 0 : i32
    %c0_i32_0 = arith.constant 0 : i32
    %c0_i32_1 = arith.constant 0 : i32
    return %c0_i32, %c0_i32_0 : i32, i32
  }
  func.func @transform_4(%arg0: i32) -> (i32, i32, i32) {
    %c0_i32 = arith.constant 0 : i32
    %c0_i32_0 = arith.constant 0 : i32
    %c0_i32_1 = arith.constant 0 : i32
    %c0_i32_2 = arith.constant 0 : i32
    return %c0_i32, %c0_i32_0, %c0_i32_1 : i32, i32, i32
  }
  func.func @transform_5(%arg0: i32) -> (i32, i32, i32) {
    %c0_i32 = arith.constant 0 : i32
    %c0_i32_0 = arith.constant 0 : i32
    %c0_i32_1 = arith.constant 0 : i32
    %c0_i32_2 = arith.constant 0 : i32
    return %c0_i32, %c0_i32_0, %c0_i32_1 : i32, i32, i32
  }
  func.func @transform_6(%arg0: i32) -> (i32, i32, i32) {
    %c0_i32 = arith.constant 0 : i32
    %c0_i32_0 = arith.constant 0 : i32
    %c0_i32_1 = arith.constant 0 : i32
    %c0_i32_2 = arith.constant 0 : i32
    return %c0_i32, %c0_i32_0, %c0_i32_1 : i32, i32, i32
  }
  func.func @transform_7(%arg0: i32) -> (i32, i32, i32) {
    %c0_i32 = arith.constant 0 : i32
    %c0_i32_0 = arith.constant 0 : i32
    %c0_i32_1 = arith.constant 0 : i32
    %c0_i32_2 = arith.constant 0 : i32
    return %c0_i32, %c0_i32_0, %c0_i32_1 : i32, i32, i32
  }
  func.func @transform_8(%arg0: i32) -> (i32, i32, i32) {
    %c0_i32 = arith.constant 0 : i32
    %c0_i32_0 = arith.constant 0 : i32
    %c0_i32_1 = arith.constant 0 : i32
    %c0_i32_2 = arith.constant 0 : i32
    return %c0_i32, %c0_i32_0, %c0_i32_1 : i32, i32, i32
  }
  func.func @transform_9(%arg0: i32) -> (i32, i32, i32) {
    %c0_i32 = arith.constant 0 : i32
    %c0_i32_0 = arith.constant 0 : i32
    %c0_i32_1 = arith.constant 0 : i32
    %c0_i32_2 = arith.constant 0 : i32
    return %c0_i32, %c0_i32_0, %c0_i32_1 : i32, i32, i32
  }
  func.func @transform_10(%arg0: i32) -> (i32, i32, i32) {
    %c0_i32 = arith.constant 0 : i32
    %c0_i32_0 = arith.constant 0 : i32
    %c0_i32_1 = arith.constant 0 : i32
    %c0_i32_2 = arith.constant 0 : i32
    return %c0_i32, %c0_i32_0, %c0_i32_1 : i32, i32, i32
  }
  func.func @transform_11(%arg0: i32) -> (i32, i32, i32) {
    %c0_i32 = arith.constant 0 : i32
    %c0_i32_0 = arith.constant 0 : i32
    %c0_i32_1 = arith.constant 0 : i32
    %c0_i32_2 = arith.constant 0 : i32
    return %c0_i32, %c0_i32_0, %c0_i32_1 : i32, i32, i32
  }
  func.func @transform_12(%arg0: i32) -> (i32, i32, i32) {
    %c0_i32 = arith.constant 0 : i32
    %c0_i32_0 = arith.constant 0 : i32
    %c0_i32_1 = arith.constant 0 : i32
    %c0_i32_2 = arith.constant 0 : i32
    return %c0_i32, %c0_i32_0, %c0_i32_1 : i32, i32, i32
  }
  func.func @transform_13(%arg0: i32) -> (i32, i32, i32) {
    %c0_i32 = arith.constant 0 : i32
    %c0_i32_0 = arith.constant 0 : i32
    %c0_i32_1 = arith.constant 0 : i32
    %c0_i32_2 = arith.constant 0 : i32
    return %c0_i32, %c0_i32_0, %c0_i32_1 : i32, i32, i32
  }
  func.func @transform_14(%arg0: i32) -> (i32, i32, i32) {
    %c0_i32 = arith.constant 0 : i32
    %c0_i32_0 = arith.constant 0 : i32
    %c0_i32_1 = arith.constant 0 : i32
    %c0_i32_2 = arith.constant 0 : i32
    return %c0_i32, %c0_i32_0, %c0_i32_1 : i32, i32, i32
  }
  func.func @transform_15(%arg0: i32) -> (i32, i32, i32) {
    %c0_i32 = arith.constant 0 : i32
    %c0_i32_0 = arith.constant 0 : i32
    %c0_i32_1 = arith.constant 0 : i32
    %c0_i32_2 = arith.constant 0 : i32
    return %c0_i32, %c0_i32_0, %c0_i32_1 : i32, i32, i32
  }
  func.func @transform_16(%arg0: i32) -> (i32, i32) {
    %c0_i32 = arith.constant 0 : i32
    %c0_i32_0 = arith.constant 0 : i32
    %c0_i32_1 = arith.constant 0 : i32
    return %c0_i32, %c0_i32_0 : i32, i32
  }
  func.func @transform_17(%arg0: i32) -> (i32, i32) {
    %c0_i32 = arith.constant 0 : i32
    %c0_i32_0 = arith.constant 0 : i32
    %c0_i32_1 = arith.constant 0 : i32
    return %c0_i32, %c0_i32_0 : i32, i32
  }
  func.func @transform_18(%arg0: i32) -> (i32, i32, i32, i32) {
    %c0_i32 = arith.constant 0 : i32
    %c0_i32_0 = arith.constant 0 : i32
    %c0_i32_1 = arith.constant 0 : i32
    %c0_i32_2 = arith.constant 0 : i32
    return %c0_i32, %arg0, %c0_i32_0, %c0_i32_1 : i32, i32, i32, i32
  }
  func.func @transform_19(%arg0: i32) -> (i32, i32, i32, i32) {
    %c0_i32 = arith.constant 0 : i32
    %c0_i32_0 = arith.constant 0 : i32
    %c0_i32_1 = arith.constant 0 : i32
    %c0_i32_2 = arith.constant 0 : i32
    return %c0_i32, %arg0, %c0_i32_0, %c0_i32_1 : i32, i32, i32, i32
  }
  func.func @transform_20(%arg0: i32) -> (i32, i32, i32) {
    %c0_i32 = arith.constant 0 : i32
    %c0_i32_0 = arith.constant 0 : i32
    %c0_i32_1 = arith.constant 0 : i32
    return %arg0, %c0_i32, %c0_i32_0 : i32, i32, i32
  }
}

</mosaic_0001>

<llo_original>
// kernel: bert_teacher_forward.1
$region0: #{bert_teacher_forward.1}
  #allocation0 [shape = 'u32[]', space=smem, size = 0x4, offset = 0x4, fixed_abs, tag = 'smem constant byte address 0x4 - core index']
  #allocation1 [shape = 'u32[72,128]{1,0:T(1,128)}', space=vmem, size = 0x9000, scoped, tag = 'internal scratch']
  #allocation2 [shape = 'f32[8,128]{1,0:T(8,128)}', space=vmem, size = 0x1000, scoped, tag = 'scratch operand']
  #allocation3 [shape = 'f32[1,1]{1,0:T(1,128)S(1)}', space=vmem, size = 0x200, scoped, tag = 'scoped memory for bert_teacher_forward.1']
  %s0 = inlined_call_operand.vmem [shape: f32[2,8,128], index: 0, kind: input, shape index: {}]
  %s1 = inlined_call_operand.vmem [shape: f32[2,1,8], index: 1, kind: input, shape index: {}]
  %s2 = inlined_call_operand.vmem [shape: f32[1,128], index: 2, kind: input, shape index: {}]
  %s3 = inlined_call_operand.vmem [shape: f32[1,128], index: 3, kind: input, shape index: {}]
  %s4 = inlined_call_operand.vmem [shape: f32[2,128,384], index: 4, kind: input, shape index: {}]
  %s5 = inlined_call_operand.vmem [shape: f32[2,1,384], index: 5, kind: input, shape index: {}]
  %s6 = inlined_call_operand.vmem [shape: f32[2,128,128], index: 6, kind: input, shape index: {}]
  %s7 = inlined_call_operand.vmem [shape: f32[2,1,128], index: 7, kind: input, shape index: {}]
  %s8 = inlined_call_operand.vmem [shape: f32[2,1,128], index: 8, kind: input, shape index: {}]
  %s9 = inlined_call_operand.vmem [shape: f32[2,1,128], index: 9, kind: input, shape index: {}]
  %s10 = inlined_call_operand.vmem [shape: f32[2,128,256], index: 10, kind: input, shape index: {}]
  %s11 = inlined_call_operand.vmem [shape: f32[2,1,256], index: 11, kind: input, shape index: {}]
  %s12 = inlined_call_operand.vmem [shape: f32[2,256,128], index: 12, kind: input, shape index: {}]
  %s13 = inlined_call_operand.vmem [shape: f32[2,1,128], index: 13, kind: input, shape index: {}]
  %s14 = inlined_call_operand.vmem [shape: f32[2,1,128], index: 14, kind: input, shape index: {}]
  %s15 = inlined_call_operand.vmem [shape: f32[2,1,128], index: 15, kind: input, shape index: {}]
  %s16 = inlined_call_operand.vmem [shape: f32[128,1], index: 16, kind: input, shape index: {}]
  %s17 = inlined_call_operand.<no memory space> [shape: f32[1,1], index: 17, kind: input, shape index: {}]
  %s18 = inlined_call_operand.vmem [shape: f32[3,2,8,128], index: 18, kind: output, shape index: {0}]
  %s19 = inlined_call_operand.vmem [shape: f32[2,4,8,8], index: 19, kind: output, shape index: {1}]
  %s20 = inlined_call_operand.vmem [shape: f32[2,8,1], index: 20, kind: output, shape index: {2}]
  %21 = xla_tuple %s18, %s19, %s20
  %s22 = sld [smem:[#allocation0]]
  $region189: #{bert_teacher_forward.1} parent=0
    _
  %s24 = ssub.s32 1, %s22
  %s25 = scalar_select 0, %s24, %s22
  %v26 = vstv %s17
  %27 = vst [vmem:[#allocation3] sm:$0x1] %v26
  $region1: #{bert_teacher_forward.1} parent=0
    #allocation4 [shape = 'u8[24576]{0}', space=vmem, size = 0x6000, scoped, tag = 'output window, operand 0']
    #allocation5 [shape = 'u8[32768]{0}', space=vmem, size = 0x8000, scoped, tag = 'output window, operand 1']
    loop: start=0, step=1, limit=4
    $region2: #{bert_teacher_forward.1} parent=1 // loop_pre_header
      _
    $region3: #{bert_teacher_forward.1} parent=1 // loop_header
      %s29 = sphi 0, %s33
      %p30 = scmp.ge.s32.totalorder %s29, 4
      %s39 = sphi 0, %s41
      %s42 = sphi 0, %s39
      %s43 = sphi 0, %s42
      %s59 = sphi 0, %s43
      %s65 = sphi 0, %s67
      %s68 = sphi 0, %s65
      %s69 = sphi 0, %s68
      %s85 = sphi 0, %s69
      %s89 = sphi 0, %s89
      %s91 = sphi 0, %s89
      %s92 = sphi 0, %s91
      %s106 = sphi 0, %s92
      %s110 = sphi 0, %s110
      %s112 = sphi 0, %s110
      %s113 = sphi 0, %s112
      %s127 = sphi 0, %s113
      %s131 = sphi 0, %s131
      %s133 = sphi 0, %s131
      %s134 = sphi 0, %s133
      %s148 = sphi 0, %s134
      %s152 = sphi 0, %s152
      %s154 = sphi 0, %s152
      %s155 = sphi 0, %s154
      %s169 = sphi 0, %s155
      %s173 = sphi 0, %s173
      %s175 = sphi 0, %s173
      %s176 = sphi 0, %s175
      %s190 = sphi 0, %s176
      %s194 = sphi 0, %s194
      %s196 = sphi 0, %s194
      %s197 = sphi 0, %s196
      %s211 = sphi 0, %s197
      %s215 = sphi 0, %s215
      %s217 = sphi 0, %s215
      %s218 = sphi 0, %s217
      %s232 = sphi 0, %s218
      %s236 = sphi 0, %s236
      %s238 = sphi 0, %s236
      %s239 = sphi 0, %s238
      %s253 = sphi 0, %s239
      %s257 = sphi 0, %s257
      %s259 = sphi 0, %s257
      %s260 = sphi 0, %s259
      %s274 = sphi 0, %s260
      %s278 = sphi 0, %s278
      %s280 = sphi 0, %s278
      %s281 = sphi 0, %s280
      %s295 = sphi 0, %s281
      %s299 = sphi 0, %s299
      %s301 = sphi 0, %s299
      %s302 = sphi 0, %s301
      %s316 = sphi 0, %s302
      %s320 = sphi 0, %s320
      %s322 = sphi 0, %s320
      %s323 = sphi 0, %s322
      %s337 = sphi 0, %s323
      %s341 = sphi 0, %s341
      %s343 = sphi 0, %s341
      %s344 = sphi 0, %s343
      %s358 = sphi 0, %s344
      %s362 = sphi 0, %s362
      %s364 = sphi 0, %s362
      %s365 = sphi 0, %s364
      %s379 = sphi 0, %s365
      %s383 = sphi 0, %s383
      %s385 = sphi 0, %s383
      %s386 = sphi 0, %s385
      %s400 = sphi 0, %s386
      %s404 = sphi 0, %s404
      %s406 = sphi 0, %s404
      %s407 = sphi 0, %s406
      %s421 = sphi 0, %s407
      %s427 = sphi 0, %s429
      %s430 = sphi 0, %s427
      %s431 = sphi 0, %s430
      %s447 = sphi 0, %s431
      %s453 = sphi 0, %s455
      %s456 = sphi 0, %s453
      %s457 = sphi 0, %s456
      %s473 = sphi 0, %s457
      %s479 = sphi 0, %s481
      %s482 = sphi 0, %s479
      %s483 = sphi 0, %s482
      %s499 = sphi 0, %s483
    $region4: #{bert_teacher_forward.1} parent=1 // loop_header_branch
      %32 = sbr.rel (%p30) target = $region8
    $region5: #{bert_teacher_forward.1} parent=1 // loop_body
      %s34 = ssub.s32 %s29, 1
      %s35 = ssub.s32 %s29, 2
      %s36 = sadd.s32 %s29, 1
      %s37 = ssub.s32 %s29, %s36
      %p38 = scmp.eq.s32.totalorder %s37, 0
      %s40 = sadd.s32 %s39, 1
      %s41 = scalar_select %p38, %s39, %s40
      %p44 = pneg %p38
      %p45 = scmp.eq.s32.totalorder %s29, 1
      %p46 = por %p44, %p45
      %p47 = scmp.ne.s32.totalorder %s39, %s42
      %p48 = scmp.eq.s32.totalorder %s29, 0
      %p49 = por %p47, %p48
      %p50 = scmp.ne.s32.totalorder %s39, %s42
      %p51 = scmp.eq.s32.totalorder %s34, 1
      %p52 = por %p50, %p51
      %p53 = scmp.ne.s32.totalorder %s42, %s43
      %p54 = scmp.eq.s32.totalorder %s34, 0
      %p55 = por %p53, %p54
      %p56 = scmp.ne.s32.totalorder %s42, %s43
      %p57 = scmp.eq.s32.totalorder %s35, 1
      %p58 = por %p56, %p57
      %p60 = scmp.ne.s32.totalorder %s43, %s59
      %p61 = scmp.eq.s32.totalorder %s35, 0
      %p62 = por %p60, %p61
      %s63 = ssub.s32 %s29, %s36
      %p64 = scmp.eq.s32.totalorder %s63, 0
      %s66 = sadd.s32 %s65, 1
      %s67 = scalar_select %p64, %s65, %s66
      %p70 = pneg %p64
      %p71 = scmp.eq.s32.totalorder %s29, 1
      %p72 = por %p70, %p71
      %p73 = scmp.ne.s32.totalorder %s65, %s68
      %p74 = scmp.eq.s32.totalorder %s29, 0
      %p75 = por %p73, %p74
      %p76 = scmp.ne.s32.totalorder %s65, %s68
      %p77 = scmp.eq.s32.totalorder %s34, 1
      %p78 = por %p76, %p77
      %p79 = scmp.ne.s32.totalorder %s68, %s69
      %p80 = scmp.eq.s32.totalorder %s34, 0
      %p81 = por %p79, %p80
      %p82 = scmp.ne.s32.totalorder %s68, %s69
      %p83 = scmp.eq.s32.totalorder %s35, 1
      %p84 = por %p82, %p83
      %p86 = scmp.ne.s32.totalorder %s69, %s85
      %p87 = scmp.eq.s32.totalorder %s35, 0
      %p88 = por %p86, %p87
      %s90 = sadd.s32 %s89, 1
      %p93 = scmp.eq.s32.totalorder %s29, 1
      %p94 = scmp.ne.s32.totalorder %s89, %s91
      %p95 = scmp.eq.s32.totalorder %s29, 0
      %p96 = por %p94, %p95
      %p97 = scmp.ne.s32.totalorder %s89, %s91
      %p98 = scmp.eq.s32.totalorder %s34, 1
      %p99 = por %p97, %p98
      %p100 = scmp.ne.s32.totalorder %s91, %s92
      %p101 = scmp.eq.s32.totalorder %s34, 0
      %p102 = por %p100, %p101
      %p103 = scmp.ne.s32.totalorder %s91, %s92
      %p104 = scmp.eq.s32.totalorder %s35, 1
      %p105 = por %p103, %p104
      %p107 = scmp.ne.s32.totalorder %s92, %s106
      %p108 = scmp.eq.s32.totalorder %s35, 0
      %p109 = por %p107, %p108
      %s111 = sadd.s32 %s110, 1
      %p114 = scmp.eq.s32.totalorder %s29, 1
      %p115 = scmp.ne.s32.totalorder %s110, %s112
      %p116 = scmp.eq.s32.totalorder %s29, 0
      %p117 = por %p115, %p116
      %p118 = scmp.ne.s32.totalorder %s110, %s112
      %p119 = scmp.eq.s32.totalorder %s34, 1
      %p120 = por %p118, %p119
      %p121 = scmp.ne.s32.totalorder %s112, %s113
      %p122 = scmp.eq.s32.totalorder %s34, 0
      %p123 = por %p121, %p122
      %p124 = scmp.ne.s32.totalorder %s112, %s113
      %p125 = scmp.eq.s32.totalorder %s35, 1
      %p126 = por %p124, %p125
      %p128 = scmp.ne.s32.totalorder %s113, %s127
      %p129 = scmp.eq.s32.totalorder %s35, 0
      %p130 = por %p128, %p129
      %s132 = sadd.s32 %s131, 1
      %p135 = scmp.eq.s32.totalorder %s29, 1
      %p136 = scmp.ne.s32.totalorder %s131, %s133
      %p137 = scmp.eq.s32.totalorder %s29, 0
      %p138 = por %p136, %p137
      %p139 = scmp.ne.s32.totalorder %s131, %s133
      %p140 = scmp.eq.s32.totalorder %s34, 1
      %p141 = por %p139, %p140
      %p142 = scmp.ne.s32.totalorder %s133, %s134
      %p143 = scmp.eq.s32.totalorder %s34, 0
      %p144 = por %p142, %p143
      %p145 = scmp.ne.s32.totalorder %s133, %s134
      %p146 = scmp.eq.s32.totalorder %s35, 1
      %p147 = por %p145, %p146
      %p149 = scmp.ne.s32.totalorder %s134, %s148
      %p150 = scmp.eq.s32.totalorder %s35, 0
      %p151 = por %p149, %p150
      %s153 = sadd.s32 %s152, 1
      %p156 = scmp.eq.s32.totalorder %s29, 1
      %p157 = scmp.ne.s32.totalorder %s152, %s154
      %p158 = scmp.eq.s32.totalorder %s29, 0
      %p159 = por %p157, %p158
      %p160 = scmp.ne.s32.totalorder %s152, %s154
      %p161 = scmp.eq.s32.totalorder %s34, 1
      %p162 = por %p160, %p161
      %p163 = scmp.ne.s32.totalorder %s154, %s155
      %p164 = scmp.eq.s32.totalorder %s34, 0
      %p165 = por %p163, %p164
      %p166 = scmp.ne.s32.totalorder %s154, %s155
      %p167 = scmp.eq.s32.totalorder %s35, 1
      %p168 = por %p166, %p167
      %p170 = scmp.ne.s32.totalorder %s155, %s169
      %p171 = scmp.eq.s32.totalorder %s35, 0
      %p172 = por %p170, %p171
      %s174 = sadd.s32 %s173, 1
      %p177 = scmp.eq.s32.totalorder %s29, 1
      %p178 = scmp.ne.s32.totalorder %s173, %s175
      %p179 = scmp.eq.s32.totalorder %s29, 0
      %p180 = por %p178, %p179
      %p181 = scmp.ne.s32.totalorder %s173, %s175
      %p182 = scmp.eq.s32.totalorder %s34, 1
      %p183 = por %p181, %p182
      %p184 = scmp.ne.s32.totalorder %s175, %s176
      %p185 = scmp.eq.s32.totalorder %s34, 0
      %p186 = por %p184, %p185
      %p187 = scmp.ne.s32.totalorder %s175, %s176
      %p188 = scmp.eq.s32.totalorder %s35, 1
      %p189 = por %p187, %p188
      %p191 = scmp.ne.s32.totalorder %s176, %s190
      %p192 = scmp.eq.s32.totalorder %s35, 0
      %p193 = por %p191, %p192
      %s195 = sadd.s32 %s194, 1
      %p198 = scmp.eq.s32.totalorder %s29, 1
      %p199 = scmp.ne.s32.totalorder %s194, %s196
      %p200 = scmp.eq.s32.totalorder %s29, 0
      %p201 = por %p199, %p200
      %p202 = scmp.ne.s32.totalorder %s194, %s196
      %p203 = scmp.eq.s32.totalorder %s34, 1
      %p204 = por %p202, %p203
      %p205 = scmp.ne.s32.totalorder %s196, %s197
      %p206 = scmp.eq.s32.totalorder %s34, 0
      %p207 = por %p205, %p206
      %p208 = scmp.ne.s32.totalorder %s196, %s197
      %p209 = scmp.eq.s32.totalorder %s35, 1
      %p210 = por %p208, %p209
      %p212 = scmp.ne.s32.totalorder %s197, %s211
      %p213 = scmp.eq.s32.totalorder %s35, 0
      %p214 = por %p212, %p213
      %s216 = sadd.s32 %s215, 1
      %p219 = scmp.eq.s32.totalorder %s29, 1
      %p220 = scmp.ne.s32.totalorder %s215, %s217
      %p221 = scmp.eq.s32.totalorder %s29, 0
      %p222 = por %p220, %p221
      %p223 = scmp.ne.s32.totalorder %s215, %s217
      %p224 = scmp.eq.s32.totalorder %s34, 1
      %p225 = por %p223, %p224
      %p226 = scmp.ne.s32.totalorder %s217, %s218
      %p227 = scmp.eq.s32.totalorder %s34, 0
      %p228 = por %p226, %p227
      %p229 = scmp.ne.s32.totalorder %s217, %s218
      %p230 = scmp.eq.s32.totalorder %s35, 1
      %p231 = por %p229, %p230
      %p233 = scmp.ne.s32.totalorder %s218, %s232
      %p234 = scmp.eq.s32.totalorder %s35, 0
      %p235 = por %p233, %p234
      %s237 = sadd.s32 %s236, 1
      %p240 = scmp.eq.s32.totalorder %s29, 1
      %p241 = scmp.ne.s32.totalorder %s236, %s238
      %p242 = scmp.eq.s32.totalorder %s29, 0
      %p243 = por %p241, %p242
      %p244 = scmp.ne.s32.totalorder %s236, %s238
      %p245 = scmp.eq.s32.totalorder %s34, 1
      %p246 = por %p244, %p245
      %p247 = scmp.ne.s32.totalorder %s238, %s239
      %p248 = scmp.eq.s32.totalorder %s34, 0
      %p249 = por %p247, %p248
      %p250 = scmp.ne.s32.totalorder %s238, %s239
      %p251 = scmp.eq.s32.totalorder %s35, 1
      %p252 = por %p250, %p251
      %p254 = scmp.ne.s32.totalorder %s239, %s253
      %p255 = scmp.eq.s32.totalorder %s35, 0
      %p256 = por %p254, %p255
      %s258 = sadd.s32 %s257, 1
      %p261 = scmp.eq.s32.totalorder %s29, 1
      %p262 = scmp.ne.s32.totalorder %s257, %s259
      %p263 = scmp.eq.s32.totalorder %s29, 0
      %p264 = por %p262, %p263
      %p265 = scmp.ne.s32.totalorder %s257, %s259
      %p266 = scmp.eq.s32.totalorder %s34, 1
      %p267 = por %p265, %p266
      %p268 = scmp.ne.s32.totalorder %s259, %s260
      %p269 = scmp.eq.s32.totalorder %s34, 0
      %p270 = por %p268, %p269
      %p271 = scmp.ne.s32.totalorder %s259, %s260
      %p272 = scmp.eq.s32.totalorder %s35, 1
      %p273 = por %p271, %p272
      %p275 = scmp.ne.s32.totalorder %s260, %s274
      %p276 = scmp.eq.s32.totalorder %s35, 0
      %p277 = por %p275, %p276
      %s279 = sadd.s32 %s278, 1
      %p282 = scmp.eq.s32.totalorder %s29, 1
      %p283 = scmp.ne.s32.totalorder %s278, %s280
      %p284 = scmp.eq.s32.totalorder %s29, 0
      %p285 = por %p283, %p284
      %p286 = scmp.ne.s32.totalorder %s278, %s280
      %p287 = scmp.eq.s32.totalorder %s34, 1
      %p288 = por %p286, %p287
      %p289 = scmp.ne.s32.totalorder %s280, %s281
      %p290 = scmp.eq.s32.totalorder %s34, 0
      %p291 = por %p289, %p290
      %p292 = scmp.ne.s32.totalorder %s280, %s281
      %p293 = scmp.eq.s32.totalorder %s35, 1
      %p294 = por %p292, %p293
      %p296 = scmp.ne.s32.totalorder %s281, %s295
      %p297 = scmp.eq.s32.totalorder %s35, 0
      %p298 = por %p296, %p297
      %s300 = sadd.s32 %s299, 1
      %p303 = scmp.eq.s32.totalorder %s29, 1
      %p304 = scmp.ne.s32.totalorder %s299, %s301
      %p305 = scmp.eq.s32.totalorder %s29, 0
      %p306 = por %p304, %p305
      %p307 = scmp.ne.s32.totalorder %s299, %s301
      %p308 = scmp.eq.s32.totalorder %s34, 1
      %p309 = por %p307, %p308
      %p310 = scmp.ne.s32.totalorder %s301, %s302
      %p311 = scmp.eq.s32.totalorder %s34, 0
      %p312 = por %p310, %p311
      %p313 = scmp.ne.s32.totalorder %s301, %s302
      %p314 = scmp.eq.s32.totalorder %s35, 1
      %p315 = por %p313, %p314
      %p317 = scmp.ne.s32.totalorder %s302, %s316
      %p318 = scmp.eq.s32.totalorder %s35, 0
      %p319 = por %p317, %p318
      %s321 = sadd.s32 %s320, 1
      %p324 = scmp.eq.s32.totalorder %s29, 1
      %p325 = scmp.ne.s32.totalorder %s320, %s322
      %p326 = scmp.eq.s32.totalorder %s29, 0
      %p327 = por %p325, %p326
      %p328 = scmp.ne.s32.totalorder %s320, %s322
      %p329 = scmp.eq.s32.totalorder %s34, 1
      %p330 = por %p328, %p329
      %p331 = scmp.ne.s32.totalorder %s322, %s323
      %p332 = scmp.eq.s32.totalorder %s34, 0
      %p333 = por %p331, %p332
      %p334 = scmp.ne.s32.totalorder %s322, %s323
      %p335 = scmp.eq.s32.totalorder %s35, 1
      %p336 = por %p334, %p335
      %p338 = scmp.ne.s32.totalorder %s323, %s337
      %p339 = scmp.eq.s32.totalorder %s35, 0
      %p340 = por %p338, %p339
      %s342 = sadd.s32 %s341, 1
      %p345 = scmp.eq.s32.totalorder %s29, 1
      %p346 = scmp.ne.s32.totalorder %s341, %s343
      %p347 = scmp.eq.s32.totalorder %s29, 0
      %p348 = por %p346, %p347
      %p349 = scmp.ne.s32.totalorder %s341, %s343
      %p350 = scmp.eq.s32.totalorder %s34, 1
      %p351 = por %p349, %p350
      %p352 = scmp.ne.s32.totalorder %s343, %s344
      %p353 = scmp.eq.s32.totalorder %s34, 0
      %p354 = por %p352, %p353
      %p355 = scmp.ne.s32.totalorder %s343, %s344
      %p356 = scmp.eq.s32.totalorder %s35, 1
      %p357 = por %p355, %p356
      %p359 = scmp.ne.s32.totalorder %s344, %s358
      %p360 = scmp.eq.s32.totalorder %s35, 0
      %p361 = por %p359, %p360
      %s363 = sadd.s32 %s362, 1
      %p366 = scmp.eq.s32.totalorder %s29, 1
      %p367 = scmp.ne.s32.totalorder %s362, %s364
      %p368 = scmp.eq.s32.totalorder %s29, 0
      %p369 = por %p367, %p368
      %p370 = scmp.ne.s32.totalorder %s362, %s364
      %p371 = scmp.eq.s32.totalorder %s34, 1
      %p372 = por %p370, %p371
      %p373 = scmp.ne.s32.totalorder %s364, %s365
      %p374 = scmp.eq.s32.totalorder %s34, 0
      %p375 = por %p373, %p374
      %p376 = scmp.ne.s32.totalorder %s364, %s365
      %p377 = scmp.eq.s32.totalorder %s35, 1
      %p378 = por %p376, %p377
      %p380 = scmp.ne.s32.totalorder %s365, %s379
      %p381 = scmp.eq.s32.totalorder %s35, 0
      %p382 = por %p380, %p381
      %s384 = sadd.s32 %s383, 1
      %p387 = scmp.eq.s32.totalorder %s29, 1
      %p388 = scmp.ne.s32.totalorder %s383, %s385
      %p389 = scmp.eq.s32.totalorder %s29, 0
      %p390 = por %p388, %p389
      %p391 = scmp.ne.s32.totalorder %s383, %s385
      %p392 = scmp.eq.s32.totalorder %s34, 1
      %p393 = por %p391, %p392
      %p394 = scmp.ne.s32.totalorder %s385, %s386
      %p395 = scmp.eq.s32.totalorder %s34, 0
      %p396 = por %p394, %p395
      %p397 = scmp.ne.s32.totalorder %s385, %s386
      %p398 = scmp.eq.s32.totalorder %s35, 1
      %p399 = por %p397, %p398
      %p401 = scmp.ne.s32.totalorder %s386, %s400
      %p402 = scmp.eq.s32.totalorder %s35, 0
      %p403 = por %p401, %p402
      %s405 = sadd.s32 %s404, 1
      %p408 = scmp.eq.s32.totalorder %s29, 1
      %p409 = scmp.ne.s32.totalorder %s404, %s406
      %p410 = scmp.eq.s32.totalorder %s29, 0
      %p411 = por %p409, %p410
      %p412 = scmp.ne.s32.totalorder %s404, %s406
      %p413 = scmp.eq.s32.totalorder %s34, 1
      %p414 = por %p412, %p413
      %p415 = scmp.ne.s32.totalorder %s406, %s407
      %p416 = scmp.eq.s32.totalorder %s34, 0
      %p417 = por %p415, %p416
      %p418 = scmp.ne.s32.totalorder %s406, %s407
      %p419 = scmp.eq.s32.totalorder %s35, 1
      %p420 = por %p418, %p419
      %p422 = scmp.ne.s32.totalorder %s407, %s421
      %p423 = scmp.eq.s32.totalorder %s35, 0
      %p424 = por %p422, %p423
      %s425 = ssub.s32 %s29, %s36
      %p426 = scmp.eq.s32.totalorder %s425, 0
      %s428 = sadd.s32 %s427, 1
      %s429 = scalar_select %p426, %s427, %s428
      %p432 = pneg %p426
      %p433 = scmp.eq.s32.totalorder %s29, 1
      %p434 = por %p432, %p433
      %p435 = scmp.ne.s32.totalorder %s427, %s430
      %p436 = scmp.eq.s32.totalorder %s29, 0
      %p437 = por %p435, %p436
      %p438 = scmp.ne.s32.totalorder %s427, %s430
      %p439 = scmp.eq.s32.totalorder %s34, 1
      %p440 = por %p438, %p439
      %p441 = scmp.ne.s32.totalorder %s430, %s431
      %p442 = scmp.eq.s32.totalorder %s34, 0
      %p443 = por %p441, %p442
      %p444 = scmp.ne.s32.totalorder %s430, %s431
      %p445 = scmp.eq.s32.totalorder %s35, 1
      %p446 = por %p444, %p445
      %p448 = scmp.ne.s32.totalorder %s431, %s447
      %p449 = scmp.eq.s32.totalorder %s35, 0
      %p450 = por %p448, %p449
      %s451 = ssub.s32 %s29, %s36
      %p452 = scmp.eq.s32.totalorder %s451, 0
      %s454 = sadd.s32 %s453, 1
      %s455 = scalar_select %p452, %s453, %s454
      %p458 = pneg %p452
      %p459 = scmp.eq.s32.totalorder %s29, 1
      %p460 = por %p458, %p459
      %p461 = scmp.ne.s32.totalorder %s453, %s456
      %p462 = scmp.eq.s32.totalorder %s29, 0
      %p463 = por %p461, %p462
      %p464 = scmp.ne.s32.totalorder %s453, %s456
      %p465 = scmp.eq.s32.totalorder %s34, 1
      %p466 = por %p464, %p465
      %p467 = scmp.ne.s32.totalorder %s456, %s457
      %p468 = scmp.eq.s32.totalorder %s34, 0
      %p469 = por %p467, %p468
      %p470 = scmp.ne.s32.totalorder %s456, %s457
      %p471 = scmp.eq.s32.totalorder %s35, 1
      %p472 = por %p470, %p471
      %p474 = scmp.ne.s32.totalorder %s457, %s473
      %p475 = scmp.eq.s32.totalorder %s35, 0
      %p476 = por %p474, %p475
      %s477 = ssub.s32 %s29, %s36
      %p478 = scmp.eq.s32.totalorder %s477, 0
      %s480 = sadd.s32 %s479, 1
      %s481 = scalar_select %p478, %s479, %s480
      %p484 = pneg %p478
      %p485 = scmp.eq.s32.totalorder %s29, 1
      %p486 = por %p484, %p485
      %p487 = scmp.ne.s32.totalorder %s479, %s482
      %p488 = scmp.eq.s32.totalorder %s29, 0
      %p489 = por %p487, %p488
      %p490 = scmp.ne.s32.totalorder %s479, %s482
      %p491 = scmp.eq.s32.totalorder %s34, 1
      %p492 = por %p490, %p491
      %p493 = scmp.ne.s32.totalorder %s482, %s483
      %p494 = scmp.eq.s32.totalorder %s34, 0
      %p495 = por %p493, %p494
      %p496 = scmp.ne.s32.totalorder %s482, %s483
      %p497 = scmp.eq.s32.totalorder %s35, 1
      %p498 = por %p496, %p497
      %p500 = scmp.ne.s32.totalorder %s483, %s499
      %p501 = scmp.eq.s32.totalorder %s35, 0
      %p502 = por %p500, %p501
      %p503 = scmp.le.s32.totalorder 1, %s29
      %p504 = scmp.lt.s32.totalorder %s29, 3
      %p505 = pnand %p503, %p504
      %p506 = pneg %p505
      // Predicated region
      $region9: #{bert_teacher_forward.1} parent=5 // pred_check
        _
      $region10: #{bert_teacher_forward.1} parent=5 // pred_check_branch
        %508 = sbr.rel (%p505) target = $region12
      $region11: #{bert_teacher_forward.1} parent=5 // pred_region
        %s509 = ssub.s32 %s29, 1
        // Predicated region
        $region13: #{bert_teacher_forward.1} parent=11 // pred_check
          %p510 = pneg %p102
        $region14: #{bert_teacher_forward.1} parent=11 // pred_check_branch
          %512 = sbr.rel (%p510) target = $region16
        $region15: #{bert_teacher_forward.1} parent=11 // pred_region
          _
        $region16: #{bert_teacher_forward.1} parent=11 // pred_fallthru
          _
        // Predicated region
        $region17: #{bert_teacher_forward.1} parent=11 // pred_check
          %p513 = pneg %p123
        $region18: #{bert_teacher_forward.1} parent=11 // pred_check_branch
          %515 = sbr.rel (%p513) target = $region20
        $region19: #{bert_teacher_forward.1} parent=11 // pred_region
          _
        $region20: #{bert_teacher_forward.1} parent=11 // pred_fallthru
          _
        // Predicated region
        $region21: #{bert_teacher_forward.1} parent=11 // pred_check
          %p516 = pneg %p144
        $region22: #{bert_teacher_forward.1} parent=11 // pred_check_branch
          %518 = sbr.rel (%p516) target = $region24
        $region23: #{bert_teacher_forward.1} parent=11 // pred_region
          _
        $region24: #{bert_teacher_forward.1} parent=11 // pred_fallthru
          _
        // Predicated region
        $region25: #{bert_teacher_forward.1} parent=11 // pred_check
          %p519 = pneg %p165
        $region26: #{bert_teacher_forward.1} parent=11 // pred_check_branch
          %521 = sbr.rel (%p519) target = $region28
        $region27: #{bert_teacher_forward.1} parent=11 // pred_region
          _
        $region28: #{bert_teacher_forward.1} parent=11 // pred_fallthru
          _
        // Predicated region
        $region29: #{bert_teacher_forward.1} parent=11 // pred_check
          %p522 = pneg %p186
        $region30: #{bert_teacher_forward.1} parent=11 // pred_check_branch
          %524 = sbr.rel (%p522) target = $region32
        $region31: #{bert_teacher_forward.1} parent=11 // pred_region
          _
        $region32: #{bert_teacher_forward.1} parent=11 // pred_fallthru
          _
        // Predicated region
        $region33: #{bert_teacher_forward.1} parent=11 // pred_check
          %p525 = pneg %p207
        $region34: #{bert_teacher_forward.1} parent=11 // pred_check_branch
          %527 = sbr.rel (%p525) target = $region36
        $region35: #{bert_teacher_forward.1} parent=11 // pred_region
          _
        $region36: #{bert_teacher_forward.1} parent=11 // pred_fallthru
          _
        // Predicated region
        $region37: #{bert_teacher_forward.1} parent=11 // pred_check
          %p528 = pneg %p228
        $region38: #{bert_teacher_forward.1} parent=11 // pred_check_branch
          %530 = sbr.rel (%p528) target = $region40
        $region39: #{bert_teacher_forward.1} parent=11 // pred_region
          _
        $region40: #{bert_teacher_forward.1} parent=11 // pred_fallthru
          _
        // Predicated region
        $region41: #{bert_teacher_forward.1} parent=11 // pred_check
          %p531 = pneg %p249
        $region42: #{bert_teacher_forward.1} parent=11 // pred_check_branch
          %533 = sbr.rel (%p531) target = $region44
        $region43: #{bert_teacher_forward.1} parent=11 // pred_region
          _
        $region44: #{bert_teacher_forward.1} parent=11 // pred_fallthru
          _
        // Predicated region
        $region45: #{bert_teacher_forward.1} parent=11 // pred_check
          %p534 = pneg %p270
        $region46: #{bert_teacher_forward.1} parent=11 // pred_check_branch
          %536 = sbr.rel (%p534) target = $region48
        $region47: #{bert_teacher_forward.1} parent=11 // pred_region
          _
        $region48: #{bert_teacher_forward.1} parent=11 // pred_fallthru
          _
        // Predicated region
        $region49: #{bert_teacher_forward.1} parent=11 // pred_check
          %p537 = pneg %p291
        $region50: #{bert_teacher_forward.1} parent=11 // pred_check_branch
          %539 = sbr.rel (%p537) target = $region52
        $region51: #{bert_teacher_forward.1} parent=11 // pred_region
          _
        $region52: #{bert_teacher_forward.1} parent=11 // pred_fallthru
          _
        // Predicated region
        $region53: #{bert_teacher_forward.1} parent=11 // pred_check
          %p540 = pneg %p312
        $region54: #{bert_teacher_forward.1} parent=11 // pred_check_branch
          %542 = sbr.rel (%p540) target = $region56
        $region55: #{bert_teacher_forward.1} parent=11 // pred_region
          _
        $region56: #{bert_teacher_forward.1} parent=11 // pred_fallthru
          _
        // Predicated region
        $region57: #{bert_teacher_forward.1} parent=11 // pred_check
          %p543 = pneg %p333
        $region58: #{bert_teacher_forward.1} parent=11 // pred_check_branch
          %545 = sbr.rel (%p543) target = $region60
        $region59: #{bert_teacher_forward.1} parent=11 // pred_region
          _
        $region60: #{bert_teacher_forward.1} parent=11 // pred_fallthru
          _
        // Predicated region
        $region61: #{bert_teacher_forward.1} parent=11 // pred_check
          %p546 = pneg %p354
        $region62: #{bert_teacher_forward.1} parent=11 // pred_check_branch
          %548 = sbr.rel (%p546) target = $region64
        $region63: #{bert_teacher_forward.1} parent=11 // pred_region
          _
        $region64: #{bert_teacher_forward.1} parent=11 // pred_fallthru
          _
        // Predicated region
        $region65: #{bert_teacher_forward.1} parent=11 // pred_check
          %p549 = pneg %p375
        $region66: #{bert_teacher_forward.1} parent=11 // pred_check_branch
          %551 = sbr.rel (%p549) target = $region68
        $region67: #{bert_teacher_forward.1} parent=11 // pred_region
          _
        $region68: #{bert_teacher_forward.1} parent=11 // pred_fallthru
          _
        // Predicated region
        $region69: #{bert_teacher_forward.1} parent=11 // pred_check
          %p552 = pneg %p396
        $region70: #{bert_teacher_forward.1} parent=11 // pred_check_branch
          %554 = sbr.rel (%p552) target = $region72
        $region71: #{bert_teacher_forward.1} parent=11 // pred_region
          _
        $region72: #{bert_teacher_forward.1} parent=11 // pred_fallthru
          _
        // Predicated region
        $region73: #{bert_teacher_forward.1} parent=11 // pred_check
          %p555 = pneg %p417
        $region74: #{bert_teacher_forward.1} parent=11 // pred_check_branch
          %557 = sbr.rel (%p555) target = $region76
        $region75: #{bert_teacher_forward.1} parent=11 // pred_region
          _
        $region76: #{bert_teacher_forward.1} parent=11 // pred_fallthru
          _
      $region12: #{bert_teacher_forward.1} parent=5 // pred_fallthru
        _
      %p558 = scmp.lt.s32.totalorder %s29, 2
      // Predicated region
      $region77: #{bert_teacher_forward.1} parent=5 // pred_check
        %p559 = pneg %p558
      $region78: #{bert_teacher_forward.1} parent=5 // pred_check_branch
        %561 = sbr.rel (%p559) target = $region80
      $region79: #{bert_teacher_forward.1} parent=5 // pred_region
        // Predicated region
        $region81: #{bert_teacher_forward.1} parent=79 // pred_check
          %p562 = pneg %p49
        $region82: #{bert_teacher_forward.1} parent=79 // pred_check_branch
          %564 = sbr.rel (%p562) target = $region84
        $region83: #{bert_teacher_forward.1} parent=79 // pred_region
          %p565 = scmp.lt.s32.totalorder %s29, 1
          %s566 = scalar_select %p565, %s29, 1
          %s567 = smul.addr %s566, 8
          %s568 = scalar_lea.vmem %s0, %s567
        $region84: #{bert_teacher_forward.1} parent=79 // pred_fallthru
          _
        // Predicated region
        $region85: #{bert_teacher_forward.1} parent=79 // pred_check
          %p569 = pneg %p75
        $region86: #{bert_teacher_forward.1} parent=79 // pred_check_branch
          %571 = sbr.rel (%p569) target = $region88
        $region87: #{bert_teacher_forward.1} parent=79 // pred_region
          %p572 = scmp.lt.s32.totalorder %s29, 1
          %s573 = scalar_select %p572, %s29, 1
          %s574 = scalar_lea.vmem %s1, %s573
        $region88: #{bert_teacher_forward.1} parent=79 // pred_fallthru
          _
      $region80: #{bert_teacher_forward.1} parent=5 // pred_fallthru
        _
      %p575 = scmp.le.s32.totalorder 1, %s29
      %p576 = scmp.lt.s32.totalorder %s29, 3
      %p577 = pnand %p575, %p576
      %p578 = pneg %p577
      // Predicated region
      $region89: #{bert_teacher_forward.1} parent=5 // pred_check
        _
      $region90: #{bert_teacher_forward.1} parent=5 // pred_check_branch
        %580 = sbr.rel (%p577) target = $region92
      $region91: #{bert_teacher_forward.1} parent=5 // pred_region
        %s581 = ssub.s32 %s29, 1
        %p582 = scmp.lt.s32.totalorder %s34, 1
        %s583 = scalar_select %p582, %s34, 1
        %s584 = smul.addr %s583, 8
        %s585 = scalar_lea.vmem %s0, %s584
        %p586 = pneg %p55
        %p587 = pneg %p52
        %p588 = scmp.lt.s32.totalorder %s34, 1
        %s589 = scalar_select %p588, %s34, 1
        %s590 = scalar_lea.vmem %s1, %s589
        %p591 = pneg %p81
        %p592 = pneg %p78
        %p593 = pneg %p102
        %p594 = pneg %p99
        %p595 = pneg %p123
        %p596 = pneg %p120
        %p597 = pneg %p144
        %p598 = pneg %p141
        %p599 = pneg %p165
        %p600 = pneg %p162
        %p601 = pneg %p186
        %p602 = pneg %p183
        %p603 = pneg %p207
        %p604 = pneg %p204
        %p605 = pneg %p228
        %p606 = pneg %p225
        %p607 = pneg %p249
        %p608 = pneg %p246
        %p609 = pneg %p270
        %p610 = pneg %p267
        %p611 = pneg %p291
        %p612 = pneg %p288
        %p613 = pneg %p312
        %p614 = pneg %p309
        %p615 = pneg %p333
        %p616 = pneg %p330
        %p617 = pneg %p354
        %p618 = pneg %p351
        %p619 = pneg %p375
        %p620 = pneg %p372
        %p621 = pneg %p396
        %p622 = pneg %p393
        %p623 = pneg %p417
        %p624 = pneg %p414
        %p625 = pneg %p443
        %p626 = pneg %p440
        %s627 = sand.u32 %s430, 1
        %s628 = sand.u32 %s430, 1
        %s629 = smul.addr %s628, 24
        %s630 = scalar_lea.vmem [#allocation4], %s629
        %p631 = pneg %p469
        %p632 = pneg %p466
        %s633 = sand.u32 %s456, 1
        %s634 = sand.u32 %s456, 1
        %s635 = smul.addr %s634, 32
        %s636 = scalar_lea.vmem [#allocation5], %s635
        %p637 = pneg %p495
        %p638 = pneg %p492
        %p639 = scmp.lt.s32.totalorder %s34, 1
        %s640 = scalar_select %p639, %s34, 1
        %s641 = smul.addr %s640, 8
        %s642 = scalar_lea.vmem %s20, %s641
        %p643 = scmp.lt.s32.totalorder %s34, 1
        %s644 = scalar_select %p643, %s34, 1
        %s645 = smul.addr %s644, 8
        %s646 = scalar_lea.vmem %s0, %s645
        %p647 = scmp.lt.s32.totalorder %s34, 1
        %s648 = scalar_select %p647, %s34, 1
        %s649 = scalar_lea.vmem %s1, %s648
        %s650 = smul.u32 2, %s34
        %p651 = scmp.lt.s32.totalorder %s34, 1
        %s652 = scalar_select %p651, %s34, 1
        %s653 = smul.addr %s652, 8
        %s654 = scalar_lea.vmem %s20, %s653
        %v655 = vld [vmem:[%s649] sm:$0x1]
        %v656 = vld [vmem:[%s646] sm:$0xff]
        %v657 = vld [vmem:[%s2] sm:$0x1]
        %v658 = vld [vmem:[%s3] sm:$0x1]
        %659 = vadd.xlane.f32.xlu0 %v656
        %v660 = vpop.xlane.xlu0 %659
        %v661 = vrcp.pop 128.0
        %v662 = vmul.f32 128.0, %v661
        %v663 = vsub.f32 1.0, %v662
        %v664 = vmul.f32 %v661, %v663
        %v665 = vadd.f32 %v661, %v664
        %vm666 = vweird.f32 %v661
        %v667 = vsel %vm666, %v661, %v665
        %v668 = vmul.f32 %v660, %v667
        %v669 = vsub.f32 %v656, %v668
        %v670 = vmul.f32 %v669, %v669
        %671 = vadd.xlane.f32.xlu0 %v670
        %v672 = vpop.xlane.xlu0 %671
        %v673 = vmul.f32 %v672, %v667
        %v674 = vadd.f32 %v673, 1e-12
        %v675 = vrsqrt.pop %v674
        %v676 = vmul.f32 %v675, %v674
        %v677 = vmul.f32 %v676, %v675
        %v678 = vmul.f32 0.5, %v677
        %v679 = vsub.f32 1.5, %v678
        %v680 = vmul.f32 %v675, %v679
        %vm681 = vweird.f32 %v674
        %vm682 = vweird.f32 %v675
        %vm683 = vmor %vm681, %vm682
        %v684 = vsel %vm683, %v675, %v680
        %v685 = vmul.f32 %v669, %v684
        %v687 = vperm.slane %v657, 0
        %v689 = vmul.f32 %v685, %v687
        %v691 = vperm.slane %v658, 0
        %v693 = vadd.f32 %v689, %v691
        %694 = vst [vmem:[%s630] sm:$0xff] %v693
        %v695 = vld [vmem:[%s4] sm:$0xff]
        %v696 = vld [vmem:[%s4 + $0x8] sm:$0xff]
        %v697 = vld [vmem:[%s4 + $0x10] sm:$0xff]
        %v698 = vld [vmem:[%s4 + $0x18] sm:$0xff]
        %v699 = vld [vmem:[%s4 + $0x20] sm:$0xff]
        %v700 = vld [vmem:[%s4 + $0x28] sm:$0xff]
        %v701 = vld [vmem:[%s4 + $0x30] sm:$0xff]
        %v702 = vld [vmem:[%s4 + $0x38] sm:$0xff]
        %v703 = vld [vmem:[%s4 + $0x40] sm:$0xff]
        %v704 = vld [vmem:[%s4 + $0x48] sm:$0xff]
        %v705 = vld [vmem:[%s4 + $0x50] sm:$0xff]
        %v706 = vld [vmem:[%s4 + $0x58] sm:$0xff]
        %v707 = vld [vmem:[%s4 + $0x60] sm:$0xff]
        %v708 = vld [vmem:[%s4 + $0x68] sm:$0xff]
        %v709 = vld [vmem:[%s4 + $0x70] sm:$0xff]
        %v710 = vld [vmem:[%s4 + $0x78] sm:$0xff]
        %v711 = vld [vmem:[%s4 + $0x80] sm:$0xff]
        %v712 = vld [vmem:[%s4 + $0x88] sm:$0xff]
        %v713 = vld [vmem:[%s4 + $0x90] sm:$0xff]
        %v714 = vld [vmem:[%s4 + $0x98] sm:$0xff]
        %v715 = vld [vmem:[%s4 + $0xa0] sm:$0xff]
        %v716 = vld [vmem:[%s4 + $0xa8] sm:$0xff]
        %v717 = vld [vmem:[%s4 + $0xb0] sm:$0xff]
        %v718 = vld [vmem:[%s4 + $0xb8] sm:$0xff]
        %v719 = vld [vmem:[%s4 + $0xc0] sm:$0xff]
        %v720 = vld [vmem:[%s4 + $0xc8] sm:$0xff]
        %v721 = vld [vmem:[%s4 + $0xd0] sm:$0xff]
        %v722 = vld [vmem:[%s4 + $0xd8] sm:$0xff]
        %v723 = vld [vmem:[%s4 + $0xe0] sm:$0xff]
        %v724 = vld [vmem:[%s4 + $0xe8] sm:$0xff]
        %v725 = vld [vmem:[%s4 + $0xf0] sm:$0xff]
        %v726 = vld [vmem:[%s4 + $0xf8] sm:$0xff]
        %v727 = vld [vmem:[%s4 + $0x100] sm:$0xff]
        %v728 = vld [vmem:[%s4 + $0x108] sm:$0xff]
        %v729 = vld [vmem:[%s4 + $0x110] sm:$0xff]
        %v730 = vld [vmem:[%s4 + $0x118] sm:$0xff]
        %v731 = vld [vmem:[%s4 + $0x120] sm:$0xff]
        %v732 = vld [vmem:[%s4 + $0x128] sm:$0xff]
        %v733 = vld [vmem:[%s4 + $0x130] sm:$0xff]
        %v734 = vld [vmem:[%s4 + $0x138] sm:$0xff]
        %v735 = vld [vmem:[%s4 + $0x140] sm:$0xff]
        %v736 = vld [vmem:[%s4 + $0x148] sm:$0xff]
        %v737 = vld [vmem:[%s4 + $0x150] sm:$0xff]
        %v738 = vld [vmem:[%s4 + $0x158] sm:$0xff]
        %v739 = vld [vmem:[%s4 + $0x160] sm:$0xff]
        %v740 = vld [vmem:[%s4 + $0x168] sm:$0xff]
        %v741 = vld [vmem:[%s4 + $0x170] sm:$0xff]
        %v742 = vld [vmem:[%s4 + $0x178] sm:$0xff]
        %v743 = vld [vmem:[%s5] sm:$0x7]
        %v745 = vperm.slane %v743, 0
        %v746 = vperm.slane %v743, 1
        %v747 = vperm.slane %v743, 2
        %751 = vmatpush.msra.mxu0 %v740
        %752 = vmatpush.msra.mxu0 %v737
        %753 = vmatpush.msra.mxu0 %v734
        %754 = vmatpush.msra.mxu0 %v731
        %755 = vmatpush.msra.mxu0 %v728
        %756 = vmatpush.msra.mxu0 %v725
        %757 = vmatpush.msra.mxu0 %v722
        %758 = vmatpush.msra.mxu0 %v719
        %759 = vmatpush.msra.mxu0 %v716
        %760 = vmatpush.msra.mxu0 %v713
        %761 = vmatpush.msra.mxu0 %v710
        %762 = vmatpush.msra.mxu0 %v707
        %763 = vmatpush.msra.mxu0 %v704
        %764 = vmatpush.msra.mxu0 %v701
        %765 = vmatpush.msra.mxu0 %v698
        %766 = vmatpush.msra.mxu0 %v695
        %767 = vmatmul.f32.gmra.mxu0 %v693
        %v768 = vpop.f32.mrf.mxu0
        %v769 = vadd.f32 %v745, %v768
        %770 = vdwg.mxu0
        %771 = vmatpush.msra.mxu0 %v741
        %772 = vmatpush.msra.mxu0 %v738
        %773 = vmatpush.msra.mxu0 %v735
        %774 = vmatpush.msra.mxu0 %v732
        %775 = vmatpush.msra.mxu0 %v729
        %776 = vmatpush.msra.mxu0 %v726
        %777 = vmatpush.msra.mxu0 %v723
        %778 = vmatpush.msra.mxu0 %v720
        %779 = vmatpush.msra.mxu0 %v717
        %780 = vmatpush.msra.mxu0 %v714
        %781 = vmatpush.msra.mxu0 %v711
        %782 = vmatpush.msra.mxu0 %v708
        %783 = vmatpush.msra.mxu0 %v705
        %784 = vmatpush.msra.mxu0 %v702
        %785 = vmatpush.msra.mxu0 %v699
        %786 = vmatpush.msra.mxu0 %v696
        %787 = vmatmul.f32.gmra.mxu0 %v693
        %v788 = vpop.f32.mrf.mxu0
        %v789 = vadd.f32 %v746, %v788
        %790 = vdwg.mxu0
        %791 = vmatpush.msra.mxu0 %v742
        %792 = vmatpush.msra.mxu0 %v739
        %793 = vmatpush.msra.mxu0 %v736
        %794 = vmatpush.msra.mxu0 %v733
        %795 = vmatpush.msra.mxu0 %v730
        %796 = vmatpush.msra.mxu0 %v727
        %797 = vmatpush.msra.mxu0 %v724
        %798 = vmatpush.msra.mxu0 %v721
        %799 = vmatpush.msra.mxu0 %v718
        %800 = vmatpush.msra.mxu0 %v715
        %801 = vmatpush.msra.mxu0 %v712
        %802 = vmatpush.msra.mxu0 %v709
        %803 = vmatpush.msra.mxu0 %v706
        %804 = vmatpush.msra.mxu0 %v703
        %805 = vmatpush.msra.mxu0 %v700
        %806 = vmatpush.msra.mxu0 %v697
        %807 = vmatmul.f32.gmra.mxu0 %v693
        %v808 = vpop.f32.mrf.mxu0
        %v809 = vadd.f32 %v747, %v808
        %810 = vdwg.mxu0
        %vm811 = vcmask 523264
        %v813 = vsel %vm811, %v769, 0
        %v816 = vsel %vm811, %v789, 0
        %818 = vmatpush.xpose.msra.mxu0 0.0
        %819 = vmatpush.xpose.msra.mxu0 0.0
        %820 = vmatpush.xpose.msra.mxu0 0.0
        %821 = vmatpush.xpose.msra.mxu0 0.0
        %822 = vmatpush.xpose.msra.mxu0 0.0
        %823 = vmatpush.xpose.msra.mxu0 0.0
        %824 = vmatpush.xpose.msra.mxu0 0.0
        %825 = vmatpush.xpose.msra.mxu0 0.0
        %826 = vmatpush.xpose.msra.mxu0 0.0
        %827 = vmatpush.xpose.msra.mxu0 0.0
        %828 = vmatpush.xpose.msra.mxu0 0.0
        %829 = vmatpush.xpose.msra.mxu0 0.0
        %830 = vmatpush.xpose.msra.mxu0 0.0
        %831 = vmatpush.xpose.msra.mxu0 0.0
        %832 = vmatpush.xpose.msra.mxu0 0.0
        %833 = vmatpush.xpose.msra.mxu0 %v816
        %834 = vmatmul.f32.gmra.mxu0 %v813
        %v835 = vpop.f32.mrf.mxu0
        %v836 = vadd.f32 0.0, %v835
        %837 = vdwg.mxu0
        %v838 = vmul.f32 %v836, 0.125
        %v840 = vperm.slane %v655, 0
        %v842 = vadd.f32 %v838, %v840
        %vm843 = vcmask 64512
        %v844 = vsel %vm843, %v842, -inf
        %845 = vmax.xlane.f32.xlu0 %v844
        %v846 = vpop.xlane.xlu0 %845
        %v847 = vsub.f32 %v842, %v846
        %v848 = vmul.f32 %v847, 1.442695
        %v849 = vpow.pop %v848
        %v850 = vsel %vm843, %v849, 0.0
        %851 = vadd.xlane.f32.xlu0 %v850
        %v852 = vpop.xlane.xlu0 %851
        %v853 = vrcp.pop %v852
        %v854 = vmul.f32 %v849, %v853
        %855 = vst.msk [vmem:[%s636] sm:$0xff] %vm843, %v854
        %v857 = vsel %vm843, %v854, 0
        %859 = vmatpush.msra.mxu0 0.0
        %860 = vmatpush.msra.mxu0 0.0
        %861 = vmatpush.msra.mxu0 0.0
        %862 = vmatpush.msra.mxu0 0.0
        %863 = vmatpush.msra.mxu0 0.0
        %864 = vmatpush.msra.mxu0 0.0
        %865 = vmatpush.msra.mxu0 0.0
        %866 = vmatpush.msra.mxu0 0.0
        %867 = vmatpush.msra.mxu0 0.0
        %868 = vmatpush.msra.mxu0 0.0
        %869 = vmatpush.msra.mxu0 0.0
        %870 = vmatpush.msra.mxu0 0.0
        %871 = vmatpush.msra.mxu0 0.0
        %872 = vmatpush.msra.mxu0 0.0
        %873 = vmatpush.msra.mxu0 0.0
        %874 = vmatpush.msra.mxu0 %v809
        %875 = vmatmul.f32.gmra.mxu0 %v857
        %v876 = vpop.f32.mrf.mxu0
        %v877 = vadd.f32 0.0, %v876
        %878 = vdwg.mxu0
        %879 = vst.msk [vmem:[#allocation2] sm:$0xff] %vm811, %v877
        %880 = vrot.lane.b32.xlu0 %v769, 64
        %v881 = vpop.permute.xlu0 %880
        %882 = vrot.lane.b32.xlu0 %v789, 64
        %v883 = vpop.permute.xlu0 %882
        %v884 = vsel %vm811, %v881, 0
        %v886 = vsel %vm811, %v883, 0
        %888 = vmatpush.xpose.msra.mxu0 0.0
        %889 = vmatpush.xpose.msra.mxu0 0.0
        %890 = vmatpush.xpose.msra.mxu0 0.0
        %891 = vmatpush.xpose.msra.mxu0 0.0
        %892 = vmatpush.xpose.msra.mxu0 0.0
        %893 = vmatpush.xpose.msra.mxu0 0.0
        %894 = vmatpush.xpose.msra.mxu0 0.0
        %895 = vmatpush.xpose.msra.mxu0 0.0
        %896 = vmatpush.xpose.msra.mxu0 0.0
        %897 = vmatpush.xpose.msra.mxu0 0.0
        %898 = vmatpush.xpose.msra.mxu0 0.0
        %899 = vmatpush.xpose.msra.mxu0 0.0
        %900 = vmatpush.xpose.msra.mxu0 0.0
        %901 = vmatpush.xpose.msra.mxu0 0.0
        %902 = vmatpush.xpose.msra.mxu0 0.0
        %903 = vmatpush.xpose.msra.mxu0 %v886
        %904 = vmatmul.f32.gmra.mxu0 %v884
        %v905 = vpop.f32.mrf.mxu0
        %v906 = vadd.f32 0.0, %v905
        %907 = vdwg.mxu0
        %v908 = vmul.f32 %v906, 0.125
        %v909 = vadd.f32 %v908, %v840
        %v910 = vsel %vm843, %v909, -inf
        %911 = vmax.xlane.f32.xlu0 %v910
        %v912 = vpop.xlane.xlu0 %911
        %v913 = vsub.f32 %v909, %v912
        %v914 = vmul.f32 %v913, 1.442695
        %v915 = vpow.pop %v914
        %v916 = vsel %vm843, %v915, 0.0
        %917 = vadd.xlane.f32.xlu0 %v916
        %v918 = vpop.xlane.xlu0 %917
        %v919 = vrcp.pop %v918
        %v920 = vmul.f32 %v915, %v919
        %s921 = scalar_lea.vmem %s636, 8 [#allocation5]
        %922 = vst.msk [vmem:[%s921] sm:$0xff] %vm843, %v920
        %924 = vrot.lane.b32.xlu0 %v809, 64
        %v925 = vpop.permute.xlu0 %924
        %v928 = vsel %vm843, %v920, 0
        %930 = vmatpush.msra.mxu0 0.0
        %931 = vmatpush.msra.mxu0 0.0
        %932 = vmatpush.msra.mxu0 0.0
        %933 = vmatpush.msra.mxu0 0.0
        %934 = vmatpush.msra.mxu0 0.0
        %935 = vmatpush.msra.mxu0 0.0
        %936 = vmatpush.msra.mxu0 0.0
        %937 = vmatpush.msra.mxu0 0.0
        %938 = vmatpush.msra.mxu0 0.0
        %939 = vmatpush.msra.mxu0 0.0
        %940 = vmatpush.msra.mxu0 0.0
        %941 = vmatpush.msra.mxu0 0.0
        %942 = vmatpush.msra.mxu0 0.0
        %943 = vmatpush.msra.mxu0 0.0
        %944 = vmatpush.msra.mxu0 0.0
        %945 = vmatpush.msra.mxu0 %v925
        %946 = vmatmul.f32.gmra.mxu0 %v928
        %v947 = vpop.f32.mrf.mxu0
        %v948 = vadd.f32 0.0, %v947
        %949 = vdwg.mxu0
        %951 = vrot.lane.b32.xlu0 %v948, 64
        %v952 = vpop.permute.xlu0 %951
        %vm954 = vcmask 1048064
        %955 = vst.msk [vmem:[#allocation2] sm:$0xff] %vm954, %v952
        %v956 = vld [vmem:[#allocation2] sm:$0xff]
        %v957 = vld [vmem:[%s6] sm:$0xff]
        %v958 = vld [vmem:[%s6 + $0x8] sm:$0xff]
        %v959 = vld [vmem:[%s6 + $0x10] sm:$0xff]
        %v960 = vld [vmem:[%s6 + $0x18] sm:$0xff]
        %v961 = vld [vmem:[%s6 + $0x20] sm:$0xff]
        %v962 = vld [vmem:[%s6 + $0x28] sm:$0xff]
        %v963 = vld [vmem:[%s6 + $0x30] sm:$0xff]
        %v964 = vld [vmem:[%s6 + $0x38] sm:$0xff]
        %v965 = vld [vmem:[%s6 + $0x40] sm:$0xff]
        %v966 = vld [vmem:[%s6 + $0x48] sm:$0xff]
        %v967 = vld [vmem:[%s6 + $0x50] sm:$0xff]
        %v968 = vld [vmem:[%s6 + $0x58] sm:$0xff]
        %v969 = vld [vmem:[%s6 + $0x60] sm:$0xff]
        %v970 = vld [vmem:[%s6 + $0x68] sm:$0xff]
        %v971 = vld [vmem:[%s6 + $0x70] sm:$0xff]
        %v972 = vld [vmem:[%s6 + $0x78] sm:$0xff]
        %v973 = vld [vmem:[%s7] sm:$0x1]
        %v975 = vperm.slane %v973, 0
        %977 = vmatpush.msra.mxu0 %v972
        %978 = vmatpush.msra.mxu0 %v971
        %979 = vmatpush.msra.mxu0 %v970
        %980 = vmatpush.msra.mxu0 %v969
        %981 = vmatpush.msra.mxu0 %v968
        %982 = vmatpush.msra.mxu0 %v967
        %983 = vmatpush.msra.mxu0 %v966
        %984 = vmatpush.msra.mxu0 %v965
        %985 = vmatpush.msra.mxu0 %v964
        %986 = vmatpush.msra.mxu0 %v963
        %987 = vmatpush.msra.mxu0 %v962
        %988 = vmatpush.msra.mxu0 %v961
        %989 = vmatpush.msra.mxu0 %v960
        %990 = vmatpush.msra.mxu0 %v959
        %991 = vmatpush.msra.mxu0 %v958
        %992 = vmatpush.msra.mxu0 %v957
        %993 = vmatmul.f32.gmra.mxu0 %v956
        %v994 = vpop.f32.mrf.mxu0
        %v995 = vadd.f32 %v975, %v994
        %996 = vdwg.mxu0
        %v997 = vadd.f32 %v995, %v693
        %v998 = vld [vmem:[%s8] sm:$0x1]
        %v999 = vld [vmem:[%s9] sm:$0x1]
        %1000 = vadd.xlane.f32.xlu0 %v997
        %v1001 = vpop.xlane.xlu0 %1000
        %v1002 = vmul.f32 %v1001, %v667
        %v1003 = vsub.f32 %v997, %v1002
        %v1004 = vmul.f32 %v1003, %v1003
        %1005 = vadd.xlane.f32.xlu0 %v1004
        %v1006 = vpop.xlane.xlu0 %1005
        %v1007 = vmul.f32 %v1006, %v667
        %v1008 = vadd.f32 %v1007, 1e-12
        %v1009 = vrsqrt.pop %v1008
        %v1010 = vmul.f32 %v1009, %v1008
        %v1011 = vmul.f32 %v1010, %v1009
        %v1012 = vmul.f32 0.5, %v1011
        %v1013 = vsub.f32 1.5, %v1012
        %v1014 = vmul.f32 %v1009, %v1013
        %vm1015 = vweird.f32 %v1008
        %vm1016 = vweird.f32 %v1009
        %vm1017 = vmor %vm1015, %vm1016
        %v1018 = vsel %vm1017, %v1009, %v1014
        %v1019 = vmul.f32 %v1003, %v1018
        %v1021 = vperm.slane %v998, 0
        %v1023 = vmul.f32 %v1019, %v1021
        %v1025 = vperm.slane %v999, 0
        %v1027 = vadd.f32 %v1023, %v1025
        %v1028 = vld [vmem:[%s10] sm:$0xff]
        %v1029 = vld [vmem:[%s10 + $0x8] sm:$0xff]
        %v1030 = vld [vmem:[%s10 + $0x10] sm:$0xff]
        %v1031 = vld [vmem:[%s10 + $0x18] sm:$0xff]
        %v1032 = vld [vmem:[%s10 + $0x20] sm:$0xff]
        %v1033 = vld [vmem:[%s10 + $0x28] sm:$0xff]
        %v1034 = vld [vmem:[%s10 + $0x30] sm:$0xff]
        %v1035 = vld [vmem:[%s10 + $0x38] sm:$0xff]
        %v1036 = vld [vmem:[%s10 + $0x40] sm:$0xff]
        %v1037 = vld [vmem:[%s10 + $0x48] sm:$0xff]
        %v1038 = vld [vmem:[%s10 + $0x50] sm:$0xff]
        %v1039 = vld [vmem:[%s10 + $0x58] sm:$0xff]
        %v1040 = vld [vmem:[%s10 + $0x60] sm:$0xff]
        %v1041 = vld [vmem:[%s10 + $0x68] sm:$0xff]
        %v1042 = vld [vmem:[%s10 + $0x70] sm:$0xff]
        %v1043 = vld [vmem:[%s10 + $0x78] sm:$0xff]
        %v1044 = vld [vmem:[%s10 + $0x80] sm:$0xff]
        %v1045 = vld [vmem:[%s10 + $0x88] sm:$0xff]
        %v1046 = vld [vmem:[%s10 + $0x90] sm:$0xff]
        %v1047 = vld [vmem:[%s10 + $0x98] sm:$0xff]
        %v1048 = vld [vmem:[%s10 + $0xa0] sm:$0xff]
        %v1049 = vld [vmem:[%s10 + $0xa8] sm:$0xff]
        %v1050 = vld [vmem:[%s10 + $0xb0] sm:$0xff]
        %v1051 = vld [vmem:[%s10 + $0xb8] sm:$0xff]
        %v1052 = vld [vmem:[%s10 + $0xc0] sm:$0xff]
        %v1053 = vld [vmem:[%s10 + $0xc8] sm:$0xff]
        %v1054 = vld [vmem:[%s10 + $0xd0] sm:$0xff]
        %v1055 = vld [vmem:[%s10 + $0xd8] sm:$0xff]
        %v1056 = vld [vmem:[%s10 + $0xe0] sm:$0xff]
        %v1057 = vld [vmem:[%s10 + $0xe8] sm:$0xff]
        %v1058 = vld [vmem:[%s10 + $0xf0] sm:$0xff]
        %v1059 = vld [vmem:[%s10 + $0xf8] sm:$0xff]
        %v1060 = vld [vmem:[%s11] sm:$0x3]
        %v1062 = vperm.slane %v1060, 0
        %v1063 = vperm.slane %v1060, 1
        %1066 = vmatpush.msra.mxu0 %v1058
        %1067 = vmatpush.msra.mxu0 %v1056
        %1068 = vmatpush.msra.mxu0 %v1054
        %1069 = vmatpush.msra.mxu0 %v1052
        %1070 = vmatpush.msra.mxu0 %v1050
        %1071 = vmatpush.msra.mxu0 %v1048
        %1072 = vmatpush.msra.mxu0 %v1046
        %1073 = vmatpush.msra.mxu0 %v1044
        %1074 = vmatpush.msra.mxu0 %v1042
        %1075 = vmatpush.msra.mxu0 %v1040
        %1076 = vmatpush.msra.mxu0 %v1038
        %1077 = vmatpush.msra.mxu0 %v1036
        %1078 = vmatpush.msra.mxu0 %v1034
        %1079 = vmatpush.msra.mxu0 %v1032
        %1080 = vmatpush.msra.mxu0 %v1030
        %1081 = vmatpush.msra.mxu0 %v1028
        %1082 = vmatmul.f32.gmra.mxu0 %v1027
        %v1083 = vpop.f32.mrf.mxu0
        %v1084 = vadd.f32 %v1062, %v1083
        %1085 = vdwg.mxu0
        %1086 = vmatpush.msra.mxu0 %v1059
        %1087 = vmatpush.msra.mxu0 %v1057
        %1088 = vmatpush.msra.mxu0 %v1055
        %1089 = vmatpush.msra.mxu0 %v1053
        %1090 = vmatpush.msra.mxu0 %v1051
        %1091 = vmatpush.msra.mxu0 %v1049
        %1092 = vmatpush.msra.mxu0 %v1047
        %1093 = vmatpush.msra.mxu0 %v1045
        %1094 = vmatpush.msra.mxu0 %v1043
        %1095 = vmatpush.msra.mxu0 %v1041
        %1096 = vmatpush.msra.mxu0 %v1039
        %1097 = vmatpush.msra.mxu0 %v1037
        %1098 = vmatpush.msra.mxu0 %v1035
        %1099 = vmatpush.msra.mxu0 %v1033
        %1100 = vmatpush.msra.mxu0 %v1031
        %1101 = vmatpush.msra.mxu0 %v1029
        %1102 = vmatmul.f32.gmra.mxu0 %v1027
        %v1103 = vpop.f32.mrf.mxu0
        %v1104 = vadd.f32 %v1063, %v1103
        %1105 = vdwg.mxu0
        %v1106 = vmul.f32 %v1084, 0.5
        %v1107 = vmul.f32 %v1104, 0.5
        %v1108 = vmul.f32 %v1084, 0.044715
        %v1109 = vmul.f32 %v1104, 0.044715
        %v1110 = vmul.f32 %v1108, %v1084
        %v1111 = vmul.f32 %v1109, %v1104
        %v1112 = vmul.f32 %v1110, %v1084
        %v1113 = vmul.f32 %v1111, %v1104
        %v1114 = vadd.f32 %v1084, %v1112
        %v1115 = vadd.f32 %v1104, %v1113
        %v1116 = vmul.f32 %v1114, 0.7978846
        %v1117 = vmul.f32 %v1115, 0.7978846
        %v1118 = vtanh.pop %v1116
        %v1119 = vtanh.pop %v1117
        %v1120 = vadd.f32 %v1118, 1.0
        %v1121 = vadd.f32 %v1119, 1.0
        %v1122 = vmul.f32 %v1106, %v1120
        %v1123 = vmul.f32 %v1107, %v1121
        %v1124 = vld [vmem:[%s12] sm:$0xff]
        %v1125 = vld [vmem:[%s12 + $0x8] sm:$0xff]
        %v1126 = vld [vmem:[%s12 + $0x10] sm:$0xff]
        %v1127 = vld [vmem:[%s12 + $0x18] sm:$0xff]
        %v1128 = vld [vmem:[%s12 + $0x20] sm:$0xff]
        %v1129 = vld [vmem:[%s12 + $0x28] sm:$0xff]
        %v1130 = vld [vmem:[%s12 + $0x30] sm:$0xff]
        %v1131 = vld [vmem:[%s12 + $0x38] sm:$0xff]
        %v1132 = vld [vmem:[%s12 + $0x40] sm:$0xff]
        %v1133 = vld [vmem:[%s12 + $0x48] sm:$0xff]
        %v1134 = vld [vmem:[%s12 + $0x50] sm:$0xff]
        %v1135 = vld [vmem:[%s12 + $0x58] sm:$0xff]
        %v1136 = vld [vmem:[%s12 + $0x60] sm:$0xff]
        %v1137 = vld [vmem:[%s12 + $0x68] sm:$0xff]
        %v1138 = vld [vmem:[%s12 + $0x70] sm:$0xff]
        %v1139 = vld [vmem:[%s12 + $0x78] sm:$0xff]
        %v1140 = vld [vmem:[%s12 + $0x80] sm:$0xff]
        %v1141 = vld [vmem:[%s12 + $0x88] sm:$0xff]
        %v1142 = vld [vmem:[%s12 + $0x90] sm:$0xff]
        %v1143 = vld [vmem:[%s12 + $0x98] sm:$0xff]
        %v1144 = vld [vmem:[%s12 + $0xa0] sm:$0xff]
        %v1145 = vld [vmem:[%s12 + $0xa8] sm:$0xff]
        %v1146 = vld [vmem:[%s12 + $0xb0] sm:$0xff]
        %v1147 = vld [vmem:[%s12 + $0xb8] sm:$0xff]
        %v1148 = vld [vmem:[%s12 + $0xc0] sm:$0xff]
        %v1149 = vld [vmem:[%s12 + $0xc8] sm:$0xff]
        %v1150 = vld [vmem:[%s12 + $0xd0] sm:$0xff]
        %v1151 = vld [vmem:[%s12 + $0xd8] sm:$0xff]
        %v1152 = vld [vmem:[%s12 + $0xe0] sm:$0xff]
        %v1153 = vld [vmem:[%s12 + $0xe8] sm:$0xff]
        %v1154 = vld [vmem:[%s12 + $0xf0] sm:$0xff]
        %v1155 = vld [vmem:[%s12 + $0xf8] sm:$0xff]
        %v1156 = vld [vmem:[%s13] sm:$0x1]
        %v1158 = vperm.slane %v1156, 0
        %1160 = vmatpush.msra.mxu0 %v1139
        %1161 = vmatpush.msra.mxu0 %v1138
        %1162 = vmatpush.msra.mxu0 %v1137
        %1163 = vmatpush.msra.mxu0 %v1136
        %1164 = vmatpush.msra.mxu0 %v1135
        %1165 = vmatpush.msra.mxu0 %v1134
        %1166 = vmatpush.msra.mxu0 %v1133
        %1167 = vmatpush.msra.mxu0 %v1132
        %1168 = vmatpush.msra.mxu0 %v1131
        %1169 = vmatpush.msra.mxu0 %v1130
        %1170 = vmatpush.msra.mxu0 %v1129
        %1171 = vmatpush.msra.mxu0 %v1128
        %1172 = vmatpush.msra.mxu0 %v1127
        %1173 = vmatpush.msra.mxu0 %v1126
        %1174 = vmatpush.msra.mxu0 %v1125
        %1175 = vmatpush.msra.mxu0 %v1124
        %1176 = vmatmul.f32.gmra.mxu0 %v1122
        %v1177 = vpop.f32.mrf.mxu0
        %v1178 = vadd.f32 %v1158, %v1177
        %1179 = vdwg.mxu0
        %1180 = vmatpush.msra.mxu0 %v1155
        %1181 = vmatpush.msra.mxu0 %v1154
        %1182 = vmatpush.msra.mxu0 %v1153
        %1183 = vmatpush.msra.mxu0 %v1152
        %1184 = vmatpush.msra.mxu0 %v1151
        %1185 = vmatpush.msra.mxu0 %v1150
        %1186 = vmatpush.msra.mxu0 %v1149
        %1187 = vmatpush.msra.mxu0 %v1148
        %1188 = vmatpush.msra.mxu0 %v1147
        %1189 = vmatpush.msra.mxu0 %v1146
        %1190 = vmatpush.msra.mxu0 %v1145
        %1191 = vmatpush.msra.mxu0 %v1144
        %1192 = vmatpush.msra.mxu0 %v1143
        %1193 = vmatpush.msra.mxu0 %v1142
        %1194 = vmatpush.msra.mxu0 %v1141
        %1195 = vmatpush.msra.mxu0 %v1140
        %1196 = vmatmul.f32.gmra.mxu0 %v1123
        %v1197 = vpop.f32.mrf.mxu0
        %v1198 = vadd.f32 %v1178, %v1197
        %1199 = vdwg.mxu0
        %v1200 = vadd.f32 %v1198, %v1027
        %v1201 = vld [vmem:[%s14] sm:$0x1]
        %v1202 = vld [vmem:[%s15] sm:$0x1]
        %1203 = vadd.xlane.f32.xlu0 %v1200
        %v1204 = vpop.xlane.xlu0 %1203
        %v1205 = vmul.f32 %v1204, %v667
        %v1206 = vsub.f32 %v1200, %v1205
        %v1207 = vmul.f32 %v1206, %v1206
        %1208 = vadd.xlane.f32.xlu0 %v1207
        %v1209 = vpop.xlane.xlu0 %1208
        %v1210 = vmul.f32 %v1209, %v667
        %v1211 = vadd.f32 %v1210, 1e-12
        %v1212 = vrsqrt.pop %v1211
        %v1213 = vmul.f32 %v1212, %v1211
        %v1214 = vmul.f32 %v1213, %v1212
        %v1215 = vmul.f32 0.5, %v1214
        %v1216 = vsub.f32 1.5, %v1215
        %v1217 = vmul.f32 %v1212, %v1216
        %vm1218 = vweird.f32 %v1211
        %vm1219 = vweird.f32 %v1212
        %vm1220 = vmor %vm1218, %vm1219
        %v1221 = vsel %vm1220, %v1212, %v1217
        %v1222 = vmul.f32 %v1206, %v1221
        %v1224 = vperm.slane %v1201, 0
        %v1226 = vmul.f32 %v1222, %v1224
        %v1228 = vperm.slane %v1202, 0
        %v1230 = vadd.f32 %v1226, %v1228
        %s1231 = scalar_lea.vmem %s630, 8 [#allocation4]
        %1232 = vst [vmem:[%s1231] sm:$0xff] %v1230
        %s1233 = scalar_lea.vmem %s4, 384
        %v1234 = vld [vmem:[%s1233] sm:$0xff]
        %v1235 = vld [vmem:[%s1233 + $0x8] sm:$0xff]
        %v1236 = vld [vmem:[%s1233 + $0x10] sm:$0xff]
        %v1237 = vld [vmem:[%s1233 + $0x18] sm:$0xff]
        %v1238 = vld [vmem:[%s1233 + $0x20] sm:$0xff]
        %v1239 = vld [vmem:[%s1233 + $0x28] sm:$0xff]
        %v1240 = vld [vmem:[%s1233 + $0x30] sm:$0xff]
        %v1241 = vld [vmem:[%s1233 + $0x38] sm:$0xff]
        %v1242 = vld [vmem:[%s1233 + $0x40] sm:$0xff]
        %v1243 = vld [vmem:[%s1233 + $0x48] sm:$0xff]
        %v1244 = vld [vmem:[%s1233 + $0x50] sm:$0xff]
        %v1245 = vld [vmem:[%s1233 + $0x58] sm:$0xff]
        %v1246 = vld [vmem:[%s1233 + $0x60] sm:$0xff]
        %v1247 = vld [vmem:[%s1233 + $0x68] sm:$0xff]
        %v1248 = vld [vmem:[%s1233 + $0x70] sm:$0xff]
        %v1249 = vld [vmem:[%s1233 + $0x78] sm:$0xff]
        %v1250 = vld [vmem:[%s1233 + $0x80] sm:$0xff]
        %v1251 = vld [vmem:[%s1233 + $0x88] sm:$0xff]
        %v1252 = vld [vmem:[%s1233 + $0x90] sm:$0xff]
        %v1253 = vld [vmem:[%s1233 + $0x98] sm:$0xff]
        %v1254 = vld [vmem:[%s1233 + $0xa0] sm:$0xff]
        %v1255 = vld [vmem:[%s1233 + $0xa8] sm:$0xff]
        %v1256 = vld [vmem:[%s1233 + $0xb0] sm:$0xff]
        %v1257 = vld [vmem:[%s1233 + $0xb8] sm:$0xff]
        %v1258 = vld [vmem:[%s1233 + $0xc0] sm:$0xff]
        %v1259 = vld [vmem:[%s1233 + $0xc8] sm:$0xff]
        %v1260 = vld [vmem:[%s1233 + $0xd0] sm:$0xff]
        %v1261 = vld [vmem:[%s1233 + $0xd8] sm:$0xff]
        %v1262 = vld [vmem:[%s1233 + $0xe0] sm:$0xff]
        %v1263 = vld [vmem:[%s1233 + $0xe8] sm:$0xff]
        %v1264 = vld [vmem:[%s1233 + $0xf0] sm:$0xff]
        %v1265 = vld [vmem:[%s1233 + $0xf8] sm:$0xff]
        %v1266 = vld [vmem:[%s1233 + $0x100] sm:$0xff]
        %v1267 = vld [vmem:[%s1233 + $0x108] sm:$0xff]
        %v1268 = vld [vmem:[%s1233 + $0x110] sm:$0xff]
        %v1269 = vld [vmem:[%s1233 + $0x118] sm:$0xff]
        %v1270 = vld [vmem:[%s1233 + $0x120] sm:$0xff]
        %v1271 = vld [vmem:[%s1233 + $0x128] sm:$0xff]
        %v1272 = vld [vmem:[%s1233 + $0x130] sm:$0xff]
        %v1273 = vld [vmem:[%s1233 + $0x138] sm:$0xff]
        %v1274 = vld [vmem:[%s1233 + $0x140] sm:$0xff]
        %v1275 = vld [vmem:[%s1233 + $0x148] sm:$0xff]
        %v1276 = vld [vmem:[%s1233 + $0x150] sm:$0xff]
        %v1277 = vld [vmem:[%s1233 + $0x158] sm:$0xff]
        %v1278 = vld [vmem:[%s1233 + $0x160] sm:$0xff]
        %v1279 = vld [vmem:[%s1233 + $0x168] sm:$0xff]
        %v1280 = vld [vmem:[%s1233 + $0x170] sm:$0xff]
        %v1281 = vld [vmem:[%s1233 + $0x178] sm:$0xff]
        %s1282 = scalar_lea.vmem %s5, 3
        %v1283 = vld [vmem:[%s1282] sm:$0x7]
        %v1285 = vperm.slane %v1283, 0
        %v1286 = vperm.slane %v1283, 1
        %v1287 = vperm.slane %v1283, 2
        %1291 = vmatpush.msra.mxu0 %v1279
        %1292 = vmatpush.msra.mxu0 %v1276
        %1293 = vmatpush.msra.mxu0 %v1273
        %1294 = vmatpush.msra.mxu0 %v1270
        %1295 = vmatpush.msra.mxu0 %v1267
        %1296 = vmatpush.msra.mxu0 %v1264
        %1297 = vmatpush.msra.mxu0 %v1261
        %1298 = vmatpush.msra.mxu0 %v1258
        %1299 = vmatpush.msra.mxu0 %v1255
        %1300 = vmatpush.msra.mxu0 %v1252
        %1301 = vmatpush.msra.mxu0 %v1249
        %1302 = vmatpush.msra.mxu0 %v1246
        %1303 = vmatpush.msra.mxu0 %v1243
        %1304 = vmatpush.msra.mxu0 %v1240
        %1305 = vmatpush.msra.mxu0 %v1237
        %1306 = vmatpush.msra.mxu0 %v1234
        %1307 = vmatmul.f32.gmra.mxu0 %v1230
        %v1308 = vpop.f32.mrf.mxu0
        %v1309 = vadd.f32 %v1285, %v1308
        %1310 = vdwg.mxu0
        %1311 = vmatpush.msra.mxu0 %v1280
        %1312 = vmatpush.msra.mxu0 %v1277
        %1313 = vmatpush.msra.mxu0 %v1274
        %1314 = vmatpush.msra.mxu0 %v1271
        %1315 = vmatpush.msra.mxu0 %v1268
        %1316 = vmatpush.msra.mxu0 %v1265
        %1317 = vmatpush.msra.mxu0 %v1262
        %1318 = vmatpush.msra.mxu0 %v1259
        %1319 = vmatpush.msra.mxu0 %v1256
        %1320 = vmatpush.msra.mxu0 %v1253
        %1321 = vmatpush.msra.mxu0 %v1250
        %1322 = vmatpush.msra.mxu0 %v1247
        %1323 = vmatpush.msra.mxu0 %v1244
        %1324 = vmatpush.msra.mxu0 %v1241
        %1325 = vmatpush.msra.mxu0 %v1238
        %1326 = vmatpush.msra.mxu0 %v1235
        %1327 = vmatmul.f32.gmra.mxu0 %v1230
        %v1328 = vpop.f32.mrf.mxu0
        %v1329 = vadd.f32 %v1286, %v1328
        %1330 = vdwg.mxu0
        %1331 = vmatpush.msra.mxu0 %v1281
        %1332 = vmatpush.msra.mxu0 %v1278
        %1333 = vmatpush.msra.mxu0 %v1275
        %1334 = vmatpush.msra.mxu0 %v1272
        %1335 = vmatpush.msra.mxu0 %v1269
        %1336 = vmatpush.msra.mxu0 %v1266
        %1337 = vmatpush.msra.mxu0 %v1263
        %1338 = vmatpush.msra.mxu0 %v1260
        %1339 = vmatpush.msra.mxu0 %v1257
        %1340 = vmatpush.msra.mxu0 %v1254
        %1341 = vmatpush.msra.mxu0 %v1251
        %1342 = vmatpush.msra.mxu0 %v1248
        %1343 = vmatpush.msra.mxu0 %v1245
        %1344 = vmatpush.msra.mxu0 %v1242
        %1345 = vmatpush.msra.mxu0 %v1239
        %1346 = vmatpush.msra.mxu0 %v1236
        %1347 = vmatmul.f32.gmra.mxu0 %v1230
        %v1348 = vpop.f32.mrf.mxu0
        %v1349 = vadd.f32 %v1287, %v1348
        %1350 = vdwg.mxu0
        %v1352 = vsel %vm811, %v1309, 0
        %v1355 = vsel %vm811, %v1329, 0
        %1357 = vmatpush.xpose.msra.mxu0 0.0
        %1358 = vmatpush.xpose.msra.mxu0 0.0
        %1359 = vmatpush.xpose.msra.mxu0 0.0
        %1360 = vmatpush.xpose.msra.mxu0 0.0
        %1361 = vmatpush.xpose.msra.mxu0 0.0
        %1362 = vmatpush.xpose.msra.mxu0 0.0
        %1363 = vmatpush.xpose.msra.mxu0 0.0
        %1364 = vmatpush.xpose.msra.mxu0 0.0
        %1365 = vmatpush.xpose.msra.mxu0 0.0
        %1366 = vmatpush.xpose.msra.mxu0 0.0
        %1367 = vmatpush.xpose.msra.mxu0 0.0
        %1368 = vmatpush.xpose.msra.mxu0 0.0
        %1369 = vmatpush.xpose.msra.mxu0 0.0
        %1370 = vmatpush.xpose.msra.mxu0 0.0
        %1371 = vmatpush.xpose.msra.mxu0 0.0
        %1372 = vmatpush.xpose.msra.mxu0 %v1355
        %1373 = vmatmul.f32.gmra.mxu0 %v1352
        %v1374 = vpop.f32.mrf.mxu0
        %v1375 = vadd.f32 0.0, %v1374
        %1376 = vdwg.mxu0
        %v1377 = vmul.f32 %v1375, 0.125
        %v1378 = vadd.f32 %v1377, %v840
        %v1379 = vsel %vm843, %v1378, -inf
        %1380 = vmax.xlane.f32.xlu0 %v1379
        %v1381 = vpop.xlane.xlu0 %1380
        %v1382 = vsub.f32 %v1378, %v1381
        %v1383 = vmul.f32 %v1382, 1.442695
        %v1384 = vpow.pop %v1383
        %v1385 = vsel %vm843, %v1384, 0.0
        %1386 = vadd.xlane.f32.xlu0 %v1385
        %v1387 = vpop.xlane.xlu0 %1386
        %v1388 = vrcp.pop %v1387
        %v1389 = vmul.f32 %v1384, %v1388
        %s1390 = scalar_lea.vmem %s636, 16 [#allocation5]
        %1391 = vst.msk [vmem:[%s1390] sm:$0xff] %vm843, %v1389
        %v1393 = vsel %vm843, %v1389, 0
        %1395 = vmatpush.msra.mxu0 0.0
        %1396 = vmatpush.msra.mxu0 0.0
        %1397 = vmatpush.msra.mxu0 0.0
        %1398 = vmatpush.msra.mxu0 0.0
        %1399 = vmatpush.msra.mxu0 0.0
        %1400 = vmatpush.msra.mxu0 0.0
        %1401 = vmatpush.msra.mxu0 0.0
        %1402 = vmatpush.msra.mxu0 0.0
        %1403 = vmatpush.msra.mxu0 0.0
        %1404 = vmatpush.msra.mxu0 0.0
        %1405 = vmatpush.msra.mxu0 0.0
        %1406 = vmatpush.msra.mxu0 0.0
        %1407 = vmatpush.msra.mxu0 0.0
        %1408 = vmatpush.msra.mxu0 0.0
        %1409 = vmatpush.msra.mxu0 0.0
        %1410 = vmatpush.msra.mxu0 %v1349
        %1411 = vmatmul.f32.gmra.mxu0 %v1393
        %v1412 = vpop.f32.mrf.mxu0
        %v1413 = vadd.f32 0.0, %v1412
        %1414 = vdwg.mxu0
        %1415 = vst.msk [vmem:[#allocation2] sm:$0xff] %vm811, %v1413
        %1416 = vrot.lane.b32.xlu0 %v1309, 64
        %v1417 = vpop.permute.xlu0 %1416
        %1418 = vrot.lane.b32.xlu0 %v1329, 64
        %v1419 = vpop.permute.xlu0 %1418
        %v1420 = vsel %vm811, %v1417, 0
        %v1422 = vsel %vm811, %v1419, 0
        %1424 = vmatpush.xpose.msra.mxu0 0.0
        %1425 = vmatpush.xpose.msra.mxu0 0.0
        %1426 = vmatpush.xpose.msra.mxu0 0.0
        %1427 = vmatpush.xpose.msra.mxu0 0.0
        %1428 = vmatpush.xpose.msra.mxu0 0.0
        %1429 = vmatpush.xpose.msra.mxu0 0.0
        %1430 = vmatpush.xpose.msra.mxu0 0.0
        %1431 = vmatpush.xpose.msra.mxu0 0.0
        %1432 = vmatpush.xpose.msra.mxu0 0.0
        %1433 = vmatpush.xpose.msra.mxu0 0.0
        %1434 = vmatpush.xpose.msra.mxu0 0.0
        %1435 = vmatpush.xpose.msra.mxu0 0.0
        %1436 = vmatpush.xpose.msra.mxu0 0.0
        %1437 = vmatpush.xpose.msra.mxu0 0.0
        %1438 = vmatpush.xpose.msra.mxu0 0.0
        %1439 = vmatpush.xpose.msra.mxu0 %v1422
        %1440 = vmatmul.f32.gmra.mxu0 %v1420
        %v1441 = vpop.f32.mrf.mxu0
        %v1442 = vadd.f32 0.0, %v1441
        %1443 = vdwg.mxu0
        %v1444 = vmul.f32 %v1442, 0.125
        %v1445 = vadd.f32 %v1444, %v840
        %v1446 = vsel %vm843, %v1445, -inf
        %1447 = vmax.xlane.f32.xlu0 %v1446
        %v1448 = vpop.xlane.xlu0 %1447
        %v1449 = vsub.f32 %v1445, %v1448
        %v1450 = vmul.f32 %v1449, 1.442695
        %v1451 = vpow.pop %v1450
        %v1452 = vsel %vm843, %v1451, 0.0
        %1453 = vadd.xlane.f32.xlu0 %v1452
        %v1454 = vpop.xlane.xlu0 %1453
        %v1455 = vrcp.pop %v1454
        %v1456 = vmul.f32 %v1451, %v1455
        %s1457 = scalar_lea.vmem %s636, 24 [#allocation5]
        %1458 = vst.msk [vmem:[%s1457] sm:$0xff] %vm843, %v1456
        %1460 = vrot.lane.b32.xlu0 %v1349, 64
        %v1461 = vpop.permute.xlu0 %1460
        %v1464 = vsel %vm843, %v1456, 0
        %1466 = vmatpush.msra.mxu0 0.0
        %1467 = vmatpush.msra.mxu0 0.0
        %1468 = vmatpush.msra.mxu0 0.0
        %1469 = vmatpush.msra.mxu0 0.0
        %1470 = vmatpush.msra.mxu0 0.0
        %1471 = vmatpush.msra.mxu0 0.0
        %1472 = vmatpush.msra.mxu0 0.0
        %1473 = vmatpush.msra.mxu0 0.0
        %1474 = vmatpush.msra.mxu0 0.0
        %1475 = vmatpush.msra.mxu0 0.0
        %1476 = vmatpush.msra.mxu0 0.0
        %1477 = vmatpush.msra.mxu0 0.0
        %1478 = vmatpush.msra.mxu0 0.0
        %1479 = vmatpush.msra.mxu0 0.0
        %1480 = vmatpush.msra.mxu0 0.0
        %1481 = vmatpush.msra.mxu0 %v1461
        %1482 = vmatmul.f32.gmra.mxu0 %v1464
        %v1483 = vpop.f32.mrf.mxu0
        %v1484 = vadd.f32 0.0, %v1483
        %1485 = vdwg.mxu0
        %1487 = vrot.lane.b32.xlu0 %v1484, 64
        %v1488 = vpop.permute.xlu0 %1487
        %1490 = vst.msk [vmem:[#allocation2] sm:$0xff] %vm954, %v1488
        %v1491 = vld [vmem:[#allocation2] sm:$0xff]
        %s1492 = scalar_lea.vmem %s6, 128
        %v1493 = vld [vmem:[%s1492] sm:$0xff]
        %v1494 = vld [vmem:[%s1492 + $0x8] sm:$0xff]
        %v1495 = vld [vmem:[%s1492 + $0x10] sm:$0xff]
        %v1496 = vld [vmem:[%s1492 + $0x18] sm:$0xff]
        %v1497 = vld [vmem:[%s1492 + $0x20] sm:$0xff]
        %v1498 = vld [vmem:[%s1492 + $0x28] sm:$0xff]
        %v1499 = vld [vmem:[%s1492 + $0x30] sm:$0xff]
        %v1500 = vld [vmem:[%s1492 + $0x38] sm:$0xff]
        %v1501 = vld [vmem:[%s1492 + $0x40] sm:$0xff]
        %v1502 = vld [vmem:[%s1492 + $0x48] sm:$0xff]
        %v1503 = vld [vmem:[%s1492 + $0x50] sm:$0xff]
        %v1504 = vld [vmem:[%s1492 + $0x58] sm:$0xff]
        %v1505 = vld [vmem:[%s1492 + $0x60] sm:$0xff]
        %v1506 = vld [vmem:[%s1492 + $0x68] sm:$0xff]
        %v1507 = vld [vmem:[%s1492 + $0x70] sm:$0xff]
        %v1508 = vld [vmem:[%s1492 + $0x78] sm:$0xff]
        %s1509 = scalar_lea.vmem %s7, 1
        %v1510 = vld [vmem:[%s1509] sm:$0x1]
        %v1512 = vperm.slane %v1510, 0
        %1514 = vmatpush.msra.mxu0 %v1508
        %1515 = vmatpush.msra.mxu0 %v1507
        %1516 = vmatpush.msra.mxu0 %v1506
        %1517 = vmatpush.msra.mxu0 %v1505
        %1518 = vmatpush.msra.mxu0 %v1504
        %1519 = vmatpush.msra.mxu0 %v1503
        %1520 = vmatpush.msra.mxu0 %v1502
        %1521 = vmatpush.msra.mxu0 %v1501
        %1522 = vmatpush.msra.mxu0 %v1500
        %1523 = vmatpush.msra.mxu0 %v1499
        %1524 = vmatpush.msra.mxu0 %v1498
        %1525 = vmatpush.msra.mxu0 %v1497
        %1526 = vmatpush.msra.mxu0 %v1496
        %1527 = vmatpush.msra.mxu0 %v1495
        %1528 = vmatpush.msra.mxu0 %v1494
        %1529 = vmatpush.msra.mxu0 %v1493
        %1530 = vmatmul.f32.gmra.mxu0 %v1491
        %v1531 = vpop.f32.mrf.mxu0
        %v1532 = vadd.f32 %v1512, %v1531
        %1533 = vdwg.mxu0
        %v1534 = vadd.f32 %v1532, %v1230
        %s1535 = scalar_lea.vmem %s8, 1
        %v1536 = vld [vmem:[%s1535] sm:$0x1]
        %s1537 = scalar_lea.vmem %s9, 1
        %v1538 = vld [vmem:[%s1537] sm:$0x1]
        %1539 = vadd.xlane.f32.xlu0 %v1534
        %v1540 = vpop.xlane.xlu0 %1539
        %v1541 = vmul.f32 %v1540, %v667
        %v1542 = vsub.f32 %v1534, %v1541
        %v1543 = vmul.f32 %v1542, %v1542
        %1544 = vadd.xlane.f32.xlu0 %v1543
        %v1545 = vpop.xlane.xlu0 %1544
        %v1546 = vmul.f32 %v1545, %v667
        %v1547 = vadd.f32 %v1546, 1e-12
        %v1548 = vrsqrt.pop %v1547
        %v1549 = vmul.f32 %v1548, %v1547
        %v1550 = vmul.f32 %v1549, %v1548
        %v1551 = vmul.f32 0.5, %v1550
        %v1552 = vsub.f32 1.5, %v1551
        %v1553 = vmul.f32 %v1548, %v1552
        %vm1554 = vweird.f32 %v1547
        %vm1555 = vweird.f32 %v1548
        %vm1556 = vmor %vm1554, %vm1555
        %v1557 = vsel %vm1556, %v1548, %v1553
        %v1558 = vmul.f32 %v1542, %v1557
        %v1560 = vperm.slane %v1536, 0
        %v1562 = vmul.f32 %v1558, %v1560
        %v1564 = vperm.slane %v1538, 0
        %v1566 = vadd.f32 %v1562, %v1564
        %s1567 = scalar_lea.vmem %s10, 256
        %v1568 = vld [vmem:[%s1567] sm:$0xff]
        %v1569 = vld [vmem:[%s1567 + $0x8] sm:$0xff]
        %v1570 = vld [vmem:[%s1567 + $0x10] sm:$0xff]
        %v1571 = vld [vmem:[%s1567 + $0x18] sm:$0xff]
        %v1572 = vld [vmem:[%s1567 + $0x20] sm:$0xff]
        %v1573 = vld [vmem:[%s1567 + $0x28] sm:$0xff]
        %v1574 = vld [vmem:[%s1567 + $0x30] sm:$0xff]
        %v1575 = vld [vmem:[%s1567 + $0x38] sm:$0xff]
        %v1576 = vld [vmem:[%s1567 + $0x40] sm:$0xff]
        %v1577 = vld [vmem:[%s1567 + $0x48] sm:$0xff]
        %v1578 = vld [vmem:[%s1567 + $0x50] sm:$0xff]
        %v1579 = vld [vmem:[%s1567 + $0x58] sm:$0xff]
        %v1580 = vld [vmem:[%s1567 + $0x60] sm:$0xff]
        %v1581 = vld [vmem:[%s1567 + $0x68] sm:$0xff]
        %v1582 = vld [vmem:[%s1567 + $0x70] sm:$0xff]
        %v1583 = vld [vmem:[%s1567 + $0x78] sm:$0xff]
        %v1584 = vld [vmem:[%s1567 + $0x80] sm:$0xff]
        %v1585 = vld [vmem:[%s1567 + $0x88] sm:$0xff]
        %v1586 = vld [vmem:[%s1567 + $0x90] sm:$0xff]
        %v1587 = vld [vmem:[%s1567 + $0x98] sm:$0xff]
        %v1588 = vld [vmem:[%s1567 + $0xa0] sm:$0xff]
        %v1589 = vld [vmem:[%s1567 + $0xa8] sm:$0xff]
        %v1590 = vld [vmem:[%s1567 + $0xb0] sm:$0xff]
        %v1591 = vld [vmem:[%s1567 + $0xb8] sm:$0xff]
        %v1592 = vld [vmem:[%s1567 + $0xc0] sm:$0xff]
        %v1593 = vld [vmem:[%s1567 + $0xc8] sm:$0xff]
        %v1594 = vld [vmem:[%s1567 + $0xd0] sm:$0xff]
        %v1595 = vld [vmem:[%s1567 + $0xd8] sm:$0xff]
        %v1596 = vld [vmem:[%s1567 + $0xe0] sm:$0xff]
        %v1597 = vld [vmem:[%s1567 + $0xe8] sm:$0xff]
        %v1598 = vld [vmem:[%s1567 + $0xf0] sm:$0xff]
        %v1599 = vld [vmem:[%s1567 + $0xf8] sm:$0xff]
        %s1600 = scalar_lea.vmem %s11, 2
        %v1601 = vld [vmem:[%s1600] sm:$0x3]
        %v1603 = vperm.slane %v1601, 0
        %v1604 = vperm.slane %v1601, 1
        %1607 = vmatpush.msra.mxu0 %v1598
        %1608 = vmatpush.msra.mxu0 %v1596
        %1609 = vmatpush.msra.mxu0 %v1594
        %1610 = vmatpush.msra.mxu0 %v1592
        %1611 = vmatpush.msra.mxu0 %v1590
        %1612 = vmatpush.msra.mxu0 %v1588
        %1613 = vmatpush.msra.mxu0 %v1586
        %1614 = vmatpush.msra.mxu0 %v1584
        %1615 = vmatpush.msra.mxu0 %v1582
        %1616 = vmatpush.msra.mxu0 %v1580
        %1617 = vmatpush.msra.mxu0 %v1578
        %1618 = vmatpush.msra.mxu0 %v1576
        %1619 = vmatpush.msra.mxu0 %v1574
        %1620 = vmatpush.msra.mxu0 %v1572
        %1621 = vmatpush.msra.mxu0 %v1570
        %1622 = vmatpush.msra.mxu0 %v1568
        %1623 = vmatmul.f32.gmra.mxu0 %v1566
        %v1624 = vpop.f32.mrf.mxu0
        %v1625 = vadd.f32 %v1603, %v1624
        %1626 = vdwg.mxu0
        %1627 = vmatpush.msra.mxu0 %v1599
        %1628 = vmatpush.msra.mxu0 %v1597
        %1629 = vmatpush.msra.mxu0 %v1595
        %1630 = vmatpush.msra.mxu0 %v1593
        %1631 = vmatpush.msra.mxu0 %v1591
        %1632 = vmatpush.msra.mxu0 %v1589
        %1633 = vmatpush.msra.mxu0 %v1587
        %1634 = vmatpush.msra.mxu0 %v1585
        %1635 = vmatpush.msra.mxu0 %v1583
        %1636 = vmatpush.msra.mxu0 %v1581
        %1637 = vmatpush.msra.mxu0 %v1579
        %1638 = vmatpush.msra.mxu0 %v1577
        %1639 = vmatpush.msra.mxu0 %v1575
        %1640 = vmatpush.msra.mxu0 %v1573
        %1641 = vmatpush.msra.mxu0 %v1571
        %1642 = vmatpush.msra.mxu0 %v1569
        %1643 = vmatmul.f32.gmra.mxu0 %v1566
        %v1644 = vpop.f32.mrf.mxu0
        %v1645 = vadd.f32 %v1604, %v1644
        %1646 = vdwg.mxu0
        %v1647 = vmul.f32 %v1625, 0.5
        %v1648 = vmul.f32 %v1645, 0.5
        %v1649 = vmul.f32 %v1625, 0.044715
        %v1650 = vmul.f32 %v1645, 0.044715
        %v1651 = vmul.f32 %v1649, %v1625
        %v1652 = vmul.f32 %v1650, %v1645
        %v1653 = vmul.f32 %v1651, %v1625
        %v1654 = vmul.f32 %v1652, %v1645
        %v1655 = vadd.f32 %v1625, %v1653
        %v1656 = vadd.f32 %v1645, %v1654
        %v1657 = vmul.f32 %v1655, 0.7978846
        %v1658 = vmul.f32 %v1656, 0.7978846
        %v1659 = vtanh.pop %v1657
        %v1660 = vtanh.pop %v1658
        %v1661 = vadd.f32 %v1659, 1.0
        %v1662 = vadd.f32 %v1660, 1.0
        %v1663 = vmul.f32 %v1647, %v1661
        %v1664 = vmul.f32 %v1648, %v1662
        %s1665 = scalar_lea.vmem %s12, 256
        %v1666 = vld [vmem:[%s1665] sm:$0xff]
        %v1667 = vld [vmem:[%s1665 + $0x8] sm:$0xff]
        %v1668 = vld [vmem:[%s1665 + $0x10] sm:$0xff]
        %v1669 = vld [vmem:[%s1665 + $0x18] sm:$0xff]
        %v1670 = vld [vmem:[%s1665 + $0x20] sm:$0xff]
        %v1671 = vld [vmem:[%s1665 + $0x28] sm:$0xff]
        %v1672 = vld [vmem:[%s1665 + $0x30] sm:$0xff]
        %v1673 = vld [vmem:[%s1665 + $0x38] sm:$0xff]
        %v1674 = vld [vmem:[%s1665 + $0x40] sm:$0xff]
        %v1675 = vld [vmem:[%s1665 + $0x48] sm:$0xff]
        %v1676 = vld [vmem:[%s1665 + $0x50] sm:$0xff]
        %v1677 = vld [vmem:[%s1665 + $0x58] sm:$0xff]
        %v1678 = vld [vmem:[%s1665 + $0x60] sm:$0xff]
        %v1679 = vld [vmem:[%s1665 + $0x68] sm:$0xff]
        %v1680 = vld [vmem:[%s1665 + $0x70] sm:$0xff]
        %v1681 = vld [vmem:[%s1665 + $0x78] sm:$0xff]
        %v1682 = vld [vmem:[%s1665 + $0x80] sm:$0xff]
        %v1683 = vld [vmem:[%s1665 + $0x88] sm:$0xff]
        %v1684 = vld [vmem:[%s1665 + $0x90] sm:$0xff]
        %v1685 = vld [vmem:[%s1665 + $0x98] sm:$0xff]
        %v1686 = vld [vmem:[%s1665 + $0xa0] sm:$0xff]
        %v1687 = vld [vmem:[%s1665 + $0xa8] sm:$0xff]
        %v1688 = vld [vmem:[%s1665 + $0xb0] sm:$0xff]
        %v1689 = vld [vmem:[%s1665 + $0xb8] sm:$0xff]
        %v1690 = vld [vmem:[%s1665 + $0xc0] sm:$0xff]
        %v1691 = vld [vmem:[%s1665 + $0xc8] sm:$0xff]
        %v1692 = vld [vmem:[%s1665 + $0xd0] sm:$0xff]
        %v1693 = vld [vmem:[%s1665 + $0xd8] sm:$0xff]
        %v1694 = vld [vmem:[%s1665 + $0xe0] sm:$0xff]
        %v1695 = vld [vmem:[%s1665 + $0xe8] sm:$0xff]
        %v1696 = vld [vmem:[%s1665 + $0xf0] sm:$0xff]
        %v1697 = vld [vmem:[%s1665 + $0xf8] sm:$0xff]
        %s1698 = scalar_lea.vmem %s13, 1
        %v1699 = vld [vmem:[%s1698] sm:$0x1]
        %v1701 = vperm.slane %v1699, 0
        %1703 = vmatpush.msra.mxu0 %v1681
        %1704 = vmatpush.msra.mxu0 %v1680
        %1705 = vmatpush.msra.mxu0 %v1679
        %1706 = vmatpush.msra.mxu0 %v1678
        %1707 = vmatpush.msra.mxu0 %v1677
        %1708 = vmatpush.msra.mxu0 %v1676
        %1709 = vmatpush.msra.mxu0 %v1675
        %1710 = vmatpush.msra.mxu0 %v1674
        %1711 = vmatpush.msra.mxu0 %v1673
        %1712 = vmatpush.msra.mxu0 %v1672
        %1713 = vmatpush.msra.mxu0 %v1671
        %1714 = vmatpush.msra.mxu0 %v1670
        %1715 = vmatpush.msra.mxu0 %v1669
        %1716 = vmatpush.msra.mxu0 %v1668
        %1717 = vmatpush.msra.mxu0 %v1667
        %1718 = vmatpush.msra.mxu0 %v1666
        %1719 = vmatmul.f32.gmra.mxu0 %v1663
        %v1720 = vpop.f32.mrf.mxu0
        %v1721 = vadd.f32 %v1701, %v1720
        %1722 = vdwg.mxu0
        %1723 = vmatpush.msra.mxu0 %v1697
        %1724 = vmatpush.msra.mxu0 %v1696
        %1725 = vmatpush.msra.mxu0 %v1695
        %1726 = vmatpush.msra.mxu0 %v1694
        %1727 = vmatpush.msra.mxu0 %v1693
        %1728 = vmatpush.msra.mxu0 %v1692
        %1729 = vmatpush.msra.mxu0 %v1691
        %1730 = vmatpush.msra.mxu0 %v1690
        %1731 = vmatpush.msra.mxu0 %v1689
        %1732 = vmatpush.msra.mxu0 %v1688
        %1733 = vmatpush.msra.mxu0 %v1687
        %1734 = vmatpush.msra.mxu0 %v1686
        %1735 = vmatpush.msra.mxu0 %v1685
        %1736 = vmatpush.msra.mxu0 %v1684
        %1737 = vmatpush.msra.mxu0 %v1683
        %1738 = vmatpush.msra.mxu0 %v1682
        %1739 = vmatmul.f32.gmra.mxu0 %v1664
        %v1740 = vpop.f32.mrf.mxu0
        %v1741 = vadd.f32 %v1721, %v1740
        %1742 = vdwg.mxu0
        %v1743 = vadd.f32 %v1741, %v1566
        %s1744 = scalar_lea.vmem %s14, 1
        %v1745 = vld [vmem:[%s1744] sm:$0x1]
        %s1746 = scalar_lea.vmem %s15, 1
        %v1747 = vld [vmem:[%s1746] sm:$0x1]
        %1748 = vadd.xlane.f32.xlu0 %v1743
        %v1749 = vpop.xlane.xlu0 %1748
        %v1750 = vmul.f32 %v1749, %v667
        %v1751 = vsub.f32 %v1743, %v1750
        %v1752 = vmul.f32 %v1751, %v1751
        %1753 = vadd.xlane.f32.xlu0 %v1752
        %v1754 = vpop.xlane.xlu0 %1753
        %v1755 = vmul.f32 %v1754, %v667
        %v1756 = vadd.f32 %v1755, 1e-12
        %v1757 = vrsqrt.pop %v1756
        %v1758 = vmul.f32 %v1757, %v1756
        %v1759 = vmul.f32 %v1758, %v1757
        %v1760 = vmul.f32 0.5, %v1759
        %v1761 = vsub.f32 1.5, %v1760
        %v1762 = vmul.f32 %v1757, %v1761
        %vm1763 = vweird.f32 %v1756
        %vm1764 = vweird.f32 %v1757
        %vm1765 = vmor %vm1763, %vm1764
        %v1766 = vsel %vm1765, %v1757, %v1762
        %v1767 = vmul.f32 %v1751, %v1766
        %v1769 = vperm.slane %v1745, 0
        %v1771 = vmul.f32 %v1767, %v1769
        %v1773 = vperm.slane %v1747, 0
        %v1775 = vadd.f32 %v1771, %v1773
        %s1776 = scalar_lea.vmem %s630, 16 [#allocation4]
        %1777 = vst [vmem:[%s1776] sm:$0xff] %v1775
        %v1778 = vld [vmem:[%s16] sm:$0xff]
        %v1779 = vld [vmem:[%s16 + $0x8] sm:$0xff]
        %v1780 = vld [vmem:[%s16 + $0x10] sm:$0xff]
        %v1781 = vld [vmem:[%s16 + $0x18] sm:$0xff]
        %v1782 = vld [vmem:[%s16 + $0x20] sm:$0xff]
        %v1783 = vld [vmem:[%s16 + $0x28] sm:$0xff]
        %v1784 = vld [vmem:[%s16 + $0x30] sm:$0xff]
        %v1785 = vld [vmem:[%s16 + $0x38] sm:$0xff]
        %v1786 = vld [vmem:[%s16 + $0x40] sm:$0xff]
        %v1787 = vld [vmem:[%s16 + $0x48] sm:$0xff]
        %v1788 = vld [vmem:[%s16 + $0x50] sm:$0xff]
        %v1789 = vld [vmem:[%s16 + $0x58] sm:$0xff]
        %v1790 = vld [vmem:[%s16 + $0x60] sm:$0xff]
        %v1791 = vld [vmem:[%s16 + $0x68] sm:$0xff]
        %v1792 = vld [vmem:[%s16 + $0x70] sm:$0xff]
        %v1793 = vld [vmem:[%s16 + $0x78] sm:$0xff]
        %v1794 = vld [vmem:[#allocation3] sm:$0x1]
        %v1796 = vperm.slane %v1794, 0
        %1798 = vmatpush.msra.mxu0 %v1793
        %1799 = vmatpush.msra.mxu0 %v1792
        %1800 = vmatpush.msra.mxu0 %v1791
        %1801 = vmatpush.msra.mxu0 %v1790
        %1802 = vmatpush.msra.mxu0 %v1789
        %1803 = vmatpush.msra.mxu0 %v1788
        %1804 = vmatpush.msra.mxu0 %v1787
        %1805 = vmatpush.msra.mxu0 %v1786
        %1806 = vmatpush.msra.mxu0 %v1785
        %1807 = vmatpush.msra.mxu0 %v1784
        %1808 = vmatpush.msra.mxu0 %v1783
        %1809 = vmatpush.msra.mxu0 %v1782
        %1810 = vmatpush.msra.mxu0 %v1781
        %1811 = vmatpush.msra.mxu0 %v1780
        %1812 = vmatpush.msra.mxu0 %v1779
        %1813 = vmatpush.msra.mxu0 %v1778
        %1814 = vmatmul.f32.gmra.mxu0 %v1775
        %v1815 = vpop.f32.mrf.mxu0
        %v1816 = vadd.f32 %v1796, %v1815
        %1817 = vdwg.mxu0
        %vm1818 = vcmask 7168
        %1819 = vst.msk [vmem:[%s654] sm:$0xff] %vm1818, %v1816
        %s1820 = sand.u32 %s430, 1
        %s1821 = sand.u32 %s430, 1
        %s1822 = smul.addr %s1821, 24
        %s1823 = scalar_lea.vmem [#allocation4], %s1822
        %s1824 = sand.u32 %s456, 1
        %s1825 = sand.u32 %s456, 1
        %s1826 = smul.addr %s1825, 32
        %s1827 = scalar_lea.vmem [#allocation5], %s1826
        %p1828 = scmp.lt.s32.totalorder %s34, 1
        %s1829 = scalar_select %p1828, %s34, 1
        %s1830 = smul.addr %s1829, 8
        %s1831 = scalar_lea.vmem %s20, %s1830
        // Predicated region
        $region93: #{bert_teacher_forward.1} parent=91 // pred_check
          %p1832 = pneg %p440
        $region94: #{bert_teacher_forward.1} parent=91 // pred_check_branch
          %1834 = sbr.rel (%p1832) target = $region96
        $region95: #{bert_teacher_forward.1} parent=91 // pred_region
          %s1835 = smul.addr %s34, 8
          %s1836 = scalar_lea.vmem %s18, %s1835
          // Predicated region
          $region97: #{bert_teacher_forward.1} parent=95 // pred_check
            _
          $region98: #{bert_teacher_forward.1} parent=95 // pred_check_branch
            %1838 = sbr.rel (0) target = $region100
          $region99: #{bert_teacher_forward.1} parent=95 // pred_region
            // Predicated region
            $region101: #{bert_teacher_forward.1} parent=99 // pred_check
              _
            $region102: #{bert_teacher_forward.1} parent=99 // pred_check_branch
              %1840 = sbr.rel (0) target = $region104
            $region103: #{bert_teacher_forward.1} parent=99 // pred_region
              // Predicated region
              $region116: #{bert_teacher_forward.1} parent=103 // pred_check
                _
              $region117: #{bert_teacher_forward.1} parent=103 // pred_check_branch
                %1860 = sbr.rel (0) target = $region119
              $region118: #{bert_teacher_forward.1} parent=103 // pred_region
                loop: start=0, step=1, limit=1
                $region120: #{bert_teacher_forward.1} parent=118 // loop_pre_header
                  _
                $region121: #{bert_teacher_forward.1} parent=118 // loop_header
                  %s1862 = sphi 0, %s1866
                  %p1863 = scmp.ge.s32.totalorder %s1862, 1
                  %s1867 = sphi %s1823, %s1823
                  %s1868 = sphi %s1836, %s1836
                $region122: #{bert_teacher_forward.1} parent=118 // loop_header_branch
                  %1865 = sbr.rel (%p1863) target = $region126
                $region123: #{bert_teacher_forward.1} parent=118 // loop_body
                  %v1869 = vld [vmem:[%s1867] sm:$0xff]
                  %1870 = vst [vmem:[%s1868] sm:$0xff] %v1869
                  %v1871 = vld [vmem:[%s1867 + $0x8] sm:$0xff]
                  %1872 = vst [vmem:[%s1868 + $0x10] sm:$0xff] %v1871
                  %v1873 = vld [vmem:[%s1867 + $0x10] sm:$0xff]
                  %1874 = vst [vmem:[%s1868 + $0x20] sm:$0xff] %v1873
                $region124: #{bert_teacher_forward.1} parent=118 // loop_footer
                  %s1866 = sadd.s32 1, %s1862
                $region125: #{bert_teacher_forward.1} parent=118 // loop_footer_branch
                  %1861 = sbr.rel target = $region121
                $region126: #{bert_teacher_forward.1} parent=118 // loop_exit
                  _
              $region119: #{bert_teacher_forward.1} parent=103 // pred_fallthru
                _
              // Predicated region
              $region127: #{bert_teacher_forward.1} parent=103 // pred_check
                _
              $region128: #{bert_teacher_forward.1} parent=103 // pred_check_branch
                %1876 = sbr.rel target = $region130
              $region129: #{bert_teacher_forward.1} parent=103 // pred_region
                _
              $region130: #{bert_teacher_forward.1} parent=103 // pred_fallthru
                _
            $region104: #{bert_teacher_forward.1} parent=99 // pred_fallthru
              _
            // Predicated region
            $region105: #{bert_teacher_forward.1} parent=99 // pred_check
              _
            $region106: #{bert_teacher_forward.1} parent=99 // pred_check_branch
              %1842 = sbr.rel target = $region108
            $region107: #{bert_teacher_forward.1} parent=99 // pred_region
              %s1844 = ssub.s32 256, 1
              loop: start=0, step=1, limit=1
              $region109: #{bert_teacher_forward.1} parent=107 // loop_pre_header
                _
              $region110: #{bert_teacher_forward.1} parent=107 // loop_header
                %s1846 = sphi 0, %s1850
                %p1847 = scmp.ge.s32.totalorder %s1846, 1
                %s1851 = sphi %s1823, %s1823
                %s1852 = sphi %s1836, %s1836
              $region111: #{bert_teacher_forward.1} parent=107 // loop_header_branch
                %1849 = sbr.rel (%p1847) target = $region115
              $region112: #{bert_teacher_forward.1} parent=107 // loop_body
                %v1853 = vld [vmem:[%s1851] sm:%s1844]
                %1854 = vst [vmem:[%s1852] sm:%s1844] %v1853
                %v1855 = vld [vmem:[%s1851 + $0x8] sm:%s1844]
                %1856 = vst [vmem:[%s1852 + $0x10] sm:%s1844] %v1855
                %v1857 = vld [vmem:[%s1851 + $0x10] sm:%s1844]
                %1858 = vst [vmem:[%s1852 + $0x20] sm:%s1844] %v1857
              $region113: #{bert_teacher_forward.1} parent=107 // loop_footer
                %s1850 = sadd.s32 1, %s1846
              $region114: #{bert_teacher_forward.1} parent=107 // loop_footer_branch
                %1845 = sbr.rel target = $region110
              $region115: #{bert_teacher_forward.1} parent=107 // loop_exit
                _
            $region108: #{bert_teacher_forward.1} parent=99 // pred_fallthru
              _
          $region100: #{bert_teacher_forward.1} parent=95 // pred_fallthru
            _
          %1877 = vnop
        $region96: #{bert_teacher_forward.1} parent=91 // pred_fallthru
          _
        // Predicated region
        $region131: #{bert_teacher_forward.1} parent=91 // pred_check
          %p1878 = pneg %p466
        $region132: #{bert_teacher_forward.1} parent=91 // pred_check_branch
          %1880 = sbr.rel (%p1878) target = $region134
        $region133: #{bert_teacher_forward.1} parent=91 // pred_region
          %s1881 = smul.u32 2, %s34
          %s1882 = smul.addr %s1881, 8
          %s1883 = scalar_lea.vmem %s19, %s1882
          // Predicated region
          $region135: #{bert_teacher_forward.1} parent=133 // pred_check
            _
          $region136: #{bert_teacher_forward.1} parent=133 // pred_check_branch
            %1885 = sbr.rel (0) target = $region138
          $region137: #{bert_teacher_forward.1} parent=133 // pred_region
            // Predicated region
            $region139: #{bert_teacher_forward.1} parent=137 // pred_check
              _
            $region140: #{bert_teacher_forward.1} parent=137 // pred_check_branch
              %1887 = sbr.rel (0) target = $region142
            $region141: #{bert_teacher_forward.1} parent=137 // pred_region
              // Predicated region
              $region154: #{bert_teacher_forward.1} parent=141 // pred_check
                _
              $region155: #{bert_teacher_forward.1} parent=141 // pred_check_branch
                %1909 = sbr.rel (0) target = $region157
              $region156: #{bert_teacher_forward.1} parent=141 // pred_region
                loop: start=0, step=1, limit=1
                $region158: #{bert_teacher_forward.1} parent=156 // loop_pre_header
                  _
                $region159: #{bert_teacher_forward.1} parent=156 // loop_header
                  %s1911 = sphi 0, %s1915
                  %p1912 = scmp.ge.s32.totalorder %s1911, 1
                  %s1916 = sphi %s1827, %s1827
                  %s1917 = sphi %s1883, %s1883
                $region160: #{bert_teacher_forward.1} parent=156 // loop_header_branch
                  %1914 = sbr.rel (%p1912) target = $region164
                $region161: #{bert_teacher_forward.1} parent=156 // loop_body
                  %v1918 = vld [vmem:[%s1916] sm:$0xff]
                  %1919 = vst [vmem:[%s1917] sm:$0xff] %v1918
                  %v1920 = vld [vmem:[%s1916 + $0x8] sm:$0xff]
                  %1921 = vst [vmem:[%s1917 + $0x8] sm:$0xff] %v1920
                  %v1922 = vld [vmem:[%s1916 + $0x10] sm:$0xff]
                  %1923 = vst [vmem:[%s1917 + $0x20] sm:$0xff] %v1922
                  %v1924 = vld [vmem:[%s1916 + $0x18] sm:$0xff]
                  %1925 = vst [vmem:[%s1917 + $0x28] sm:$0xff] %v1924
                $region162: #{bert_teacher_forward.1} parent=156 // loop_footer
                  %s1915 = sadd.s32 1, %s1911
                $region163: #{bert_teacher_forward.1} parent=156 // loop_footer_branch
                  %1910 = sbr.rel target = $region159
                $region164: #{bert_teacher_forward.1} parent=156 // loop_exit
                  _
              $region157: #{bert_teacher_forward.1} parent=141 // pred_fallthru
                _
              // Predicated region
              $region165: #{bert_teacher_forward.1} parent=141 // pred_check
                _
              $region166: #{bert_teacher_forward.1} parent=141 // pred_check_branch
                %1927 = sbr.rel target = $region168
              $region167: #{bert_teacher_forward.1} parent=141 // pred_region
                _
              $region168: #{bert_teacher_forward.1} parent=141 // pred_fallthru
                _
            $region142: #{bert_teacher_forward.1} parent=137 // pred_fallthru
              _
            // Predicated region
            $region143: #{bert_teacher_forward.1} parent=137 // pred_check
              _
            $region144: #{bert_teacher_forward.1} parent=137 // pred_check_branch
              %1889 = sbr.rel target = $region146
            $region145: #{bert_teacher_forward.1} parent=137 // pred_region
              %s1891 = ssub.s32 256, 1
              loop: start=0, step=1, limit=1
              $region147: #{bert_teacher_forward.1} parent=145 // loop_pre_header
                _
              $region148: #{bert_teacher_forward.1} parent=145 // loop_header
                %s1893 = sphi 0, %s1897
                %p1894 = scmp.ge.s32.totalorder %s1893, 1
                %s1898 = sphi %s1827, %s1827
                %s1899 = sphi %s1883, %s1883
              $region149: #{bert_teacher_forward.1} parent=145 // loop_header_branch
                %1896 = sbr.rel (%p1894) target = $region153
              $region150: #{bert_teacher_forward.1} parent=145 // loop_body
                %v1900 = vld [vmem:[%s1898] sm:%s1891]
                %1901 = vst [vmem:[%s1899] sm:%s1891] %v1900
                %v1902 = vld [vmem:[%s1898 + $0x8] sm:%s1891]
                %1903 = vst [vmem:[%s1899 + $0x8] sm:%s1891] %v1902
                %v1904 = vld [vmem:[%s1898 + $0x10] sm:%s1891]
                %1905 = vst [vmem:[%s1899 + $0x20] sm:%s1891] %v1904
                %v1906 = vld [vmem:[%s1898 + $0x18] sm:%s1891]
                %1907 = vst [vmem:[%s1899 + $0x28] sm:%s1891] %v1906
              $region151: #{bert_teacher_forward.1} parent=145 // loop_footer
                %s1897 = sadd.s32 1, %s1893
              $region152: #{bert_teacher_forward.1} parent=145 // loop_footer_branch
                %1892 = sbr.rel target = $region148
              $region153: #{bert_teacher_forward.1} parent=145 // loop_exit
                _
            $region146: #{bert_teacher_forward.1} parent=137 // pred_fallthru
              _
          $region138: #{bert_teacher_forward.1} parent=133 // pred_fallthru
            _
          %1928 = vnop
        $region134: #{bert_teacher_forward.1} parent=91 // pred_fallthru
          _
        // Predicated region
        $region169: #{bert_teacher_forward.1} parent=91 // pred_check
          %p1929 = pneg %p492
        $region170: #{bert_teacher_forward.1} parent=91 // pred_check_branch
          %1931 = sbr.rel (%p1929) target = $region172
        $region171: #{bert_teacher_forward.1} parent=91 // pred_region
          _
        $region172: #{bert_teacher_forward.1} parent=91 // pred_fallthru
          _
      $region92: #{bert_teacher_forward.1} parent=5 // pred_fallthru
        _
      %p1932 = scmp.le.s32.totalorder 2, %s29
      // Predicated region
      $region173: #{bert_teacher_forward.1} parent=5 // pred_check
        %p1933 = pneg %p1932
      $region174: #{bert_teacher_forward.1} parent=5 // pred_check_branch
        %1935 = sbr.rel (%p1933) target = $region176
      $region175: #{bert_teacher_forward.1} parent=5 // pred_region
        %s1936 = ssub.s32 %s29, 2
        // Predicated region
        $region177: #{bert_teacher_forward.1} parent=175 // pred_check
          %p1937 = pneg %p446
        $region178: #{bert_teacher_forward.1} parent=175 // pred_check_branch
          %1939 = sbr.rel (%p1937) target = $region180
        $region179: #{bert_teacher_forward.1} parent=175 // pred_region
          %s1940 = sand.u32 %s431, 1
          %s1941 = sand.u32 %s431, 1
          %s1942 = smul.addr %s1941, 24
          %s1943 = scalar_lea.vmem [#allocation4], %s1942
        $region180: #{bert_teacher_forward.1} parent=175 // pred_fallthru
          _
        // Predicated region
        $region181: #{bert_teacher_forward.1} parent=175 // pred_check
          %p1944 = pneg %p472
        $region182: #{bert_teacher_forward.1} parent=175 // pred_check_branch
          %1946 = sbr.rel (%p1944) target = $region184
        $region183: #{bert_teacher_forward.1} parent=175 // pred_region
          %s1947 = sand.u32 %s457, 1
          %s1948 = sand.u32 %s457, 1
          %s1949 = smul.addr %s1948, 32
          %s1950 = scalar_lea.vmem [#allocation5], %s1949
        $region184: #{bert_teacher_forward.1} parent=175 // pred_fallthru
          _
        // Predicated region
        $region185: #{bert_teacher_forward.1} parent=175 // pred_check
          %p1951 = pneg %p498
        $region186: #{bert_teacher_forward.1} parent=175 // pred_check_branch
          %1953 = sbr.rel (%p1951) target = $region188
        $region187: #{bert_teacher_forward.1} parent=175 // pred_region
          %p1954 = scmp.lt.s32.totalorder %s35, 1
          %s1955 = scalar_select %p1954, %s35, 1
          %s1956 = smul.addr %s1955, 8
          %s1957 = scalar_lea.vmem %s20, %s1956
        $region188: #{bert_teacher_forward.1} parent=175 // pred_fallthru
          _
      $region176: #{bert_teacher_forward.1} parent=5 // pred_fallthru
        _
    $region6: #{bert_teacher_forward.1} parent=1 // loop_footer
      %s33 = sadd.s32 1, %s29
    $region7: #{bert_teacher_forward.1} parent=1 // loop_footer_branch
      %28 = sbr.rel target = $region3
    $region8: #{bert_teacher_forward.1} parent=1 // loop_exit
      _

</llo_original>
